<compile_context>
chip_gen: v6e
topology: v6e:2x2x1
jax: 0.10.0
libtpu: 0.0.40
codegen_flags: <defaults>
</compile_context>

<pallas_src>
import math
import functools

import jax
import jax.numpy as jnp
from jax.experimental import pallas as pl
from jax.experimental.pallas import tpu as pltpu


# ----------------------------------------------------------------------------- in-kernel helpers

def _layernorm(x, g, b):
    mean = jnp.mean(x, axis=-1, keepdims=True)
    var = jnp.mean(jnp.square(x - mean), axis=-1, keepdims=True)
    return (x - mean) * jax.lax.rsqrt(var + 1e-5) * g + b


def _head_matrices(num_heads, head_dim):
    """R:(E,H) sums the head_dim lanes of each head; RT:(H,E) broadcasts a per-head
    scalar back to that head's lanes.  Built from 2-D iotas (no integer division)."""
    E = num_heads * head_dim
    re = jax.lax.broadcasted_iota(jnp.int32, (E, num_heads), 0)
    ce = jax.lax.broadcasted_iota(jnp.int32, (E, num_heads), 1)
    R = jnp.where((re >= ce * head_dim) & (re < (ce + 1) * head_dim), 1.0, 0.0)
    rh = jax.lax.broadcasted_iota(jnp.int32, (num_heads, E), 0)
    ch = jax.lax.broadcasted_iota(jnp.int32, (num_heads, E), 1)
    RT = jnp.where((ch >= rh * head_dim) & (ch < (rh + 1) * head_dim), 1.0, 0.0)
    return R.astype(jnp.float32), RT.astype(jnp.float32)


# ----------------------------------------------------------------------------- fused kernel

def _fused_encoder_kernel(
        patches_ref, we_ref, be_ref,
        ln1g_ref, ln1b_ref, wqkv_ref, bqkv_ref, wo_ref, bo_ref,
        ln2g_ref, ln2b_ref, w1_ref, b1_ref, w2_ref, b2_ref,
        lnfg_ref, lnfb_ref,
        o_ref,
        *, num_layers, batch, seq, num_heads, head_dim):
    f32 = jnp.float32
    E = num_heads * head_dim
    scale = 1.0 / math.sqrt(head_dim)

    R, RT = _head_matrices(num_heads, head_dim)

    # --- ImageEmbedding: stride==kernel conv == patchify + matmul (MXU) ---
    x = patches_ref[...].astype(f32)
    xs = jnp.dot(x, we_ref[...], preferred_element_type=f32) + be_ref[...]   # (M, E)

    for l in range(num_layers):
        # ---------- self-attention sub-block (pre-LN, as written in the module) ----------
        h = _layernorm(xs, ln1g_ref[l], ln1b_ref[l])
        qkv = jnp.dot(h, wqkv_ref[l], preferred_element_type=f32) + bqkv_ref[l]   # (M, 3E)
        q = qkv[:, 0:E] * scale
        k = qkv[:, E:2 * E]
        v = qkv[:, 2 * E:3 * E]

        # Attention over the image-batch axis (PyTorch (L,N,E) convention applied to a
        # (B, seq, E) tensor => sequence length == image batch).  For each cyclic shift
        # of the batch axis, score q against the shifted k/v; softmax over shifts.
        scores = []
        values = []
        for s in range(batch):
            if s == 0:
                k_s, v_s = k, v
            else:
                amt = s * seq                              # rotate batch axis by s
                k_s = jnp.concatenate([k[amt:, :], k[:amt, :]], axis=0)
                v_s = jnp.concatenate([v[amt:, :], v[:amt, :]], axis=0)
            # per-(row, head) dot over head_dim lanes via the head-reduction matrix (MXU)
            scores.append(jnp.dot(q * k_s, R, preferred_element_type=f32))   # (M, H)
            values.append(v_s)

        m = scores[0]
        for s in range(1, batch):
            m = jnp.maximum(m, scores[s])
        exps = [jnp.exp(sc - m) for sc in scores]
        denom = exps[0]
        for s in range(1, batch):
            denom = denom + exps[s]
        inv = pl.reciprocal(denom, approx=True)                               # (M, H), EUP

        attn = None
        for s in range(batch):
            w_bcast = jnp.dot(exps[s] * inv, RT, preferred_element_type=f32)  # (M, E)
            contrib = w_bcast * values[s]
            attn = contrib if attn is None else attn + contrib

        attn = jnp.dot(attn, wo_ref[l], preferred_element_type=f32) + bo_ref[l]
        xs = xs + attn                                                        # residual

        # ---------- feed-forward sub-block ----------
        h = _layernorm(xs, ln2g_ref[l], ln2b_ref[l])
        h = jnp.maximum(jnp.dot(h, w1_ref[l], preferred_element_type=f32) + b1_ref[l], 0.0)
        h = jnp.dot(h, w2_ref[l], preferred_element_type=f32) + b2_ref[l]
        xs = xs + h                                                           # residual

    # --- final LayerNorm ---
    xs = _layernorm(xs, lnfg_ref[...], lnfb_ref[...])
    o_ref[...] = xs.astype(o_ref.dtype)


# ----------------------------------------------------------------------------- wrapper

def _full_spec(shape):
    ndim = len(shape)

    def index_map(i):
        return (0,) * ndim

    return pl.BlockSpec(shape, index_map)


def transformer_encoder_forward(x, params, patch, num_heads):
    """x: (B, 3, H, W) NCHW, as in PyTorch.  Returns (B, 3, H, W)."""
    B, C, H, W = x.shape
    nh_, nw_ = H // patch, W // patch
    seq = nh_ * nw_
    hidden = params["conv_w"].shape[0]
    cpp = C * patch * patch
    num_layers = params["wqkv"].shape[0]
    head_dim = hidden // num_heads
    M = B * seq

    # stride==kernel conv == patchify: rows in (b, i, j) order, features in (c, di, dj) order
    patches = x.reshape(B, C, nh_, patch, nw_, patch)
    patches = patches.transpose(0, 2, 4, 1, 3, 5).reshape(M, cpp)
    w_embed = params["conv_w"].reshape(hidden, cpp).T                         # (cpp, hidden)

    inputs = (
        patches, w_embed, params["conv_b"].reshape(1, hidden),
        params["ln1_g"], params["ln1_b"],
        params["wqkv"], params["bqkv"],
        params["wo"], params["bo"],
        params["ln2_g"], params["ln2_b"],
        params["w1"], params["b1"],
        params["w2"], params["b2"],
        params["final_g"].reshape(1, hidden), params["final_b"].reshape(1, hidden),
    )

    kernel = functools.partial(
        _fused_encoder_kernel,
        num_layers=num_layers, batch=B, seq=seq,
        num_heads=num_heads, head_dim=head_dim)

    out = pl.pallas_call(
        kernel,
        out_shape=jax.ShapeDtypeStruct((M, hidden), x.dtype),
        grid=(1,),
        in_specs=[_full_spec(a.shape) for a in inputs],
        out_specs=_full_spec((M, hidden)),
        compiler_params=pltpu.CompilerParams(dimension_semantics=("arbitrary",)),
    )(*inputs)

    xs = out.reshape(B, seq, hidden)
    # final transpose/reshape back to (B, C, H, W), exactly as the PyTorch code
    return xs.transpose(0, 2, 1).reshape(B, C, H, W)


# ----------------------------------------------------------------------------- pure-JAX reference

def reference_forward(x, params, patch, num_heads):
    B, C, H, W = x.shape
    nh_, nw_ = H // patch, W // patch
    seq = nh_ * nw_
    hidden = params["conv_w"].shape[0]
    cpp = C * patch * patch
    hd = hidden // num_heads
    num_layers = params["wqkv"].shape[0]

    def ln(t, g, b):
        mu = t.mean(-1, keepdims=True)
        var = ((t - mu) ** 2).mean(-1, keepdims=True)
        return (t - mu) / jnp.sqrt(var + 1e-5) * g + b

    patches = x.reshape(B, C, nh_, patch, nw_, patch).transpose(0, 2, 4, 1, 3, 5)
    patches = patches.reshape(B, seq, cpp)
    w_embed = params["conv_w"].reshape(hidden, cpp).T
    xs = patches @ w_embed + params["conv_b"]

    for l in range(num_layers):
        res = xs
        h = ln(xs, params["ln1_g"][l], params["ln1_b"][l])
        qkv = h @ params["wqkv"][l] + params["bqkv"][l]
        q, k, v = jnp.split(qkv, 3, axis=-1)
        qh = q.reshape(B, seq, num_heads, hd) / math.sqrt(hd)
        kh = k.reshape(B, seq, num_heads, hd)
        vh = v.reshape(B, seq, num_heads, hd)
        s = jnp.einsum("inhd,jnhd->nhij", qh, kh)        # attention over the batch axis
        p = jax.nn.softmax(s, axis=-1)
        o = jnp.einsum("nhij,jnhd->inhd", p, vh).reshape(B, seq, hidden)
        xs = res + (o @ params["wo"][l] + params["bo"][l])
        res = xs
        h = ln(xs, params["ln2_g"][l], params["ln2_b"][l])
        h = jax.nn.relu(h @ params["w1"][l] + params["b1"][l])
        xs = res + (h @ params["w2"][l] + params["b2"][l])

    xs = ln(xs, params["final_g"], params["final_b"])
    return xs.transpose(0, 2, 1).reshape(B, C, H, W)


# ----------------------------------------------------------------------------- params

def init_params(key, hidden, num_heads, num_layers, c, patch):
    assert hidden % num_heads == 0
    ks = jax.random.split(key, 16)

    def n(k, shape, s=0.1):
        return s * jax.random.normal(k, shape, jnp.float32)

    return {
        "conv_w": n(ks[0], (hidden, c, patch, patch)),
        "conv_b": n(ks[1], (hidden,)),
        "final_g": 1.0 + n(ks[2], (hidden,), 0.01),
        "final_b": n(ks[3], (hidden,), 0.01),
        "ln1_g": 1.0 + n(ks[4], (num_layers, 1, hidden), 0.01),
        "ln1_b": n(ks[5], (num_layers, 1, hidden), 0.01),
        "ln2_g": 1.0 + n(ks[6], (num_layers, 1, hidden), 0.01),
        "ln2_b": n(ks[7], (num_layers, 1, hidden), 0.01),
        # weights stored as (in_features, out_features); QKV fused along columns
        "wqkv": n(ks[8], (num_layers, hidden, 3 * hidden)),
        "bqkv": n(ks[9], (num_layers, 1, 3 * hidden)),
        "wo": n(ks[10], (num_layers, hidden, hidden)),
        "bo": n(ks[11], (num_layers, 1, hidden)),
        "w1": n(ks[12], (num_layers, hidden, hidden)),
        "b1": n(ks[13], (num_layers, 1, hidden)),
        "w2": n(ks[14], (num_layers, hidden, hidden)),
        "b2": n(ks[15], (num_layers, 1, hidden)),
    }


# ----------------------------------------------------------------------------- main

if __name__ == "__main__":
    B, C, H, W = 2, 3, 16, 16
    patch = 4
    # The module's final reshape requires hidden_dim == C * patch * patch.
    hidden = C * patch * patch   # 48
    num_heads = 4                # head_dim = 12
    num_layers = 2

    key = jax.random.PRNGKey(0)
    kx, kp = jax.random.split(key)
    x = jax.random.normal(kx, (B, C, H, W), jnp.float32)
    params = init_params(kp, hidden, num_heads, num_layers, C, patch)

    fwd = jax.jit(functools.partial(transformer_encoder_forward,
                                    patch=patch, num_heads=num_heads))
    out = jax.block_until_ready(fwd(x, params))

    ref = jax.block_until_ready(
        jax.jit(functools.partial(reference_forward,
                                  patch=patch, num_heads=num_heads))(x, params))

    assert out.shape == (B, C, H, W), out.shape
    assert bool(jnp.isfinite(out).all())
    err = float(jnp.max(jnp.abs(out - ref)))
    assert err < 5e-2, f"max abs err vs reference: {err}"
    print("KERNEL_OK")
</pallas_src>

<mosaic_0001>
module attributes {stable_mosaic.version = 11 : i64} {
  func.func @_fused_encoder_kernel(%arg0: i32, %arg1: memref<32x48xf32, #tpu.memory_space<vmem>>, %arg2: memref<48x48xf32, #tpu.memory_space<vmem>>, %arg3: memref<1x48xf32, #tpu.memory_space<vmem>>, %arg4: memref<2x1x48xf32, #tpu.memory_space<vmem>>, %arg5: memref<2x1x48xf32, #tpu.memory_space<vmem>>, %arg6: memref<2x48x144xf32, #tpu.memory_space<vmem>>, %arg7: memref<2x1x144xf32, #tpu.memory_space<vmem>>, %arg8: memref<2x48x48xf32, #tpu.memory_space<vmem>>, %arg9: memref<2x1x48xf32, #tpu.memory_space<vmem>>, %arg10: memref<2x1x48xf32, #tpu.memory_space<vmem>>, %arg11: memref<2x1x48xf32, #tpu.memory_space<vmem>>, %arg12: memref<2x48x48xf32, #tpu.memory_space<vmem>>, %arg13: memref<2x1x48xf32, #tpu.memory_space<vmem>>, %arg14: memref<2x48x48xf32, #tpu.memory_space<vmem>>, %arg15: memref<2x1x48xf32, #tpu.memory_space<vmem>>, %arg16: memref<1x48xf32, #tpu.memory_space<vmem>>, %arg17: memref<1x48xf32, #tpu.memory_space<vmem>>, %arg18: memref<32x48xf32, #tpu.memory_space<vmem>>) attributes {dimension_semantics = [#tpu.dimension_semantics<arbitrary>], iteration_bounds = array<i64: 1>, scalar_prefetch = 0 : i64, scratch_operands = 0 : i64, tpu.core_type = #tpu.core_type<tc>, window_params = [{pipeline_mode = #tpu.pipeline_mode<synchronous>, transform_indices = @transform_0, window_bounds = array<i64: 32, 48>}, {pipeline_mode = #tpu.pipeline_mode<synchronous>, transform_indices = @transform_1, window_bounds = array<i64: 48, 48>}, {pipeline_mode = #tpu.pipeline_mode<synchronous>, transform_indices = @transform_2, window_bounds = array<i64: 1, 48>}, {pipeline_mode = #tpu.pipeline_mode<synchronous>, transform_indices = @transform_3, window_bounds = array<i64: 2, 1, 48>}, {pipeline_mode = #tpu.pipeline_mode<synchronous>, transform_indices = @transform_4, window_bounds = array<i64: 2, 1, 48>}, {pipeline_mode = #tpu.pipeline_mode<synchronous>, transform_indices = @transform_5, window_bounds = array<i64: 2, 48, 144>}, {pipeline_mode = #tpu.pipeline_mode<synchronous>, transform_indices = @transform_6, window_bounds = array<i64: 2, 1, 144>}, {pipeline_mode = #tpu.pipeline_mode<synchronous>, transform_indices = @transform_7, window_bounds = array<i64: 2, 48, 48>}, {pipeline_mode = #tpu.pipeline_mode<synchronous>, transform_indices = @transform_8, window_bounds = array<i64: 2, 1, 48>}, {pipeline_mode = #tpu.pipeline_mode<synchronous>, transform_indices = @transform_9, window_bounds = array<i64: 2, 1, 48>}, {pipeline_mode = #tpu.pipeline_mode<synchronous>, transform_indices = @transform_10, window_bounds = array<i64: 2, 1, 48>}, {pipeline_mode = #tpu.pipeline_mode<synchronous>, transform_indices = @transform_11, window_bounds = array<i64: 2, 48, 48>}, {pipeline_mode = #tpu.pipeline_mode<synchronous>, transform_indices = @transform_12, window_bounds = array<i64: 2, 1, 48>}, {pipeline_mode = #tpu.pipeline_mode<synchronous>, transform_indices = @transform_13, window_bounds = array<i64: 2, 48, 48>}, {pipeline_mode = #tpu.pipeline_mode<synchronous>, transform_indices = @transform_14, window_bounds = array<i64: 2, 1, 48>}, {pipeline_mode = #tpu.pipeline_mode<synchronous>, transform_indices = @transform_15, window_bounds = array<i64: 1, 48>}, {pipeline_mode = #tpu.pipeline_mode<synchronous>, transform_indices = @transform_16, window_bounds = array<i64: 1, 48>}, {pipeline_mode = #tpu.pipeline_mode<synchronous>, transform_indices = @transform_17, window_bounds = array<i64: 32, 48>}]} {
    %0 = tpu.iota {dimensions = array<i32: 0>} : vector<48x4xi32>
    %1 = tpu.iota {dimensions = array<i32: 1>} : vector<48x4xi32>
    %c12_i32 = arith.constant 12 : i32
    %2 = vector.broadcast %c12_i32 : i32 to vector<48x4xi32>
    %3 = arith.muli %1, %2 : vector<48x4xi32>
    %4 = arith.cmpi sge, %0, %3 : vector<48x4xi32>
    %c1_i32 = arith.constant 1 : i32
    %5 = vector.broadcast %c1_i32 : i32 to vector<48x4xi32>
    %6 = arith.addi %1, %5 : vector<48x4xi32>
    %c12_i32_0 = arith.constant 12 : i32
    %7 = vector.broadcast %c12_i32_0 : i32 to vector<48x4xi32>
    %8 = arith.muli %6, %7 : vector<48x4xi32>
    %9 = arith.cmpi slt, %0, %8 : vector<48x4xi32>
    %10 = arith.andi %4, %9 : vector<48x4xi1>
    %cst = arith.constant 1.000000e+00 : f32
    %cst_1 = arith.constant 0.000000e+00 : f32
    %11 = vector.broadcast %cst : f32 to vector<48x4xf32>
    %12 = vector.broadcast %cst_1 : f32 to vector<48x4xf32>
    %13 = arith.select %10, %11, %12 : vector<48x4xi1>, vector<48x4xf32>
    %14 = tpu.iota {dimensions = array<i32: 0>} : vector<4x48xi32>
    %15 = tpu.iota {dimensions = array<i32: 1>} : vector<4x48xi32>
    %c12_i32_2 = arith.constant 12 : i32
    %16 = vector.broadcast %c12_i32_2 : i32 to vector<4x48xi32>
    %17 = arith.muli %14, %16 : vector<4x48xi32>
    %18 = arith.cmpi sge, %15, %17 : vector<4x48xi32>
    %c1_i32_3 = arith.constant 1 : i32
    %19 = vector.broadcast %c1_i32_3 : i32 to vector<4x48xi32>
    %20 = arith.addi %14, %19 : vector<4x48xi32>
    %c12_i32_4 = arith.constant 12 : i32
    %21 = vector.broadcast %c12_i32_4 : i32 to vector<4x48xi32>
    %22 = arith.muli %20, %21 : vector<4x48xi32>
    %23 = arith.cmpi slt, %15, %22 : vector<4x48xi32>
    %24 = arith.andi %18, %23 : vector<4x48xi1>
    %cst_5 = arith.constant 1.000000e+00 : f32
    %cst_6 = arith.constant 0.000000e+00 : f32
    %25 = vector.broadcast %cst_5 : f32 to vector<4x48xf32>
    %26 = vector.broadcast %cst_6 : f32 to vector<4x48xf32>
    %27 = arith.select %24, %25, %26 : vector<4x48xi1>, vector<4x48xf32>
    %c0 = arith.constant 0 : index
    %c0_7 = arith.constant 0 : index
    %28 = vector.load %arg1[%c0, %c0_7] : memref<32x48xf32, #tpu.memory_space<vmem>>, vector<32x48xf32>
    %c0_8 = arith.constant 0 : index
    %c0_9 = arith.constant 0 : index
    %29 = vector.load %arg2[%c0_8, %c0_9] : memref<48x48xf32, #tpu.memory_space<vmem>>, vector<48x48xf32>
    %cst_10 = arith.constant dense<0.000000e+00> : vector<32x48xf32>
    %30 = tpu.matmul %28, %29, %cst_10 {dimension_numbers = #tpu.dot_dimension_numbers<[1], [0], [0], [1], [0, 0, 1, 1], [], []>} : vector<32x48xf32>, vector<48x48xf32>, vector<32x48xf32> -> vector<32x48xf32>
    %c0_11 = arith.constant 0 : index
    %c0_12 = arith.constant 0 : index
    %31 = vector.load %arg3[%c0_11, %c0_12] : memref<1x48xf32, #tpu.memory_space<vmem>>, vector<1x48xf32>
    %32 = vector.broadcast %31 : vector<1x48xf32> to vector<32x48xf32>
    %33 = arith.addf %30, %32 : vector<32x48xf32>
    %c0_13 = arith.constant 0 : index
    %c0_14 = arith.constant 0 : index
    %c0_15 = arith.constant 0 : index
    %34 = vector.load %arg4[%c0_13, %c0_14, %c0_15] : memref<2x1x48xf32, #tpu.memory_space<vmem>>, vector<1x1x48xf32>
    %35 = vector.shape_cast %34 : vector<1x1x48xf32> to vector<1x48xf32>
    %c0_16 = arith.constant 0 : index
    %c0_17 = arith.constant 0 : index
    %c0_18 = arith.constant 0 : index
    %36 = vector.load %arg5[%c0_16, %c0_17, %c0_18] : memref<2x1x48xf32, #tpu.memory_space<vmem>>, vector<1x1x48xf32>
    %37 = vector.shape_cast %36 : vector<1x1x48xf32> to vector<1x48xf32>
    %cst_19 = arith.constant dense<0.000000e+00> : vector<32xf32>
    %38 = vector.multi_reduction <add>, %33, %cst_19 [1] : vector<32x48xf32> to vector<32xf32>
    %39 = vector.shape_cast %38 : vector<32xf32> to vector<32x1xf32>
    %cst_20 = arith.constant 4.800000e+01 : f32
    %40 = vector.broadcast %cst_20 : f32 to vector<32x1xf32>
    %41 = arith.divf %39, %40 : vector<32x1xf32>
    %42 = vector.broadcast %41 : vector<32x1xf32> to vector<32x48xf32>
    %43 = arith.subf %33, %42 : vector<32x48xf32>
    %44 = arith.mulf %43, %43 : vector<32x48xf32>
    %cst_21 = arith.constant dense<0.000000e+00> : vector<32xf32>
    %45 = vector.multi_reduction <add>, %44, %cst_21 [1] : vector<32x48xf32> to vector<32xf32>
    %46 = vector.shape_cast %45 : vector<32xf32> to vector<32x1xf32>
    %cst_22 = arith.constant 4.800000e+01 : f32
    %47 = vector.broadcast %cst_22 : f32 to vector<32x1xf32>
    %48 = arith.divf %46, %47 : vector<32x1xf32>
    %49 = vector.broadcast %41 : vector<32x1xf32> to vector<32x48xf32>
    %50 = arith.subf %33, %49 : vector<32x48xf32>
    %cst_23 = arith.constant 9.99999974E-6 : f32
    %51 = vector.broadcast %cst_23 : f32 to vector<32x1xf32>
    %52 = arith.addf %48, %51 : vector<32x1xf32>
    %53 = math.rsqrt %52 : vector<32x1xf32>
    %54 = vector.broadcast %53 : vector<32x1xf32> to vector<32x48xf32>
    %55 = arith.mulf %50, %54 : vector<32x48xf32>
    %56 = vector.broadcast %35 : vector<1x48xf32> to vector<32x48xf32>
    %57 = arith.mulf %55, %56 : vector<32x48xf32>
    %58 = vector.broadcast %37 : vector<1x48xf32> to vector<32x48xf32>
    %59 = arith.addf %57, %58 : vector<32x48xf32>
    %c0_24 = arith.constant 0 : index
    %c0_25 = arith.constant 0 : index
    %c0_26 = arith.constant 0 : index
    %60 = vector.load %arg6[%c0_24, %c0_25, %c0_26] : memref<2x48x144xf32, #tpu.memory_space<vmem>>, vector<1x48x144xf32>
    %61 = vector.shape_cast %60 : vector<1x48x144xf32> to vector<48x144xf32>
    %cst_27 = arith.constant dense<0.000000e+00> : vector<32x144xf32>
    %62 = tpu.matmul %59, %61, %cst_27 {dimension_numbers = #tpu.dot_dimension_numbers<[1], [0], [0], [1], [0, 0, 1, 1], [], []>} : vector<32x48xf32>, vector<48x144xf32>, vector<32x144xf32> -> vector<32x144xf32>
    %c0_28 = arith.constant 0 : index
    %c0_29 = arith.constant 0 : index
    %c0_30 = arith.constant 0 : index
    %63 = vector.load %arg7[%c0_28, %c0_29, %c0_30] : memref<2x1x144xf32, #tpu.memory_space<vmem>>, vector<1x1x144xf32>
    %64 = vector.shape_cast %63 : vector<1x1x144xf32> to vector<1x144xf32>
    %65 = vector.broadcast %64 : vector<1x144xf32> to vector<32x144xf32>
    %66 = arith.addf %62, %65 : vector<32x144xf32>
    %67 = vector.extract_strided_slice %66 {offsets = [0, 0], sizes = [32, 48], strides = [1, 1]} : vector<32x144xf32> to vector<32x48xf32>
    %cst_31 = arith.constant 0.288675129 : f32
    %68 = vector.broadcast %cst_31 : f32 to vector<32x48xf32>
    %69 = arith.mulf %67, %68 : vector<32x48xf32>
    %70 = vector.extract_strided_slice %66 {offsets = [0, 48], sizes = [32, 48], strides = [1, 1]} : vector<32x144xf32> to vector<32x48xf32>
    %71 = vector.extract_strided_slice %66 {offsets = [0, 96], sizes = [32, 48], strides = [1, 1]} : vector<32x144xf32> to vector<32x48xf32>
    %72 = arith.mulf %69, %70 : vector<32x48xf32>
    %cst_32 = arith.constant dense<0.000000e+00> : vector<32x4xf32>
    %73 = tpu.matmul %72, %13, %cst_32 {dimension_numbers = #tpu.dot_dimension_numbers<[1], [0], [0], [1], [0, 0, 1, 1], [], []>} : vector<32x48xf32>, vector<48x4xf32>, vector<32x4xf32> -> vector<32x4xf32>
    %74 = vector.extract_strided_slice %70 {offsets = [16, 0], sizes = [16, 48], strides = [1, 1]} : vector<32x48xf32> to vector<16x48xf32>
    %75 = vector.extract_strided_slice %70 {offsets = [0, 0], sizes = [16, 48], strides = [1, 1]} : vector<32x48xf32> to vector<16x48xf32>
    %76 = tpu.concatenate %74, %75 in 0 : vector<16x48xf32>, vector<16x48xf32> -> vector<32x48xf32>
    %77 = vector.extract_strided_slice %71 {offsets = [16, 0], sizes = [16, 48], strides = [1, 1]} : vector<32x48xf32> to vector<16x48xf32>
    %78 = vector.extract_strided_slice %71 {offsets = [0, 0], sizes = [16, 48], strides = [1, 1]} : vector<32x48xf32> to vector<16x48xf32>
    %79 = tpu.concatenate %77, %78 in 0 : vector<16x48xf32>, vector<16x48xf32> -> vector<32x48xf32>
    %80 = arith.mulf %69, %76 : vector<32x48xf32>
    %cst_33 = arith.constant dense<0.000000e+00> : vector<32x4xf32>
    %81 = tpu.matmul %80, %13, %cst_33 {dimension_numbers = #tpu.dot_dimension_numbers<[1], [0], [0], [1], [0, 0, 1, 1], [], []>} : vector<32x48xf32>, vector<48x4xf32>, vector<32x4xf32> -> vector<32x4xf32>
    %82 = arith.maximumf %73, %81 : vector<32x4xf32>
    %83 = arith.subf %73, %82 : vector<32x4xf32>
    %84 = math.exp %83 : vector<32x4xf32>
    %85 = arith.subf %81, %82 : vector<32x4xf32>
    %86 = math.exp %85 : vector<32x4xf32>
    %87 = arith.addf %84, %86 : vector<32x4xf32>
    %88 = tpu.reciprocal %87 {approx = true} : vector<32x4xf32> -> vector<32x4xf32>
    %89 = arith.mulf %84, %88 : vector<32x4xf32>
    %cst_34 = arith.constant dense<0.000000e+00> : vector<32x48xf32>
    %90 = tpu.matmul %89, %27, %cst_34 {dimension_numbers = #tpu.dot_dimension_numbers<[1], [0], [0], [1], [0, 0, 1, 1], [], []>} : vector<32x4xf32>, vector<4x48xf32>, vector<32x48xf32> -> vector<32x48xf32>
    %91 = arith.mulf %90, %71 : vector<32x48xf32>
    %92 = arith.mulf %86, %88 : vector<32x4xf32>
    %cst_35 = arith.constant dense<0.000000e+00> : vector<32x48xf32>
    %93 = tpu.matmul %92, %27, %cst_35 {dimension_numbers = #tpu.dot_dimension_numbers<[1], [0], [0], [1], [0, 0, 1, 1], [], []>} : vector<32x4xf32>, vector<4x48xf32>, vector<32x48xf32> -> vector<32x48xf32>
    %94 = arith.mulf %93, %79 : vector<32x48xf32>
    %95 = arith.addf %91, %94 : vector<32x48xf32>
    %c0_36 = arith.constant 0 : index
    %c0_37 = arith.constant 0 : index
    %c0_38 = arith.constant 0 : index
    %96 = vector.load %arg8[%c0_36, %c0_37, %c0_38] : memref<2x48x48xf32, #tpu.memory_space<vmem>>, vector<1x48x48xf32>
    %97 = vector.shape_cast %96 : vector<1x48x48xf32> to vector<48x48xf32>
    %cst_39 = arith.constant dense<0.000000e+00> : vector<32x48xf32>
    %98 = tpu.matmul %95, %97, %cst_39 {dimension_numbers = #tpu.dot_dimension_numbers<[1], [0], [0], [1], [0, 0, 1, 1], [], []>} : vector<32x48xf32>, vector<48x48xf32>, vector<32x48xf32> -> vector<32x48xf32>
    %c0_40 = arith.constant 0 : index
    %c0_41 = arith.constant 0 : index
    %c0_42 = arith.constant 0 : index
    %99 = vector.load %arg9[%c0_40, %c0_41, %c0_42] : memref<2x1x48xf32, #tpu.memory_space<vmem>>, vector<1x1x48xf32>
    %100 = vector.shape_cast %99 : vector<1x1x48xf32> to vector<1x48xf32>
    %101 = vector.broadcast %100 : vector<1x48xf32> to vector<32x48xf32>
    %102 = arith.addf %98, %101 : vector<32x48xf32>
    %103 = arith.addf %33, %102 : vector<32x48xf32>
    %c0_43 = arith.constant 0 : index
    %c0_44 = arith.constant 0 : index
    %c0_45 = arith.constant 0 : index
    %104 = vector.load %arg10[%c0_43, %c0_44, %c0_45] : memref<2x1x48xf32, #tpu.memory_space<vmem>>, vector<1x1x48xf32>
    %105 = vector.shape_cast %104 : vector<1x1x48xf32> to vector<1x48xf32>
    %c0_46 = arith.constant 0 : index
    %c0_47 = arith.constant 0 : index
    %c0_48 = arith.constant 0 : index
    %106 = vector.load %arg11[%c0_46, %c0_47, %c0_48] : memref<2x1x48xf32, #tpu.memory_space<vmem>>, vector<1x1x48xf32>
    %107 = vector.shape_cast %106 : vector<1x1x48xf32> to vector<1x48xf32>
    %cst_49 = arith.constant dense<0.000000e+00> : vector<32xf32>
    %108 = vector.multi_reduction <add>, %103, %cst_49 [1] : vector<32x48xf32> to vector<32xf32>
    %109 = vector.shape_cast %108 : vector<32xf32> to vector<32x1xf32>
    %cst_50 = arith.constant 4.800000e+01 : f32
    %110 = vector.broadcast %cst_50 : f32 to vector<32x1xf32>
    %111 = arith.divf %109, %110 : vector<32x1xf32>
    %112 = vector.broadcast %111 : vector<32x1xf32> to vector<32x48xf32>
    %113 = arith.subf %103, %112 : vector<32x48xf32>
    %114 = arith.mulf %113, %113 : vector<32x48xf32>
    %cst_51 = arith.constant dense<0.000000e+00> : vector<32xf32>
    %115 = vector.multi_reduction <add>, %114, %cst_51 [1] : vector<32x48xf32> to vector<32xf32>
    %116 = vector.shape_cast %115 : vector<32xf32> to vector<32x1xf32>
    %cst_52 = arith.constant 4.800000e+01 : f32
    %117 = vector.broadcast %cst_52 : f32 to vector<32x1xf32>
    %118 = arith.divf %116, %117 : vector<32x1xf32>
    %119 = vector.broadcast %111 : vector<32x1xf32> to vector<32x48xf32>
    %120 = arith.subf %103, %119 : vector<32x48xf32>
    %cst_53 = arith.constant 9.99999974E-6 : f32
    %121 = vector.broadcast %cst_53 : f32 to vector<32x1xf32>
    %122 = arith.addf %118, %121 : vector<32x1xf32>
    %123 = math.rsqrt %122 : vector<32x1xf32>
    %124 = vector.broadcast %123 : vector<32x1xf32> to vector<32x48xf32>
    %125 = arith.mulf %120, %124 : vector<32x48xf32>
    %126 = vector.broadcast %105 : vector<1x48xf32> to vector<32x48xf32>
    %127 = arith.mulf %125, %126 : vector<32x48xf32>
    %128 = vector.broadcast %107 : vector<1x48xf32> to vector<32x48xf32>
    %129 = arith.addf %127, %128 : vector<32x48xf32>
    %c0_54 = arith.constant 0 : index
    %c0_55 = arith.constant 0 : index
    %c0_56 = arith.constant 0 : index
    %130 = vector.load %arg12[%c0_54, %c0_55, %c0_56] : memref<2x48x48xf32, #tpu.memory_space<vmem>>, vector<1x48x48xf32>
    %131 = vector.shape_cast %130 : vector<1x48x48xf32> to vector<48x48xf32>
    %cst_57 = arith.constant dense<0.000000e+00> : vector<32x48xf32>
    %132 = tpu.matmul %129, %131, %cst_57 {dimension_numbers = #tpu.dot_dimension_numbers<[1], [0], [0], [1], [0, 0, 1, 1], [], []>} : vector<32x48xf32>, vector<48x48xf32>, vector<32x48xf32> -> vector<32x48xf32>
    %c0_58 = arith.constant 0 : index
    %c0_59 = arith.constant 0 : index
    %c0_60 = arith.constant 0 : index
    %133 = vector.load %arg13[%c0_58, %c0_59, %c0_60] : memref<2x1x48xf32, #tpu.memory_space<vmem>>, vector<1x1x48xf32>
    %134 = vector.shape_cast %133 : vector<1x1x48xf32> to vector<1x48xf32>
    %135 = vector.broadcast %134 : vector<1x48xf32> to vector<32x48xf32>
    %136 = arith.addf %132, %135 : vector<32x48xf32>
    %cst_61 = arith.constant 0.000000e+00 : f32
    %137 = vector.broadcast %cst_61 : f32 to vector<32x48xf32>
    %138 = arith.maximumf %136, %137 : vector<32x48xf32>
    %c0_62 = arith.constant 0 : index
    %c0_63 = arith.constant 0 : index
    %c0_64 = arith.constant 0 : index
    %139 = vector.load %arg14[%c0_62, %c0_63, %c0_64] : memref<2x48x48xf32, #tpu.memory_space<vmem>>, vector<1x48x48xf32>
    %140 = vector.shape_cast %139 : vector<1x48x48xf32> to vector<48x48xf32>
    %cst_65 = arith.constant dense<0.000000e+00> : vector<32x48xf32>
    %141 = tpu.matmul %138, %140, %cst_65 {dimension_numbers = #tpu.dot_dimension_numbers<[1], [0], [0], [1], [0, 0, 1, 1], [], []>} : vector<32x48xf32>, vector<48x48xf32>, vector<32x48xf32> -> vector<32x48xf32>
    %c0_66 = arith.constant 0 : index
    %c0_67 = arith.constant 0 : index
    %c0_68 = arith.constant 0 : index
    %142 = vector.load %arg15[%c0_66, %c0_67, %c0_68] : memref<2x1x48xf32, #tpu.memory_space<vmem>>, vector<1x1x48xf32>
    %143 = vector.shape_cast %142 : vector<1x1x48xf32> to vector<1x48xf32>
    %144 = vector.broadcast %143 : vector<1x48xf32> to vector<32x48xf32>
    %145 = arith.addf %141, %144 : vector<32x48xf32>
    %146 = arith.addf %103, %145 : vector<32x48xf32>
    %c1 = arith.constant 1 : index
    %c0_69 = arith.constant 0 : index
    %c0_70 = arith.constant 0 : index
    %147 = vector.load %arg4[%c1, %c0_69, %c0_70] : memref<2x1x48xf32, #tpu.memory_space<vmem>>, vector<1x1x48xf32>
    %148 = vector.shape_cast %147 : vector<1x1x48xf32> to vector<1x48xf32>
    %c1_71 = arith.constant 1 : index
    %c0_72 = arith.constant 0 : index
    %c0_73 = arith.constant 0 : index
    %149 = vector.load %arg5[%c1_71, %c0_72, %c0_73] : memref<2x1x48xf32, #tpu.memory_space<vmem>>, vector<1x1x48xf32>
    %150 = vector.shape_cast %149 : vector<1x1x48xf32> to vector<1x48xf32>
    %cst_74 = arith.constant dense<0.000000e+00> : vector<32xf32>
    %151 = vector.multi_reduction <add>, %146, %cst_74 [1] : vector<32x48xf32> to vector<32xf32>
    %152 = vector.shape_cast %151 : vector<32xf32> to vector<32x1xf32>
    %cst_75 = arith.constant 4.800000e+01 : f32
    %153 = vector.broadcast %cst_75 : f32 to vector<32x1xf32>
    %154 = arith.divf %152, %153 : vector<32x1xf32>
    %155 = vector.broadcast %154 : vector<32x1xf32> to vector<32x48xf32>
    %156 = arith.subf %146, %155 : vector<32x48xf32>
    %157 = arith.mulf %156, %156 : vector<32x48xf32>
    %cst_76 = arith.constant dense<0.000000e+00> : vector<32xf32>
    %158 = vector.multi_reduction <add>, %157, %cst_76 [1] : vector<32x48xf32> to vector<32xf32>
    %159 = vector.shape_cast %158 : vector<32xf32> to vector<32x1xf32>
    %cst_77 = arith.constant 4.800000e+01 : f32
    %160 = vector.broadcast %cst_77 : f32 to vector<32x1xf32>
    %161 = arith.divf %159, %160 : vector<32x1xf32>
    %162 = vector.broadcast %154 : vector<32x1xf32> to vector<32x48xf32>
    %163 = arith.subf %146, %162 : vector<32x48xf32>
    %cst_78 = arith.constant 9.99999974E-6 : f32
    %164 = vector.broadcast %cst_78 : f32 to vector<32x1xf32>
    %165 = arith.addf %161, %164 : vector<32x1xf32>
    %166 = math.rsqrt %165 : vector<32x1xf32>
    %167 = vector.broadcast %166 : vector<32x1xf32> to vector<32x48xf32>
    %168 = arith.mulf %163, %167 : vector<32x48xf32>
    %169 = vector.broadcast %148 : vector<1x48xf32> to vector<32x48xf32>
    %170 = arith.mulf %168, %169 : vector<32x48xf32>
    %171 = vector.broadcast %150 : vector<1x48xf32> to vector<32x48xf32>
    %172 = arith.addf %170, %171 : vector<32x48xf32>
    %c1_79 = arith.constant 1 : index
    %c0_80 = arith.constant 0 : index
    %c0_81 = arith.constant 0 : index
    %173 = vector.load %arg6[%c1_79, %c0_80, %c0_81] : memref<2x48x144xf32, #tpu.memory_space<vmem>>, vector<1x48x144xf32>
    %174 = vector.shape_cast %173 : vector<1x48x144xf32> to vector<48x144xf32>
    %cst_82 = arith.constant dense<0.000000e+00> : vector<32x144xf32>
    %175 = tpu.matmul %172, %174, %cst_82 {dimension_numbers = #tpu.dot_dimension_numbers<[1], [0], [0], [1], [0, 0, 1, 1], [], []>} : vector<32x48xf32>, vector<48x144xf32>, vector<32x144xf32> -> vector<32x144xf32>
    %c1_83 = arith.constant 1 : index
    %c0_84 = arith.constant 0 : index
    %c0_85 = arith.constant 0 : index
    %176 = vector.load %arg7[%c1_83, %c0_84, %c0_85] : memref<2x1x144xf32, #tpu.memory_space<vmem>>, vector<1x1x144xf32>
    %177 = vector.shape_cast %176 : vector<1x1x144xf32> to vector<1x144xf32>
    %178 = vector.broadcast %177 : vector<1x144xf32> to vector<32x144xf32>
    %179 = arith.addf %175, %178 : vector<32x144xf32>
    %180 = vector.extract_strided_slice %179 {offsets = [0, 0], sizes = [32, 48], strides = [1, 1]} : vector<32x144xf32> to vector<32x48xf32>
    %cst_86 = arith.constant 0.288675129 : f32
    %181 = vector.broadcast %cst_86 : f32 to vector<32x48xf32>
    %182 = arith.mulf %180, %181 : vector<32x48xf32>
    %183 = vector.extract_strided_slice %179 {offsets = [0, 48], sizes = [32, 48], strides = [1, 1]} : vector<32x144xf32> to vector<32x48xf32>
    %184 = vector.extract_strided_slice %179 {offsets = [0, 96], sizes = [32, 48], strides = [1, 1]} : vector<32x144xf32> to vector<32x48xf32>
    %185 = arith.mulf %182, %183 : vector<32x48xf32>
    %cst_87 = arith.constant dense<0.000000e+00> : vector<32x4xf32>
    %186 = tpu.matmul %185, %13, %cst_87 {dimension_numbers = #tpu.dot_dimension_numbers<[1], [0], [0], [1], [0, 0, 1, 1], [], []>} : vector<32x48xf32>, vector<48x4xf32>, vector<32x4xf32> -> vector<32x4xf32>
    %187 = vector.extract_strided_slice %183 {offsets = [16, 0], sizes = [16, 48], strides = [1, 1]} : vector<32x48xf32> to vector<16x48xf32>
    %188 = vector.extract_strided_slice %183 {offsets = [0, 0], sizes = [16, 48], strides = [1, 1]} : vector<32x48xf32> to vector<16x48xf32>
    %189 = tpu.concatenate %187, %188 in 0 : vector<16x48xf32>, vector<16x48xf32> -> vector<32x48xf32>
    %190 = vector.extract_strided_slice %184 {offsets = [16, 0], sizes = [16, 48], strides = [1, 1]} : vector<32x48xf32> to vector<16x48xf32>
    %191 = vector.extract_strided_slice %184 {offsets = [0, 0], sizes = [16, 48], strides = [1, 1]} : vector<32x48xf32> to vector<16x48xf32>
    %192 = tpu.concatenate %190, %191 in 0 : vector<16x48xf32>, vector<16x48xf32> -> vector<32x48xf32>
    %193 = arith.mulf %182, %189 : vector<32x48xf32>
    %cst_88 = arith.constant dense<0.000000e+00> : vector<32x4xf32>
    %194 = tpu.matmul %193, %13, %cst_88 {dimension_numbers = #tpu.dot_dimension_numbers<[1], [0], [0], [1], [0, 0, 1, 1], [], []>} : vector<32x48xf32>, vector<48x4xf32>, vector<32x4xf32> -> vector<32x4xf32>
    %195 = arith.maximumf %186, %194 : vector<32x4xf32>
    %196 = arith.subf %186, %195 : vector<32x4xf32>
    %197 = math.exp %196 : vector<32x4xf32>
    %198 = arith.subf %194, %195 : vector<32x4xf32>
    %199 = math.exp %198 : vector<32x4xf32>
    %200 = arith.addf %197, %199 : vector<32x4xf32>
    %201 = tpu.reciprocal %200 {approx = true} : vector<32x4xf32> -> vector<32x4xf32>
    %202 = arith.mulf %197, %201 : vector<32x4xf32>
    %cst_89 = arith.constant dense<0.000000e+00> : vector<32x48xf32>
    %203 = tpu.matmul %202, %27, %cst_89 {dimension_numbers = #tpu.dot_dimension_numbers<[1], [0], [0], [1], [0, 0, 1, 1], [], []>} : vector<32x4xf32>, vector<4x48xf32>, vector<32x48xf32> -> vector<32x48xf32>
    %204 = arith.mulf %203, %184 : vector<32x48xf32>
    %205 = arith.mulf %199, %201 : vector<32x4xf32>
    %cst_90 = arith.constant dense<0.000000e+00> : vector<32x48xf32>
    %206 = tpu.matmul %205, %27, %cst_90 {dimension_numbers = #tpu.dot_dimension_numbers<[1], [0], [0], [1], [0, 0, 1, 1], [], []>} : vector<32x4xf32>, vector<4x48xf32>, vector<32x48xf32> -> vector<32x48xf32>
    %207 = arith.mulf %206, %192 : vector<32x48xf32>
    %208 = arith.addf %204, %207 : vector<32x48xf32>
    %c1_91 = arith.constant 1 : index
    %c0_92 = arith.constant 0 : index
    %c0_93 = arith.constant 0 : index
    %209 = vector.load %arg8[%c1_91, %c0_92, %c0_93] : memref<2x48x48xf32, #tpu.memory_space<vmem>>, vector<1x48x48xf32>
    %210 = vector.shape_cast %209 : vector<1x48x48xf32> to vector<48x48xf32>
    %cst_94 = arith.constant dense<0.000000e+00> : vector<32x48xf32>
    %211 = tpu.matmul %208, %210, %cst_94 {dimension_numbers = #tpu.dot_dimension_numbers<[1], [0], [0], [1], [0, 0, 1, 1], [], []>} : vector<32x48xf32>, vector<48x48xf32>, vector<32x48xf32> -> vector<32x48xf32>
    %c1_95 = arith.constant 1 : index
    %c0_96 = arith.constant 0 : index
    %c0_97 = arith.constant 0 : index
    %212 = vector.load %arg9[%c1_95, %c0_96, %c0_97] : memref<2x1x48xf32, #tpu.memory_space<vmem>>, vector<1x1x48xf32>
    %213 = vector.shape_cast %212 : vector<1x1x48xf32> to vector<1x48xf32>
    %214 = vector.broadcast %213 : vector<1x48xf32> to vector<32x48xf32>
    %215 = arith.addf %211, %214 : vector<32x48xf32>
    %216 = arith.addf %146, %215 : vector<32x48xf32>
    %c1_98 = arith.constant 1 : index
    %c0_99 = arith.constant 0 : index
    %c0_100 = arith.constant 0 : index
    %217 = vector.load %arg10[%c1_98, %c0_99, %c0_100] : memref<2x1x48xf32, #tpu.memory_space<vmem>>, vector<1x1x48xf32>
    %218 = vector.shape_cast %217 : vector<1x1x48xf32> to vector<1x48xf32>
    %c1_101 = arith.constant 1 : index
    %c0_102 = arith.constant 0 : index
    %c0_103 = arith.constant 0 : index
    %219 = vector.load %arg11[%c1_101, %c0_102, %c0_103] : memref<2x1x48xf32, #tpu.memory_space<vmem>>, vector<1x1x48xf32>
    %220 = vector.shape_cast %219 : vector<1x1x48xf32> to vector<1x48xf32>
    %cst_104 = arith.constant dense<0.000000e+00> : vector<32xf32>
    %221 = vector.multi_reduction <add>, %216, %cst_104 [1] : vector<32x48xf32> to vector<32xf32>
    %222 = vector.shape_cast %221 : vector<32xf32> to vector<32x1xf32>
    %cst_105 = arith.constant 4.800000e+01 : f32
    %223 = vector.broadcast %cst_105 : f32 to vector<32x1xf32>
    %224 = arith.divf %222, %223 : vector<32x1xf32>
    %225 = vector.broadcast %224 : vector<32x1xf32> to vector<32x48xf32>
    %226 = arith.subf %216, %225 : vector<32x48xf32>
    %227 = arith.mulf %226, %226 : vector<32x48xf32>
    %cst_106 = arith.constant dense<0.000000e+00> : vector<32xf32>
    %228 = vector.multi_reduction <add>, %227, %cst_106 [1] : vector<32x48xf32> to vector<32xf32>
    %229 = vector.shape_cast %228 : vector<32xf32> to vector<32x1xf32>
    %cst_107 = arith.constant 4.800000e+01 : f32
    %230 = vector.broadcast %cst_107 : f32 to vector<32x1xf32>
    %231 = arith.divf %229, %230 : vector<32x1xf32>
    %232 = vector.broadcast %224 : vector<32x1xf32> to vector<32x48xf32>
    %233 = arith.subf %216, %232 : vector<32x48xf32>
    %cst_108 = arith.constant 9.99999974E-6 : f32
    %234 = vector.broadcast %cst_108 : f32 to vector<32x1xf32>
    %235 = arith.addf %231, %234 : vector<32x1xf32>
    %236 = math.rsqrt %235 : vector<32x1xf32>
    %237 = vector.broadcast %236 : vector<32x1xf32> to vector<32x48xf32>
    %238 = arith.mulf %233, %237 : vector<32x48xf32>
    %239 = vector.broadcast %218 : vector<1x48xf32> to vector<32x48xf32>
    %240 = arith.mulf %238, %239 : vector<32x48xf32>
    %241 = vector.broadcast %220 : vector<1x48xf32> to vector<32x48xf32>
    %242 = arith.addf %240, %241 : vector<32x48xf32>
    %c1_109 = arith.constant 1 : index
    %c0_110 = arith.constant 0 : index
    %c0_111 = arith.constant 0 : index
    %243 = vector.load %arg12[%c1_109, %c0_110, %c0_111] : memref<2x48x48xf32, #tpu.memory_space<vmem>>, vector<1x48x48xf32>
    %244 = vector.shape_cast %243 : vector<1x48x48xf32> to vector<48x48xf32>
    %cst_112 = arith.constant dense<0.000000e+00> : vector<32x48xf32>
    %245 = tpu.matmul %242, %244, %cst_112 {dimension_numbers = #tpu.dot_dimension_numbers<[1], [0], [0], [1], [0, 0, 1, 1], [], []>} : vector<32x48xf32>, vector<48x48xf32>, vector<32x48xf32> -> vector<32x48xf32>
    %c1_113 = arith.constant 1 : index
    %c0_114 = arith.constant 0 : index
    %c0_115 = arith.constant 0 : index
    %246 = vector.load %arg13[%c1_113, %c0_114, %c0_115] : memref<2x1x48xf32, #tpu.memory_space<vmem>>, vector<1x1x48xf32>
    %247 = vector.shape_cast %246 : vector<1x1x48xf32> to vector<1x48xf32>
    %248 = vector.broadcast %247 : vector<1x48xf32> to vector<32x48xf32>
    %249 = arith.addf %245, %248 : vector<32x48xf32>
    %cst_116 = arith.constant 0.000000e+00 : f32
    %250 = vector.broadcast %cst_116 : f32 to vector<32x48xf32>
    %251 = arith.maximumf %249, %250 : vector<32x48xf32>
    %c1_117 = arith.constant 1 : index
    %c0_118 = arith.constant 0 : index
    %c0_119 = arith.constant 0 : index
    %252 = vector.load %arg14[%c1_117, %c0_118, %c0_119] : memref<2x48x48xf32, #tpu.memory_space<vmem>>, vector<1x48x48xf32>
    %253 = vector.shape_cast %252 : vector<1x48x48xf32> to vector<48x48xf32>
    %cst_120 = arith.constant dense<0.000000e+00> : vector<32x48xf32>
    %254 = tpu.matmul %251, %253, %cst_120 {dimension_numbers = #tpu.dot_dimension_numbers<[1], [0], [0], [1], [0, 0, 1, 1], [], []>} : vector<32x48xf32>, vector<48x48xf32>, vector<32x48xf32> -> vector<32x48xf32>
    %c1_121 = arith.constant 1 : index
    %c0_122 = arith.constant 0 : index
    %c0_123 = arith.constant 0 : index
    %255 = vector.load %arg15[%c1_121, %c0_122, %c0_123] : memref<2x1x48xf32, #tpu.memory_space<vmem>>, vector<1x1x48xf32>
    %256 = vector.shape_cast %255 : vector<1x1x48xf32> to vector<1x48xf32>
    %257 = vector.broadcast %256 : vector<1x48xf32> to vector<32x48xf32>
    %258 = arith.addf %254, %257 : vector<32x48xf32>
    %259 = arith.addf %216, %258 : vector<32x48xf32>
    %c0_124 = arith.constant 0 : index
    %c0_125 = arith.constant 0 : index
    %260 = vector.load %arg16[%c0_124, %c0_125] : memref<1x48xf32, #tpu.memory_space<vmem>>, vector<1x48xf32>
    %c0_126 = arith.constant 0 : index
    %c0_127 = arith.constant 0 : index
    %261 = vector.load %arg17[%c0_126, %c0_127] : memref<1x48xf32, #tpu.memory_space<vmem>>, vector<1x48xf32>
    %cst_128 = arith.constant dense<0.000000e+00> : vector<32xf32>
    %262 = vector.multi_reduction <add>, %259, %cst_128 [1] : vector<32x48xf32> to vector<32xf32>
    %263 = vector.shape_cast %262 : vector<32xf32> to vector<32x1xf32>
    %cst_129 = arith.constant 4.800000e+01 : f32
    %264 = vector.broadcast %cst_129 : f32 to vector<32x1xf32>
    %265 = arith.divf %263, %264 : vector<32x1xf32>
    %266 = vector.broadcast %265 : vector<32x1xf32> to vector<32x48xf32>
    %267 = arith.subf %259, %266 : vector<32x48xf32>
    %268 = arith.mulf %267, %267 : vector<32x48xf32>
    %cst_130 = arith.constant dense<0.000000e+00> : vector<32xf32>
    %269 = vector.multi_reduction <add>, %268, %cst_130 [1] : vector<32x48xf32> to vector<32xf32>
    %270 = vector.shape_cast %269 : vector<32xf32> to vector<32x1xf32>
    %cst_131 = arith.constant 4.800000e+01 : f32
    %271 = vector.broadcast %cst_131 : f32 to vector<32x1xf32>
    %272 = arith.divf %270, %271 : vector<32x1xf32>
    %273 = vector.broadcast %265 : vector<32x1xf32> to vector<32x48xf32>
    %274 = arith.subf %259, %273 : vector<32x48xf32>
    %cst_132 = arith.constant 9.99999974E-6 : f32
    %275 = vector.broadcast %cst_132 : f32 to vector<32x1xf32>
    %276 = arith.addf %272, %275 : vector<32x1xf32>
    %277 = math.rsqrt %276 : vector<32x1xf32>
    %278 = vector.broadcast %277 : vector<32x1xf32> to vector<32x48xf32>
    %279 = arith.mulf %274, %278 : vector<32x48xf32>
    %280 = vector.broadcast %260 : vector<1x48xf32> to vector<32x48xf32>
    %281 = arith.mulf %279, %280 : vector<32x48xf32>
    %282 = vector.broadcast %261 : vector<1x48xf32> to vector<32x48xf32>
    %283 = arith.addf %281, %282 : vector<32x48xf32>
    %c0_133 = arith.constant 0 : index
    %c0_134 = arith.constant 0 : index
    %284 = vector.load %arg18[%c0_133, %c0_134] : memref<32x48xf32, #tpu.memory_space<vmem>>, vector<32x48xf32>
    tpu.vector_store %arg18[%c0_133, %c0_134], %283 {strides = array<i32>} : memref<32x48xf32, #tpu.memory_space<vmem>>, vector<32x48xf32>,
    return
  }
  func.func @transform_0(%arg0: i32) -> (i32, i32) {
    %c0_i32 = arith.constant 0 : i32
    %c0_i32_0 = arith.constant 0 : i32
    %c0_i32_1 = arith.constant 0 : i32
    return %c0_i32, %c0_i32_0 : i32, i32
  }
  func.func @transform_1(%arg0: i32) -> (i32, i32) {
    %c0_i32 = arith.constant 0 : i32
    %c0_i32_0 = arith.constant 0 : i32
    %c0_i32_1 = arith.constant 0 : i32
    return %c0_i32, %c0_i32_0 : i32, i32
  }
  func.func @transform_2(%arg0: i32) -> (i32, i32) {
    %c0_i32 = arith.constant 0 : i32
    %c0_i32_0 = arith.constant 0 : i32
    %c0_i32_1 = arith.constant 0 : i32
    return %c0_i32, %c0_i32_0 : i32, i32
  }
  func.func @transform_3(%arg0: i32) -> (i32, i32, i32) {
    %c0_i32 = arith.constant 0 : i32
    %c0_i32_0 = arith.constant 0 : i32
    %c0_i32_1 = arith.constant 0 : i32
    %c0_i32_2 = arith.constant 0 : i32
    return %c0_i32, %c0_i32_0, %c0_i32_1 : i32, i32, i32
  }
  func.func @transform_4(%arg0: i32) -> (i32, i32, i32) {
    %c0_i32 = arith.constant 0 : i32
    %c0_i32_0 = arith.constant 0 : i32
    %c0_i32_1 = arith.constant 0 : i32
    %c0_i32_2 = arith.constant 0 : i32
    return %c0_i32, %c0_i32_0, %c0_i32_1 : i32, i32, i32
  }
  func.func @transform_5(%arg0: i32) -> (i32, i32, i32) {
    %c0_i32 = arith.constant 0 : i32
    %c0_i32_0 = arith.constant 0 : i32
    %c0_i32_1 = arith.constant 0 : i32
    %c0_i32_2 = arith.constant 0 : i32
    return %c0_i32, %c0_i32_0, %c0_i32_1 : i32, i32, i32
  }
  func.func @transform_6(%arg0: i32) -> (i32, i32, i32) {
    %c0_i32 = arith.constant 0 : i32
    %c0_i32_0 = arith.constant 0 : i32
    %c0_i32_1 = arith.constant 0 : i32
    %c0_i32_2 = arith.constant 0 : i32
    return %c0_i32, %c0_i32_0, %c0_i32_1 : i32, i32, i32
  }
  func.func @transform_7(%arg0: i32) -> (i32, i32, i32) {
    %c0_i32 = arith.constant 0 : i32
    %c0_i32_0 = arith.constant 0 : i32
    %c0_i32_1 = arith.constant 0 : i32
    %c0_i32_2 = arith.constant 0 : i32
    return %c0_i32, %c0_i32_0, %c0_i32_1 : i32, i32, i32
  }
  func.func @transform_8(%arg0: i32) -> (i32, i32, i32) {
    %c0_i32 = arith.constant 0 : i32
    %c0_i32_0 = arith.constant 0 : i32
    %c0_i32_1 = arith.constant 0 : i32
    %c0_i32_2 = arith.constant 0 : i32
    return %c0_i32, %c0_i32_0, %c0_i32_1 : i32, i32, i32
  }
  func.func @transform_9(%arg0: i32) -> (i32, i32, i32) {
    %c0_i32 = arith.constant 0 : i32
    %c0_i32_0 = arith.constant 0 : i32
    %c0_i32_1 = arith.constant 0 : i32
    %c0_i32_2 = arith.constant 0 : i32
    return %c0_i32, %c0_i32_0, %c0_i32_1 : i32, i32, i32
  }
  func.func @transform_10(%arg0: i32) -> (i32, i32, i32) {
    %c0_i32 = arith.constant 0 : i32
    %c0_i32_0 = arith.constant 0 : i32
    %c0_i32_1 = arith.constant 0 : i32
    %c0_i32_2 = arith.constant 0 : i32
    return %c0_i32, %c0_i32_0, %c0_i32_1 : i32, i32, i32
  }
  func.func @transform_11(%arg0: i32) -> (i32, i32, i32) {
    %c0_i32 = arith.constant 0 : i32
    %c0_i32_0 = arith.constant 0 : i32
    %c0_i32_1 = arith.constant 0 : i32
    %c0_i32_2 = arith.constant 0 : i32
    return %c0_i32, %c0_i32_0, %c0_i32_1 : i32, i32, i32
  }
  func.func @transform_12(%arg0: i32) -> (i32, i32, i32) {
    %c0_i32 = arith.constant 0 : i32
    %c0_i32_0 = arith.constant 0 : i32
    %c0_i32_1 = arith.constant 0 : i32
    %c0_i32_2 = arith.constant 0 : i32
    return %c0_i32, %c0_i32_0, %c0_i32_1 : i32, i32, i32
  }
  func.func @transform_13(%arg0: i32) -> (i32, i32, i32) {
    %c0_i32 = arith.constant 0 : i32
    %c0_i32_0 = arith.constant 0 : i32
    %c0_i32_1 = arith.constant 0 : i32
    %c0_i32_2 = arith.constant 0 : i32
    return %c0_i32, %c0_i32_0, %c0_i32_1 : i32, i32, i32
  }
  func.func @transform_14(%arg0: i32) -> (i32, i32, i32) {
    %c0_i32 = arith.constant 0 : i32
    %c0_i32_0 = arith.constant 0 : i32
    %c0_i32_1 = arith.constant 0 : i32
    %c0_i32_2 = arith.constant 0 : i32
    return %c0_i32, %c0_i32_0, %c0_i32_1 : i32, i32, i32
  }
  func.func @transform_15(%arg0: i32) -> (i32, i32) {
    %c0_i32 = arith.constant 0 : i32
    %c0_i32_0 = arith.constant 0 : i32
    %c0_i32_1 = arith.constant 0 : i32
    return %c0_i32, %c0_i32_0 : i32, i32
  }
  func.func @transform_16(%arg0: i32) -> (i32, i32) {
    %c0_i32 = arith.constant 0 : i32
    %c0_i32_0 = arith.constant 0 : i32
    %c0_i32_1 = arith.constant 0 : i32
    return %c0_i32, %c0_i32_0 : i32, i32
  }
  func.func @transform_17(%arg0: i32) -> (i32, i32) {
    %c0_i32 = arith.constant 0 : i32
    %c0_i32_0 = arith.constant 0 : i32
    %c0_i32_1 = arith.constant 0 : i32
    return %c0_i32, %c0_i32_0 : i32, i32
  }
}

</mosaic_0001>

<llo_original>
// kernel: transformer_encoder_forward.1
$region0: #{transformer_encoder_forward.1}
  #allocation0 [shape = 'u32[]', space=smem, size = 0x4, offset = 0x4, fixed_abs, tag = 'smem constant byte address 0x4 - core index']
  #allocation1 [shape = 'u32[144,128]{1,0:T(1,128)}', space=vmem, size = 0x12000, scoped, tag = 'internal scratch']
  %s0 = inlined_call_operand.vmem [shape: f32[32,48], index: 0, kind: input, shape index: {}]
  %s1 = inlined_call_operand.vmem [shape: f32[48,48], index: 1, kind: input, shape index: {}]
  %s2 = inlined_call_operand.vmem [shape: f32[1,48], index: 2, kind: input, shape index: {}]
  %s3 = inlined_call_operand.vmem [shape: f32[2,1,48], index: 3, kind: input, shape index: {}]
  %s4 = inlined_call_operand.vmem [shape: f32[2,1,48], index: 4, kind: input, shape index: {}]
  %s5 = inlined_call_operand.vmem [shape: f32[2,48,144], index: 5, kind: input, shape index: {}]
  %s6 = inlined_call_operand.vmem [shape: f32[2,1,144], index: 6, kind: input, shape index: {}]
  %s7 = inlined_call_operand.vmem [shape: f32[2,48,48], index: 7, kind: input, shape index: {}]
  %s8 = inlined_call_operand.vmem [shape: f32[2,1,48], index: 8, kind: input, shape index: {}]
  %s9 = inlined_call_operand.vmem [shape: f32[2,1,48], index: 9, kind: input, shape index: {}]
  %s10 = inlined_call_operand.vmem [shape: f32[2,1,48], index: 10, kind: input, shape index: {}]
  %s11 = inlined_call_operand.vmem [shape: f32[2,48,48], index: 11, kind: input, shape index: {}]
  %s12 = inlined_call_operand.vmem [shape: f32[2,1,48], index: 12, kind: input, shape index: {}]
  %s13 = inlined_call_operand.vmem [shape: f32[2,48,48], index: 13, kind: input, shape index: {}]
  %s14 = inlined_call_operand.vmem [shape: f32[2,1,48], index: 14, kind: input, shape index: {}]
  %s15 = inlined_call_operand.vmem [shape: f32[1,48], index: 15, kind: input, shape index: {}]
  %s16 = inlined_call_operand.vmem [shape: f32[1,48], index: 16, kind: input, shape index: {}]
  %s17 = inlined_call_operand.vmem [shape: f32[32,48], index: 17, kind: output, shape index: {}]
  %s18 = sld [smem:[#allocation0]]
  $region78: #{transformer_encoder_forward.1} parent=0
    _
  %s20 = ssub.s32 1, %s18
  %s21 = scalar_select 0, %s20, %s18
  // Predicated region
  $region2: #{transformer_encoder_forward.1} parent=0 // pred_check
    _
  $region3: #{transformer_encoder_forward.1} parent=0 // pred_check_branch
    %23 = sbr.rel (0) target = $region5
  $region4: #{transformer_encoder_forward.1} parent=0 // pred_region
    _
  $region5: #{transformer_encoder_forward.1} parent=0 // pred_fallthru
    _
  // Predicated region
  $region6: #{transformer_encoder_forward.1} parent=0 // pred_check
    _
  $region7: #{transformer_encoder_forward.1} parent=0 // pred_check_branch
    %25 = sbr.rel (0) target = $region9
  $region8: #{transformer_encoder_forward.1} parent=0 // pred_region
    _
  $region9: #{transformer_encoder_forward.1} parent=0 // pred_fallthru
    _
  // Predicated region
  $region10: #{transformer_encoder_forward.1} parent=0 // pred_check
    _
  $region11: #{transformer_encoder_forward.1} parent=0 // pred_check_branch
    %27 = sbr.rel (0) target = $region13
  $region12: #{transformer_encoder_forward.1} parent=0 // pred_region
    _
  $region13: #{transformer_encoder_forward.1} parent=0 // pred_fallthru
    _
  // Predicated region
  $region14: #{transformer_encoder_forward.1} parent=0 // pred_check
    _
  $region15: #{transformer_encoder_forward.1} parent=0 // pred_check_branch
    %29 = sbr.rel (0) target = $region17
  $region16: #{transformer_encoder_forward.1} parent=0 // pred_region
    _
  $region17: #{transformer_encoder_forward.1} parent=0 // pred_fallthru
    _
  // Predicated region
  $region18: #{transformer_encoder_forward.1} parent=0 // pred_check
    _
  $region19: #{transformer_encoder_forward.1} parent=0 // pred_check_branch
    %31 = sbr.rel (0) target = $region21
  $region20: #{transformer_encoder_forward.1} parent=0 // pred_region
    _
  $region21: #{transformer_encoder_forward.1} parent=0 // pred_fallthru
    _
  // Predicated region
  $region22: #{transformer_encoder_forward.1} parent=0 // pred_check
    _
  $region23: #{transformer_encoder_forward.1} parent=0 // pred_check_branch
    %33 = sbr.rel (0) target = $region25
  $region24: #{transformer_encoder_forward.1} parent=0 // pred_region
    _
  $region25: #{transformer_encoder_forward.1} parent=0 // pred_fallthru
    _
  // Predicated region
  $region26: #{transformer_encoder_forward.1} parent=0 // pred_check
    _
  $region27: #{transformer_encoder_forward.1} parent=0 // pred_check_branch
    %35 = sbr.rel (0) target = $region29
  $region28: #{transformer_encoder_forward.1} parent=0 // pred_region
    _
  $region29: #{transformer_encoder_forward.1} parent=0 // pred_fallthru
    _
  // Predicated region
  $region30: #{transformer_encoder_forward.1} parent=0 // pred_check
    _
  $region31: #{transformer_encoder_forward.1} parent=0 // pred_check_branch
    %37 = sbr.rel (0) target = $region33
  $region32: #{transformer_encoder_forward.1} parent=0 // pred_region
    _
  $region33: #{transformer_encoder_forward.1} parent=0 // pred_fallthru
    _
  // Predicated region
  $region34: #{transformer_encoder_forward.1} parent=0 // pred_check
    _
  $region35: #{transformer_encoder_forward.1} parent=0 // pred_check_branch
    %39 = sbr.rel (0) target = $region37
  $region36: #{transformer_encoder_forward.1} parent=0 // pred_region
    _
  $region37: #{transformer_encoder_forward.1} parent=0 // pred_fallthru
    _
  // Predicated region
  $region38: #{transformer_encoder_forward.1} parent=0 // pred_check
    _
  $region39: #{transformer_encoder_forward.1} parent=0 // pred_check_branch
    %41 = sbr.rel (0) target = $region41
  $region40: #{transformer_encoder_forward.1} parent=0 // pred_region
    _
  $region41: #{transformer_encoder_forward.1} parent=0 // pred_fallthru
    _
  // Predicated region
  $region42: #{transformer_encoder_forward.1} parent=0 // pred_check
    _
  $region43: #{transformer_encoder_forward.1} parent=0 // pred_check_branch
    %43 = sbr.rel (0) target = $region45
  $region44: #{transformer_encoder_forward.1} parent=0 // pred_region
    _
  $region45: #{transformer_encoder_forward.1} parent=0 // pred_fallthru
    _
  // Predicated region
  $region46: #{transformer_encoder_forward.1} parent=0 // pred_check
    _
  $region47: #{transformer_encoder_forward.1} parent=0 // pred_check_branch
    %45 = sbr.rel (0) target = $region49
  $region48: #{transformer_encoder_forward.1} parent=0 // pred_region
    _
  $region49: #{transformer_encoder_forward.1} parent=0 // pred_fallthru
    _
  // Predicated region
  $region50: #{transformer_encoder_forward.1} parent=0 // pred_check
    _
  $region51: #{transformer_encoder_forward.1} parent=0 // pred_check_branch
    %47 = sbr.rel (0) target = $region53
  $region52: #{transformer_encoder_forward.1} parent=0 // pred_region
    _
  $region53: #{transformer_encoder_forward.1} parent=0 // pred_fallthru
    _
  // Predicated region
  $region54: #{transformer_encoder_forward.1} parent=0 // pred_check
    _
  $region55: #{transformer_encoder_forward.1} parent=0 // pred_check_branch
    %49 = sbr.rel (0) target = $region57
  $region56: #{transformer_encoder_forward.1} parent=0 // pred_region
    _
  $region57: #{transformer_encoder_forward.1} parent=0 // pred_fallthru
    _
  // Predicated region
  $region58: #{transformer_encoder_forward.1} parent=0 // pred_check
    _
  $region59: #{transformer_encoder_forward.1} parent=0 // pred_check_branch
    %51 = sbr.rel (0) target = $region61
  $region60: #{transformer_encoder_forward.1} parent=0 // pred_region
    _
  $region61: #{transformer_encoder_forward.1} parent=0 // pred_fallthru
    _
  // Predicated region
  $region62: #{transformer_encoder_forward.1} parent=0 // pred_check
    _
  $region63: #{transformer_encoder_forward.1} parent=0 // pred_check_branch
    %53 = sbr.rel (0) target = $region65
  $region64: #{transformer_encoder_forward.1} parent=0 // pred_region
    _
  $region65: #{transformer_encoder_forward.1} parent=0 // pred_fallthru
    _
  // Predicated region
  $region66: #{transformer_encoder_forward.1} parent=0 // pred_check
    _
  $region67: #{transformer_encoder_forward.1} parent=0 // pred_check_branch
    %55 = sbr.rel (0) target = $region69
  $region68: #{transformer_encoder_forward.1} parent=0 // pred_region
    _
  $region69: #{transformer_encoder_forward.1} parent=0 // pred_fallthru
    _
  %v56 = vlaneseq
  %v57 = vshrl.u32 %v56, 7
  %v58 = vadd.s32 %v57, 8
  %v59 = vadd.s32 %v57, 16
  %v60 = vadd.s32 %v57, 24
  %v61 = vadd.s32 %v57, 32
  %v62 = vadd.s32 %v57, 40
  %v63 = vlaneseq
  %v64 = vand.u32 %v63, 127
  %v65 = vmul.u32 %v64, 12
  %vm66 = vcmp.ge.s32.totalorder %v57, %v65
  %vm67 = vcmp.ge.s32.totalorder %v58, %v65
  %vm68 = vcmp.ge.s32.totalorder %v59, %v65
  %vm69 = vcmp.ge.s32.totalorder %v60, %v65
  %vm70 = vcmp.ge.s32.totalorder %v61, %v65
  %vm71 = vcmp.ge.s32.totalorder %v62, %v65
  %v72 = vadd.s32 %v64, 1
  %v73 = vmul.u32 %v72, 12
  %vm74 = vcmp.lt.s32.totalorder %v57, %v73
  %vm75 = vcmp.lt.s32.totalorder %v58, %v73
  %vm76 = vcmp.lt.s32.totalorder %v59, %v73
  %vm77 = vcmp.lt.s32.totalorder %v60, %v73
  %vm78 = vcmp.lt.s32.totalorder %v61, %v73
  %vm79 = vcmp.lt.s32.totalorder %v62, %v73
  %vm80 = vmand %vm66, %vm74
  %vm81 = vmand %vm67, %vm75
  %vm82 = vmand %vm68, %vm76
  %vm83 = vmand %vm69, %vm77
  %vm84 = vmand %vm70, %vm78
  %vm85 = vmand %vm71, %vm79
  %v86 = vsel %vm80, 1.0, 0.0
  %v87 = vsel %vm81, 1.0, 0.0
  %v88 = vsel %vm82, 1.0, 0.0
  %v89 = vsel %vm83, 1.0, 0.0
  %v90 = vsel %vm84, 1.0, 0.0
  %v91 = vsel %vm85, 1.0, 0.0
  %v92 = vmul.u32 %v57, 12
  %vm93 = vcmp.ge.s32.totalorder %v64, %v92
  %v94 = vadd.s32 %v57, 1
  %v95 = vmul.u32 %v94, 12
  %vm96 = vcmp.lt.s32.totalorder %v64, %v95
  %vm97 = vmand %vm93, %vm96
  %v98 = vsel %vm97, 1.0, 0.0
  %v99 = vld [vmem:[%s0] sm:$0xff]
  %v100 = vld [vmem:[%s0 + $0x8] sm:$0xff]
  %v101 = vld [vmem:[%s0 + $0x10] sm:$0xff]
  %v102 = vld [vmem:[%s0 + $0x18] sm:$0xff]
  %v103 = vld [vmem:[%s1] sm:$0xff]
  %v104 = vld [vmem:[%s1 + $0x8] sm:$0xff]
  %v105 = vld [vmem:[%s1 + $0x10] sm:$0xff]
  %v106 = vld [vmem:[%s1 + $0x18] sm:$0xff]
  %v107 = vld [vmem:[%s1 + $0x20] sm:$0xff]
  %v108 = vld [vmem:[%s1 + $0x28] sm:$0xff]
  %v109 = vld [vmem:[%s2] sm:$0x1]
  %v111 = vlaneseq
  %v112 = vshrl.u32 %v111, 7
  %v113 = vsub.s32 0, %v112
  %v114 = vrot.slane %v109, %v113
  %vm116 = vcmask 392192
  %v118 = vsel %vm116, %v99, 0
  %v121 = vsel %vm116, %v100, 0
  %v124 = vsel %vm116, %v101, 0
  %v127 = vsel %vm116, %v102, 0
  %129 = vmatprep.subr.mxu0 0.0
  %130 = vmatpush1.msra.mxu0 0.0
  %131 = vmatprep.subr.mxu0 0.0
  %132 = vmatpush1.msra.mxu0 0.0
  %133 = vmatprep.subr.mxu0 0.0
  %134 = vmatpush1.msra.mxu0 0.0
  %135 = vmatprep.subr.mxu0 0.0
  %136 = vmatpush1.msra.mxu0 0.0
  %137 = vmatprep.subr.mxu0 0.0
  %138 = vmatpush1.msra.mxu0 0.0
  %139 = vmatprep.subr.mxu0 0.0
  %140 = vmatpush1.msra.mxu0 0.0
  %141 = vmatprep.subr.mxu0 0.0
  %142 = vmatpush1.msra.mxu0 0.0
  %143 = vmatprep.subr.mxu0 0.0
  %144 = vmatpush1.msra.mxu0 0.0
  %145 = vmatprep.subr.mxu0 0.0
  %146 = vmatpush1.msra.mxu0 0.0
  %147 = vmatprep.subr.mxu0 0.0
  %148 = vmatpush1.msra.mxu0 0.0
  %149 = vmatprep.subr.mxu0 0.0
  %150 = vmatpush1.msra.mxu0 %v108
  %151 = vmatprep.subr.mxu0 0.0
  %152 = vmatpush1.msra.mxu0 %v107
  %153 = vmatprep.subr.mxu0 0.0
  %154 = vmatpush1.msra.mxu0 %v106
  %155 = vmatprep.subr.mxu0 0.0
  %156 = vmatpush1.msra.mxu0 %v105
  %157 = vmatprep.subr.mxu0 0.0
  %158 = vmatpush1.msra.mxu0 %v104
  %159 = vmatprep.subr.mxu0 0.0
  %160 = vmatpush1.msra.mxu0 %v103
  %161 = vmatprep.subr.mxu0 0.0
  %162 = vmatpush2.msra.mxu0 0.0
  %163 = vmatprep.subr.mxu0 0.0
  %164 = vmatpush2.msra.mxu0 0.0
  %165 = vmatprep.subr.mxu0 0.0
  %166 = vmatpush2.msra.mxu0 0.0
  %167 = vmatprep.subr.mxu0 0.0
  %168 = vmatpush2.msra.mxu0 0.0
  %169 = vmatprep.subr.mxu0 0.0
  %170 = vmatpush2.msra.mxu0 0.0
  %171 = vmatprep.subr.mxu0 0.0
  %172 = vmatpush2.msra.mxu0 0.0
  %173 = vmatprep.subr.mxu0 0.0
  %174 = vmatpush2.msra.mxu0 0.0
  %175 = vmatprep.subr.mxu0 0.0
  %176 = vmatpush2.msra.mxu0 0.0
  %177 = vmatprep.subr.mxu0 0.0
  %178 = vmatpush2.msra.mxu0 0.0
  %179 = vmatprep.subr.mxu0 0.0
  %180 = vmatpush2.msra.mxu0 0.0
  %181 = vmatprep.subr.mxu0 0.0
  %182 = vmatpush2.msra.mxu0 0.0
  %183 = vmatprep.subr.mxu0 0.0
  %184 = vmatpush2.msra.mxu0 0.0
  %185 = vmatprep.subr.mxu0 0.0
  %186 = vmatpush2.msra.mxu0 0.0
  %187 = vmatprep.subr.mxu0 0.0
  %188 = vmatpush2.msra.mxu0 0.0
  %189 = vmatprep.subr.mxu0 0.0
  %190 = vmatpush2.msra.mxu0 0.0
  %191 = vmatprep.subr.mxu0 0.0
  %192 = vmatpush2.msra.mxu0 0.0
  %193 = vmatprep.mubr.f32.mxu0 0.0
  %194 = vmatmul.mubr.f32.gmra.mxu0 %v118
  %v195 = vpop.f32.mrf.mxu0
  %v196 = vadd.f32 %v114, %v195
  %v197 = vpop.f32.mrf.mxu0
  %198 = vmatprep.mubr.f32.mxu0 0.0
  %199 = vmatmul.mubr.f32.gmra.mxu0 %v121
  %v200 = vpop.f32.mrf.mxu0
  %v201 = vadd.f32 %v114, %v200
  %v202 = vpop.f32.mrf.mxu0
  %203 = vmatprep.mubr.f32.mxu0 0.0
  %204 = vmatmul.mubr.f32.gmra.mxu0 %v124
  %v205 = vpop.f32.mrf.mxu0
  %v206 = vadd.f32 %v114, %v205
  %v207 = vpop.f32.mrf.mxu0
  %208 = vmatprep.mubr.f32.mxu0 0.0
  %209 = vmatmul.mubr.f32.gmra.mxu0 %v127
  %v210 = vpop.f32.mrf.mxu0
  %v211 = vadd.f32 %v114, %v210
  %v212 = vpop.f32.mrf.mxu0
  %213 = vdwg.mxu0
  %v214 = vld [vmem:[%s3] sm:$0x1]
  %v215 = vld [vmem:[%s4] sm:$0x1]
  %v216 = vsel %vm116, %v196, 0.0
  %217 = vadd.xlane.f32.xlu0 %v216
  %v218 = vpop.xlane.xlu0 %217
  %v219 = vsel %vm116, %v201, 0.0
  %220 = vadd.xlane.f32.xlu0 %v219
  %v221 = vpop.xlane.xlu0 %220
  %v222 = vsel %vm116, %v206, 0.0
  %223 = vadd.xlane.f32.xlu0 %v222
  %v224 = vpop.xlane.xlu0 %223
  %v225 = vsel %vm116, %v211, 0.0
  %226 = vadd.xlane.f32.xlu0 %v225
  %v227 = vpop.xlane.xlu0 %226
  %v228 = vrcp.pop 48.0
  %v229 = vmul.f32 %v218, %v228
  %v230 = vmul.f32 %v221, %v228
  %v231 = vmul.f32 %v224, %v228
  %v232 = vmul.f32 %v227, %v228
  %v233 = vsub.f32 %v196, %v229
  %v234 = vsub.f32 %v201, %v230
  %v235 = vsub.f32 %v206, %v231
  %v236 = vsub.f32 %v211, %v232
  %v237 = vmul.f32 %v233, %v233
  %v238 = vmul.f32 %v234, %v234
  %v239 = vmul.f32 %v235, %v235
  %v240 = vmul.f32 %v236, %v236
  %v241 = vsel %vm116, %v237, 0.0
  %242 = vadd.xlane.f32.xlu0 %v241
  %v243 = vpop.xlane.xlu0 %242
  %v244 = vsel %vm116, %v238, 0.0
  %245 = vadd.xlane.f32.xlu0 %v244
  %v246 = vpop.xlane.xlu0 %245
  %v247 = vsel %vm116, %v239, 0.0
  %248 = vadd.xlane.f32.xlu0 %v247
  %v249 = vpop.xlane.xlu0 %248
  %v250 = vsel %vm116, %v240, 0.0
  %251 = vadd.xlane.f32.xlu0 %v250
  %v252 = vpop.xlane.xlu0 %251
  %v253 = vmul.f32 %v243, %v228
  %v254 = vmul.f32 %v246, %v228
  %v255 = vmul.f32 %v249, %v228
  %v256 = vmul.f32 %v252, %v228
  %v257 = vadd.f32 %v253, 1e-05
  %v258 = vadd.f32 %v254, 1e-05
  %v259 = vadd.f32 %v255, 1e-05
  %v260 = vadd.f32 %v256, 1e-05
  %v261 = vrsqrt.pop %v257
  %v262 = vrsqrt.pop %v258
  %v263 = vrsqrt.pop %v259
  %v264 = vrsqrt.pop %v260
  %v265 = vmul.f32 %v233, %v261
  %v266 = vmul.f32 %v234, %v262
  %v267 = vmul.f32 %v235, %v263
  %v268 = vmul.f32 %v236, %v264
  %v270 = vlaneseq
  %v271 = vshrl.u32 %v270, 7
  %v272 = vsub.s32 0, %v271
  %v273 = vrot.slane %v214, %v272
  %v275 = vmul.f32 %v265, %v273
  %v276 = vmul.f32 %v266, %v273
  %v277 = vmul.f32 %v267, %v273
  %v278 = vmul.f32 %v268, %v273
  %v280 = vlaneseq
  %v281 = vshrl.u32 %v280, 7
  %v282 = vsub.s32 0, %v281
  %v283 = vrot.slane %v215, %v282
  %v285 = vadd.f32 %v275, %v283
  %v286 = vadd.f32 %v276, %v283
  %v287 = vadd.f32 %v277, %v283
  %v288 = vadd.f32 %v278, %v283
  %v289 = vld [vmem:[%s5] sm:$0xff]
  %v290 = vld [vmem:[%s5 + $0x8] sm:$0xff]
  %v291 = vld [vmem:[%s5 + $0x10] sm:$0xff]
  %v292 = vld [vmem:[%s5 + $0x18] sm:$0xff]
  %v293 = vld [vmem:[%s5 + $0x20] sm:$0xff]
  %v294 = vld [vmem:[%s5 + $0x28] sm:$0xff]
  %v295 = vld [vmem:[%s5 + $0x30] sm:$0xff]
  %v296 = vld [vmem:[%s5 + $0x38] sm:$0xff]
  %v297 = vld [vmem:[%s5 + $0x40] sm:$0xff]
  %v298 = vld [vmem:[%s5 + $0x48] sm:$0xff]
  %v299 = vld [vmem:[%s5 + $0x50] sm:$0xff]
  %v300 = vld [vmem:[%s5 + $0x58] sm:$0xff]
  %v301 = vld [vmem:[%s6] sm:$0x3]
  %v303 = vlaneseq
  %v304 = vshrl.u32 %v303, 7
  %v305 = vsub.s32 0, %v304
  %v306 = vrot.slane %v301, %v305
  %v307 = vlaneseq
  %v308 = vshrl.u32 %v307, 7
  %v309 = vsub.s32 1, %v308
  %v310 = vrot.slane %v301, %v309
  %v314 = vsel %vm116, %v285, 0
  %v317 = vsel %vm116, %v286, 0
  %v320 = vsel %vm116, %v287, 0
  %v323 = vsel %vm116, %v288, 0
  %325 = vmatprep.subr.mxu0 0.0
  %326 = vmatpush1.msra.mxu0 0.0
  %327 = vmatprep.subr.mxu0 0.0
  %328 = vmatpush1.msra.mxu0 0.0
  %329 = vmatprep.subr.mxu0 0.0
  %330 = vmatpush1.msra.mxu0 0.0
  %331 = vmatprep.subr.mxu0 0.0
  %332 = vmatpush1.msra.mxu0 0.0
  %333 = vmatprep.subr.mxu0 0.0
  %334 = vmatpush1.msra.mxu0 0.0
  %335 = vmatprep.subr.mxu0 0.0
  %336 = vmatpush1.msra.mxu0 0.0
  %337 = vmatprep.subr.mxu0 0.0
  %338 = vmatpush1.msra.mxu0 0.0
  %339 = vmatprep.subr.mxu0 0.0
  %340 = vmatpush1.msra.mxu0 0.0
  %341 = vmatprep.subr.mxu0 0.0
  %342 = vmatpush1.msra.mxu0 0.0
  %343 = vmatprep.subr.mxu0 0.0
  %344 = vmatpush1.msra.mxu0 0.0
  %345 = vmatprep.subr.mxu0 %v300
  %346 = vmatpush1.msra.mxu0 %v299
  %347 = vmatprep.subr.mxu0 %v298
  %348 = vmatpush1.msra.mxu0 %v297
  %349 = vmatprep.subr.mxu0 %v296
  %350 = vmatpush1.msra.mxu0 %v295
  %351 = vmatprep.subr.mxu0 %v294
  %352 = vmatpush1.msra.mxu0 %v293
  %353 = vmatprep.subr.mxu0 %v292
  %354 = vmatpush1.msra.mxu0 %v291
  %355 = vmatprep.subr.mxu0 %v290
  %356 = vmatpush1.msra.mxu0 %v289
  %357 = vmatprep.subr.mxu0 0.0
  %358 = vmatpush2.msra.mxu0 0.0
  %359 = vmatprep.subr.mxu0 0.0
  %360 = vmatpush2.msra.mxu0 0.0
  %361 = vmatprep.subr.mxu0 0.0
  %362 = vmatpush2.msra.mxu0 0.0
  %363 = vmatprep.subr.mxu0 0.0
  %364 = vmatpush2.msra.mxu0 0.0
  %365 = vmatprep.subr.mxu0 0.0
  %366 = vmatpush2.msra.mxu0 0.0
  %367 = vmatprep.subr.mxu0 0.0
  %368 = vmatpush2.msra.mxu0 0.0
  %369 = vmatprep.subr.mxu0 0.0
  %370 = vmatpush2.msra.mxu0 0.0
  %371 = vmatprep.subr.mxu0 0.0
  %372 = vmatpush2.msra.mxu0 0.0
  %373 = vmatprep.subr.mxu0 0.0
  %374 = vmatpush2.msra.mxu0 0.0
  %375 = vmatprep.subr.mxu0 0.0
  %376 = vmatpush2.msra.mxu0 0.0
  %377 = vmatprep.subr.mxu0 0.0
  %378 = vmatpush2.msra.mxu0 0.0
  %379 = vmatprep.subr.mxu0 0.0
  %380 = vmatpush2.msra.mxu0 0.0
  %381 = vmatprep.subr.mxu0 0.0
  %382 = vmatpush2.msra.mxu0 0.0
  %383 = vmatprep.subr.mxu0 0.0
  %384 = vmatpush2.msra.mxu0 0.0
  %385 = vmatprep.subr.mxu0 0.0
  %386 = vmatpush2.msra.mxu0 0.0
  %387 = vmatprep.subr.mxu0 0.0
  %388 = vmatpush2.msra.mxu0 0.0
  %389 = vmatprep.mubr.f32.mxu0 0.0
  %390 = vmatmul.mubr.f32.gmra.mxu0 %v314
  %v391 = vpop.f32.mrf.mxu0
  %v392 = vadd.f32 %v306, %v391
  %v393 = vpop.f32.mrf.mxu0
  %v394 = vadd.f32 %v310, %v393
  %395 = vmatprep.mubr.f32.mxu0 0.0
  %396 = vmatmul.mubr.f32.gmra.mxu0 %v317
  %v397 = vpop.f32.mrf.mxu0
  %v398 = vadd.f32 %v306, %v397
  %v399 = vpop.f32.mrf.mxu0
  %v400 = vadd.f32 %v310, %v399
  %401 = vmatprep.mubr.f32.mxu0 0.0
  %402 = vmatmul.mubr.f32.gmra.mxu0 %v320
  %v403 = vpop.f32.mrf.mxu0
  %v404 = vadd.f32 %v306, %v403
  %v405 = vpop.f32.mrf.mxu0
  %v406 = vadd.f32 %v310, %v405
  %407 = vmatprep.mubr.f32.mxu0 0.0
  %408 = vmatmul.mubr.f32.gmra.mxu0 %v323
  %v409 = vpop.f32.mrf.mxu0
  %v410 = vadd.f32 %v306, %v409
  %v411 = vpop.f32.mrf.mxu0
  %v412 = vadd.f32 %v310, %v411
  %413 = vdwg.mxu0
  %v414 = vmul.f32 %v392, 0.28867513
  %v415 = vmul.f32 %v398, 0.28867513
  %v416 = vmul.f32 %v404, 0.28867513
  %v417 = vmul.f32 %v410, 0.28867513
  %422 = vrot.lane.b32.xlu0 %v392, 80
  %v423 = vpop.permute.xlu0 %422
  %424 = vrot.lane.b32.xlu0 %v398, 80
  %v425 = vpop.permute.xlu0 %424
  %426 = vrot.lane.b32.xlu0 %v404, 80
  %v427 = vpop.permute.xlu0 %426
  %428 = vrot.lane.b32.xlu0 %v410, 80
  %v429 = vpop.permute.xlu0 %428
  %v434 = vmul.f32 %v414, %v423
  %v435 = vmul.f32 %v415, %v425
  %v436 = vmul.f32 %v416, %v427
  %v437 = vmul.f32 %v417, %v429
  %v439 = vsel %vm116, %v434, 0
  %v442 = vsel %vm116, %v435, 0
  %v445 = vsel %vm116, %v436, 0
  %v448 = vsel %vm116, %v437, 0
  %450 = vmatprep.subr.mxu0 0.0
  %451 = vmatpush1.msra.mxu0 0.0
  %452 = vmatprep.subr.mxu0 0.0
  %453 = vmatpush1.msra.mxu0 0.0
  %454 = vmatprep.subr.mxu0 0.0
  %455 = vmatpush1.msra.mxu0 0.0
  %456 = vmatprep.subr.mxu0 0.0
  %457 = vmatpush1.msra.mxu0 0.0
  %458 = vmatprep.subr.mxu0 0.0
  %459 = vmatpush1.msra.mxu0 0.0
  %460 = vmatprep.subr.mxu0 0.0
  %461 = vmatpush1.msra.mxu0 0.0
  %462 = vmatprep.subr.mxu0 0.0
  %463 = vmatpush1.msra.mxu0 0.0
  %464 = vmatprep.subr.mxu0 0.0
  %465 = vmatpush1.msra.mxu0 0.0
  %466 = vmatprep.subr.mxu0 0.0
  %467 = vmatpush1.msra.mxu0 0.0
  %468 = vmatprep.subr.mxu0 0.0
  %469 = vmatpush1.msra.mxu0 0.0
  %470 = vmatprep.subr.mxu0 0.0
  %471 = vmatpush1.msra.mxu0 %v91
  %472 = vmatprep.subr.mxu0 0.0
  %473 = vmatpush1.msra.mxu0 %v90
  %474 = vmatprep.subr.mxu0 0.0
  %475 = vmatpush1.msra.mxu0 %v89
  %476 = vmatprep.subr.mxu0 0.0
  %477 = vmatpush1.msra.mxu0 %v88
  %478 = vmatprep.subr.mxu0 0.0
  %479 = vmatpush1.msra.mxu0 %v87
  %480 = vmatprep.subr.mxu0 0.0
  %481 = vmatpush1.msra.mxu0 %v86
  %482 = vmatprep.subr.mxu0 0.0
  %483 = vmatpush2.msra.mxu0 0.0
  %484 = vmatprep.subr.mxu0 0.0
  %485 = vmatpush2.msra.mxu0 0.0
  %486 = vmatprep.subr.mxu0 0.0
  %487 = vmatpush2.msra.mxu0 0.0
  %488 = vmatprep.subr.mxu0 0.0
  %489 = vmatpush2.msra.mxu0 0.0
  %490 = vmatprep.subr.mxu0 0.0
  %491 = vmatpush2.msra.mxu0 0.0
  %492 = vmatprep.subr.mxu0 0.0
  %493 = vmatpush2.msra.mxu0 0.0
  %494 = vmatprep.subr.mxu0 0.0
  %495 = vmatpush2.msra.mxu0 0.0
  %496 = vmatprep.subr.mxu0 0.0
  %497 = vmatpush2.msra.mxu0 0.0
  %498 = vmatprep.subr.mxu0 0.0
  %499 = vmatpush2.msra.mxu0 0.0
  %500 = vmatprep.subr.mxu0 0.0
  %501 = vmatpush2.msra.mxu0 0.0
  %502 = vmatprep.subr.mxu0 0.0
  %503 = vmatpush2.msra.mxu0 0.0
  %504 = vmatprep.subr.mxu0 0.0
  %505 = vmatpush2.msra.mxu0 0.0
  %506 = vmatprep.subr.mxu0 0.0
  %507 = vmatpush2.msra.mxu0 0.0
  %508 = vmatprep.subr.mxu0 0.0
  %509 = vmatpush2.msra.mxu0 0.0
  %510 = vmatprep.subr.mxu0 0.0
  %511 = vmatpush2.msra.mxu0 0.0
  %512 = vmatprep.subr.mxu0 0.0
  %513 = vmatpush2.msra.mxu0 0.0
  %514 = vmatprep.mubr.f32.mxu0 0.0
  %515 = vmatmul.mubr.f32.gmra.mxu0 %v439
  %v516 = vpop.f32.mrf.mxu0
  %v517 = vadd.f32 0.0, %v516
  %v518 = vpop.f32.mrf.mxu0
  %519 = vmatprep.mubr.f32.mxu0 0.0
  %520 = vmatmul.mubr.f32.gmra.mxu0 %v442
  %v521 = vpop.f32.mrf.mxu0
  %v522 = vadd.f32 0.0, %v521
  %v523 = vpop.f32.mrf.mxu0
  %524 = vmatprep.mubr.f32.mxu0 0.0
  %525 = vmatmul.mubr.f32.gmra.mxu0 %v445
  %v526 = vpop.f32.mrf.mxu0
  %v527 = vadd.f32 0.0, %v526
  %v528 = vpop.f32.mrf.mxu0
  %529 = vmatprep.mubr.f32.mxu0 0.0
  %530 = vmatmul.mubr.f32.gmra.mxu0 %v448
  %v531 = vpop.f32.mrf.mxu0
  %v532 = vadd.f32 0.0, %v531
  %v533 = vpop.f32.mrf.mxu0
  %534 = vdwg.mxu0
  %v535 = vmul.f32 %v414, %v427
  %v536 = vmul.f32 %v415, %v429
  %v537 = vmul.f32 %v416, %v423
  %v538 = vmul.f32 %v417, %v425
  %v540 = vsel %vm116, %v535, 0
  %v543 = vsel %vm116, %v536, 0
  %v546 = vsel %vm116, %v537, 0
  %v549 = vsel %vm116, %v538, 0
  %551 = vmatprep.subr.mxu0 0.0
  %552 = vmatpush1.msra.mxu0 0.0
  %553 = vmatprep.subr.mxu0 0.0
  %554 = vmatpush1.msra.mxu0 0.0
  %555 = vmatprep.subr.mxu0 0.0
  %556 = vmatpush1.msra.mxu0 0.0
  %557 = vmatprep.subr.mxu0 0.0
  %558 = vmatpush1.msra.mxu0 0.0
  %559 = vmatprep.subr.mxu0 0.0
  %560 = vmatpush1.msra.mxu0 0.0
  %561 = vmatprep.subr.mxu0 0.0
  %562 = vmatpush1.msra.mxu0 0.0
  %563 = vmatprep.subr.mxu0 0.0
  %564 = vmatpush1.msra.mxu0 0.0
  %565 = vmatprep.subr.mxu0 0.0
  %566 = vmatpush1.msra.mxu0 0.0
  %567 = vmatprep.subr.mxu0 0.0
  %568 = vmatpush1.msra.mxu0 0.0
  %569 = vmatprep.subr.mxu0 0.0
  %570 = vmatpush1.msra.mxu0 0.0
  %571 = vmatprep.subr.mxu0 0.0
  %572 = vmatpush1.msra.mxu0 %v91
  %573 = vmatprep.subr.mxu0 0.0
  %574 = vmatpush1.msra.mxu0 %v90
  %575 = vmatprep.subr.mxu0 0.0
  %576 = vmatpush1.msra.mxu0 %v89
  %577 = vmatprep.subr.mxu0 0.0
  %578 = vmatpush1.msra.mxu0 %v88
  %579 = vmatprep.subr.mxu0 0.0
  %580 = vmatpush1.msra.mxu0 %v87
  %581 = vmatprep.subr.mxu0 0.0
  %582 = vmatpush1.msra.mxu0 %v86
  %583 = vmatprep.subr.mxu0 0.0
  %584 = vmatpush2.msra.mxu0 0.0
  %585 = vmatprep.subr.mxu0 0.0
  %586 = vmatpush2.msra.mxu0 0.0
  %587 = vmatprep.subr.mxu0 0.0
  %588 = vmatpush2.msra.mxu0 0.0
  %589 = vmatprep.subr.mxu0 0.0
  %590 = vmatpush2.msra.mxu0 0.0
  %591 = vmatprep.subr.mxu0 0.0
  %592 = vmatpush2.msra.mxu0 0.0
  %593 = vmatprep.subr.mxu0 0.0
  %594 = vmatpush2.msra.mxu0 0.0
  %595 = vmatprep.subr.mxu0 0.0
  %596 = vmatpush2.msra.mxu0 0.0
  %597 = vmatprep.subr.mxu0 0.0
  %598 = vmatpush2.msra.mxu0 0.0
  %599 = vmatprep.subr.mxu0 0.0
  %600 = vmatpush2.msra.mxu0 0.0
  %601 = vmatprep.subr.mxu0 0.0
  %602 = vmatpush2.msra.mxu0 0.0
  %603 = vmatprep.subr.mxu0 0.0
  %604 = vmatpush2.msra.mxu0 0.0
  %605 = vmatprep.subr.mxu0 0.0
  %606 = vmatpush2.msra.mxu0 0.0
  %607 = vmatprep.subr.mxu0 0.0
  %608 = vmatpush2.msra.mxu0 0.0
  %609 = vmatprep.subr.mxu0 0.0
  %610 = vmatpush2.msra.mxu0 0.0
  %611 = vmatprep.subr.mxu0 0.0
  %612 = vmatpush2.msra.mxu0 0.0
  %613 = vmatprep.subr.mxu0 0.0
  %614 = vmatpush2.msra.mxu0 0.0
  %615 = vmatprep.mubr.f32.mxu0 0.0
  %616 = vmatmul.mubr.f32.gmra.mxu0 %v540
  %v617 = vpop.f32.mrf.mxu0
  %v618 = vadd.f32 0.0, %v617
  %v619 = vpop.f32.mrf.mxu0
  %620 = vmatprep.mubr.f32.mxu0 0.0
  %621 = vmatmul.mubr.f32.gmra.mxu0 %v543
  %v622 = vpop.f32.mrf.mxu0
  %v623 = vadd.f32 0.0, %v622
  %v624 = vpop.f32.mrf.mxu0
  %625 = vmatprep.mubr.f32.mxu0 0.0
  %626 = vmatmul.mubr.f32.gmra.mxu0 %v546
  %v627 = vpop.f32.mrf.mxu0
  %v628 = vadd.f32 0.0, %v627
  %v629 = vpop.f32.mrf.mxu0
  %630 = vmatprep.mubr.f32.mxu0 0.0
  %631 = vmatmul.mubr.f32.gmra.mxu0 %v549
  %v632 = vpop.f32.mrf.mxu0
  %v633 = vadd.f32 0.0, %v632
  %v634 = vpop.f32.mrf.mxu0
  %635 = vdwg.mxu0
  %v636 = vmax.f32 %v517, %v618
  %v637 = vmax.f32 %v522, %v623
  %v638 = vmax.f32 %v527, %v628
  %v639 = vmax.f32 %v532, %v633
  %v640 = vsub.f32 %v517, %v636
  %v641 = vsub.f32 %v522, %v637
  %v642 = vsub.f32 %v527, %v638
  %v643 = vsub.f32 %v532, %v639
  %v644 = vmul.f32 %v640, 1.442695
  %v645 = vpow.pop %v644
  %v646 = vmul.f32 %v641, 1.442695
  %v647 = vpow.pop %v646
  %v648 = vmul.f32 %v642, 1.442695
  %v649 = vpow.pop %v648
  %v650 = vmul.f32 %v643, 1.442695
  %v651 = vpow.pop %v650
  %v652 = vsub.f32 %v618, %v636
  %v653 = vsub.f32 %v623, %v637
  %v654 = vsub.f32 %v628, %v638
  %v655 = vsub.f32 %v633, %v639
  %v656 = vmul.f32 %v652, 1.442695
  %v657 = vpow.pop %v656
  %v658 = vmul.f32 %v653, 1.442695
  %v659 = vpow.pop %v658
  %v660 = vmul.f32 %v654, 1.442695
  %v661 = vpow.pop %v660
  %v662 = vmul.f32 %v655, 1.442695
  %v663 = vpow.pop %v662
  %v664 = vadd.f32 %v645, %v657
  %v665 = vadd.f32 %v647, %v659
  %v666 = vadd.f32 %v649, %v661
  %v667 = vadd.f32 %v651, %v663
  %v668 = vrcp.pop %v664
  %v669 = vrcp.pop %v665
  %v670 = vrcp.pop %v666
  %v671 = vrcp.pop %v667
  %v672 = vmul.f32 %v645, %v668
  %v673 = vmul.f32 %v647, %v669
  %v674 = vmul.f32 %v649, %v670
  %v675 = vmul.f32 %v651, %v671
  %vm676 = vcmask 31744
  %v678 = vsel %vm676, %v672, 0
  %v681 = vsel %vm676, %v673, 0
  %v684 = vsel %vm676, %v674, 0
  %v687 = vsel %vm676, %v675, 0
  %vm689 = vcmask 1043456
  %v691 = vsel %vm689, %v98, 0
  %693 = vmatprep.subr.mxu0 0.0
  %694 = vmatpush1.msra.mxu0 0.0
  %695 = vmatprep.subr.mxu0 0.0
  %696 = vmatpush1.msra.mxu0 0.0
  %697 = vmatprep.subr.mxu0 0.0
  %698 = vmatpush1.msra.mxu0 0.0
  %699 = vmatprep.subr.mxu0 0.0
  %700 = vmatpush1.msra.mxu0 0.0
  %701 = vmatprep.subr.mxu0 0.0
  %702 = vmatpush1.msra.mxu0 0.0
  %703 = vmatprep.subr.mxu0 0.0
  %704 = vmatpush1.msra.mxu0 0.0
  %705 = vmatprep.subr.mxu0 0.0
  %706 = vmatpush1.msra.mxu0 0.0
  %707 = vmatprep.subr.mxu0 0.0
  %708 = vmatpush1.msra.mxu0 0.0
  %709 = vmatprep.subr.mxu0 0.0
  %710 = vmatpush1.msra.mxu0 0.0
  %711 = vmatprep.subr.mxu0 0.0
  %712 = vmatpush1.msra.mxu0 0.0
  %713 = vmatprep.subr.mxu0 0.0
  %714 = vmatpush1.msra.mxu0 0.0
  %715 = vmatprep.subr.mxu0 0.0
  %716 = vmatpush1.msra.mxu0 0.0
  %717 = vmatprep.subr.mxu0 0.0
  %718 = vmatpush1.msra.mxu0 0.0
  %719 = vmatprep.subr.mxu0 0.0
  %720 = vmatpush1.msra.mxu0 0.0
  %721 = vmatprep.subr.mxu0 0.0
  %722 = vmatpush1.msra.mxu0 0.0
  %723 = vmatprep.subr.mxu0 0.0
  %724 = vmatpush1.msra.mxu0 %v691
  %725 = vmatprep.subr.mxu0 0.0
  %726 = vmatpush2.msra.mxu0 0.0
  %727 = vmatprep.subr.mxu0 0.0
  %728 = vmatpush2.msra.mxu0 0.0
  %729 = vmatprep.subr.mxu0 0.0
  %730 = vmatpush2.msra.mxu0 0.0
  %731 = vmatprep.subr.mxu0 0.0
  %732 = vmatpush2.msra.mxu0 0.0
  %733 = vmatprep.subr.mxu0 0.0
  %734 = vmatpush2.msra.mxu0 0.0
  %735 = vmatprep.subr.mxu0 0.0
  %736 = vmatpush2.msra.mxu0 0.0
  %737 = vmatprep.subr.mxu0 0.0
  %738 = vmatpush2.msra.mxu0 0.0
  %739 = vmatprep.subr.mxu0 0.0
  %740 = vmatpush2.msra.mxu0 0.0
  %741 = vmatprep.subr.mxu0 0.0
  %742 = vmatpush2.msra.mxu0 0.0
  %743 = vmatprep.subr.mxu0 0.0
  %744 = vmatpush2.msra.mxu0 0.0
  %745 = vmatprep.subr.mxu0 0.0
  %746 = vmatpush2.msra.mxu0 0.0
  %747 = vmatprep.subr.mxu0 0.0
  %748 = vmatpush2.msra.mxu0 0.0
  %749 = vmatprep.subr.mxu0 0.0
  %750 = vmatpush2.msra.mxu0 0.0
  %751 = vmatprep.subr.mxu0 0.0
  %752 = vmatpush2.msra.mxu0 0.0
  %753 = vmatprep.subr.mxu0 0.0
  %754 = vmatpush2.msra.mxu0 0.0
  %755 = vmatprep.subr.mxu0 0.0
  %756 = vmatpush2.msra.mxu0 0.0
  %757 = vmatprep.mubr.f32.mxu0 0.0
  %758 = vmatmul.mubr.f32.gmra.mxu0 %v678
  %v759 = vpop.f32.mrf.mxu0
  %v760 = vadd.f32 0.0, %v759
  %v761 = vpop.f32.mrf.mxu0
  %762 = vmatprep.mubr.f32.mxu0 0.0
  %763 = vmatmul.mubr.f32.gmra.mxu0 %v681
  %v764 = vpop.f32.mrf.mxu0
  %v765 = vadd.f32 0.0, %v764
  %v766 = vpop.f32.mrf.mxu0
  %767 = vmatprep.mubr.f32.mxu0 0.0
  %768 = vmatmul.mubr.f32.gmra.mxu0 %v684
  %v769 = vpop.f32.mrf.mxu0
  %v770 = vadd.f32 0.0, %v769
  %v771 = vpop.f32.mrf.mxu0
  %772 = vmatprep.mubr.f32.mxu0 0.0
  %773 = vmatmul.mubr.f32.gmra.mxu0 %v687
  %v774 = vpop.f32.mrf.mxu0
  %v775 = vadd.f32 0.0, %v774
  %v776 = vpop.f32.mrf.mxu0
  %777 = vdwg.mxu0
  %782 = vrot.lane.b32.xlu0 %v392, 32
  %v783 = vpop.permute.xlu0 %782
  %784 = vrot.lane.b32.xlu0 %v394, 32
  %v785 = vpop.permute.xlu0 %784
  %786 = vrot.lane.b32.xlu0 %v398, 32
  %v787 = vpop.permute.xlu0 %786
  %788 = vrot.lane.b32.xlu0 %v400, 32
  %v789 = vpop.permute.xlu0 %788
  %790 = vrot.lane.b32.xlu0 %v404, 32
  %v791 = vpop.permute.xlu0 %790
  %792 = vrot.lane.b32.xlu0 %v406, 32
  %v793 = vpop.permute.xlu0 %792
  %794 = vrot.lane.b32.xlu0 %v410, 32
  %v795 = vpop.permute.xlu0 %794
  %796 = vrot.lane.b32.xlu0 %v412, 32
  %v797 = vpop.permute.xlu0 %796
  %vm798 = vcmask 261120
  %v799 = vsel %vm798, %v783, %v785
  %v800 = vsel %vm798, %v787, %v789
  %v801 = vsel %vm798, %v791, %v793
  %v802 = vsel %vm798, %v795, %v797
  %v807 = vmul.f32 %v760, %v799
  %v808 = vmul.f32 %v765, %v800
  %v809 = vmul.f32 %v770, %v801
  %v810 = vmul.f32 %v775, %v802
  %v811 = vmul.f32 %v657, %v668
  %v812 = vmul.f32 %v659, %v669
  %v813 = vmul.f32 %v661, %v670
  %v814 = vmul.f32 %v663, %v671
  %v816 = vsel %vm676, %v811, 0
  %v819 = vsel %vm676, %v812, 0
  %v822 = vsel %vm676, %v813, 0
  %v825 = vsel %vm676, %v814, 0
  %827 = vmatprep.subr.mxu0 0.0
  %828 = vmatpush1.msra.mxu0 0.0
  %829 = vmatprep.subr.mxu0 0.0
  %830 = vmatpush1.msra.mxu0 0.0
  %831 = vmatprep.subr.mxu0 0.0
  %832 = vmatpush1.msra.mxu0 0.0
  %833 = vmatprep.subr.mxu0 0.0
  %834 = vmatpush1.msra.mxu0 0.0
  %835 = vmatprep.subr.mxu0 0.0
  %836 = vmatpush1.msra.mxu0 0.0
  %837 = vmatprep.subr.mxu0 0.0
  %838 = vmatpush1.msra.mxu0 0.0
  %839 = vmatprep.subr.mxu0 0.0
  %840 = vmatpush1.msra.mxu0 0.0
  %841 = vmatprep.subr.mxu0 0.0
  %842 = vmatpush1.msra.mxu0 0.0
  %843 = vmatprep.subr.mxu0 0.0
  %844 = vmatpush1.msra.mxu0 0.0
  %845 = vmatprep.subr.mxu0 0.0
  %846 = vmatpush1.msra.mxu0 0.0
  %847 = vmatprep.subr.mxu0 0.0
  %848 = vmatpush1.msra.mxu0 0.0
  %849 = vmatprep.subr.mxu0 0.0
  %850 = vmatpush1.msra.mxu0 0.0
  %851 = vmatprep.subr.mxu0 0.0
  %852 = vmatpush1.msra.mxu0 0.0
  %853 = vmatprep.subr.mxu0 0.0
  %854 = vmatpush1.msra.mxu0 0.0
  %855 = vmatprep.subr.mxu0 0.0
  %856 = vmatpush1.msra.mxu0 0.0
  %857 = vmatprep.subr.mxu0 0.0
  %858 = vmatpush1.msra.mxu0 %v691
  %859 = vmatprep.subr.mxu0 0.0
  %860 = vmatpush2.msra.mxu0 0.0
  %861 = vmatprep.subr.mxu0 0.0
  %862 = vmatpush2.msra.mxu0 0.0
  %863 = vmatprep.subr.mxu0 0.0
  %864 = vmatpush2.msra.mxu0 0.0
  %865 = vmatprep.subr.mxu0 0.0
  %866 = vmatpush2.msra.mxu0 0.0
  %867 = vmatprep.subr.mxu0 0.0
  %868 = vmatpush2.msra.mxu0 0.0
  %869 = vmatprep.subr.mxu0 0.0
  %870 = vmatpush2.msra.mxu0 0.0
  %871 = vmatprep.subr.mxu0 0.0
  %872 = vmatpush2.msra.mxu0 0.0
  %873 = vmatprep.subr.mxu0 0.0
  %874 = vmatpush2.msra.mxu0 0.0
  %875 = vmatprep.subr.mxu0 0.0
  %876 = vmatpush2.msra.mxu0 0.0
  %877 = vmatprep.subr.mxu0 0.0
  %878 = vmatpush2.msra.mxu0 0.0
  %879 = vmatprep.subr.mxu0 0.0
  %880 = vmatpush2.msra.mxu0 0.0
  %881 = vmatprep.subr.mxu0 0.0
  %882 = vmatpush2.msra.mxu0 0.0
  %883 = vmatprep.subr.mxu0 0.0
  %884 = vmatpush2.msra.mxu0 0.0
  %885 = vmatprep.subr.mxu0 0.0
  %886 = vmatpush2.msra.mxu0 0.0
  %887 = vmatprep.subr.mxu0 0.0
  %888 = vmatpush2.msra.mxu0 0.0
  %889 = vmatprep.subr.mxu0 0.0
  %890 = vmatpush2.msra.mxu0 0.0
  %891 = vmatprep.mubr.f32.mxu0 0.0
  %892 = vmatmul.mubr.f32.gmra.mxu0 %v816
  %v893 = vpop.f32.mrf.mxu0
  %v894 = vadd.f32 0.0, %v893
  %v895 = vpop.f32.mrf.mxu0
  %896 = vmatprep.mubr.f32.mxu0 0.0
  %897 = vmatmul.mubr.f32.gmra.mxu0 %v819
  %v898 = vpop.f32.mrf.mxu0
  %v899 = vadd.f32 0.0, %v898
  %v900 = vpop.f32.mrf.mxu0
  %901 = vmatprep.mubr.f32.mxu0 0.0
  %902 = vmatmul.mubr.f32.gmra.mxu0 %v822
  %v903 = vpop.f32.mrf.mxu0
  %v904 = vadd.f32 0.0, %v903
  %v905 = vpop.f32.mrf.mxu0
  %906 = vmatprep.mubr.f32.mxu0 0.0
  %907 = vmatmul.mubr.f32.gmra.mxu0 %v825
  %v908 = vpop.f32.mrf.mxu0
  %v909 = vadd.f32 0.0, %v908
  %v910 = vpop.f32.mrf.mxu0
  %911 = vdwg.mxu0
  %v912 = vmul.f32 %v894, %v801
  %v913 = vmul.f32 %v899, %v802
  %v914 = vmul.f32 %v904, %v799
  %v915 = vmul.f32 %v909, %v800
  %v916 = vadd.f32 %v807, %v912
  %v917 = vadd.f32 %v808, %v913
  %v918 = vadd.f32 %v809, %v914
  %v919 = vadd.f32 %v810, %v915
  %v920 = vld [vmem:[%s7] sm:$0xff]
  %v921 = vld [vmem:[%s7 + $0x8] sm:$0xff]
  %v922 = vld [vmem:[%s7 + $0x10] sm:$0xff]
  %v923 = vld [vmem:[%s7 + $0x18] sm:$0xff]
  %v924 = vld [vmem:[%s7 + $0x20] sm:$0xff]
  %v925 = vld [vmem:[%s7 + $0x28] sm:$0xff]
  %v926 = vld [vmem:[%s8] sm:$0x1]
  %v928 = vlaneseq
  %v929 = vshrl.u32 %v928, 7
  %v930 = vsub.s32 0, %v929
  %v931 = vrot.slane %v926, %v930
  %v934 = vsel %vm116, %v916, 0
  %v937 = vsel %vm116, %v917, 0
  %v940 = vsel %vm116, %v918, 0
  %v943 = vsel %vm116, %v919, 0
  %945 = vmatprep.subr.mxu0 0.0
  %946 = vmatpush1.msra.mxu0 0.0
  %947 = vmatprep.subr.mxu0 0.0
  %948 = vmatpush1.msra.mxu0 0.0
  %949 = vmatprep.subr.mxu0 0.0
  %950 = vmatpush1.msra.mxu0 0.0
  %951 = vmatprep.subr.mxu0 0.0
  %952 = vmatpush1.msra.mxu0 0.0
  %953 = vmatprep.subr.mxu0 0.0
  %954 = vmatpush1.msra.mxu0 0.0
  %955 = vmatprep.subr.mxu0 0.0
  %956 = vmatpush1.msra.mxu0 0.0
  %957 = vmatprep.subr.mxu0 0.0
  %958 = vmatpush1.msra.mxu0 0.0
  %959 = vmatprep.subr.mxu0 0.0
  %960 = vmatpush1.msra.mxu0 0.0
  %961 = vmatprep.subr.mxu0 0.0
  %962 = vmatpush1.msra.mxu0 0.0
  %963 = vmatprep.subr.mxu0 0.0
  %964 = vmatpush1.msra.mxu0 0.0
  %965 = vmatprep.subr.mxu0 0.0
  %966 = vmatpush1.msra.mxu0 %v925
  %967 = vmatprep.subr.mxu0 0.0
  %968 = vmatpush1.msra.mxu0 %v924
  %969 = vmatprep.subr.mxu0 0.0
  %970 = vmatpush1.msra.mxu0 %v923
  %971 = vmatprep.subr.mxu0 0.0
  %972 = vmatpush1.msra.mxu0 %v922
  %973 = vmatprep.subr.mxu0 0.0
  %974 = vmatpush1.msra.mxu0 %v921
  %975 = vmatprep.subr.mxu0 0.0
  %976 = vmatpush1.msra.mxu0 %v920
  %977 = vmatprep.subr.mxu0 0.0
  %978 = vmatpush2.msra.mxu0 0.0
  %979 = vmatprep.subr.mxu0 0.0
  %980 = vmatpush2.msra.mxu0 0.0
  %981 = vmatprep.subr.mxu0 0.0
  %982 = vmatpush2.msra.mxu0 0.0
  %983 = vmatprep.subr.mxu0 0.0
  %984 = vmatpush2.msra.mxu0 0.0
  %985 = vmatprep.subr.mxu0 0.0
  %986 = vmatpush2.msra.mxu0 0.0
  %987 = vmatprep.subr.mxu0 0.0
  %988 = vmatpush2.msra.mxu0 0.0
  %989 = vmatprep.subr.mxu0 0.0
  %990 = vmatpush2.msra.mxu0 0.0
  %991 = vmatprep.subr.mxu0 0.0
  %992 = vmatpush2.msra.mxu0 0.0
  %993 = vmatprep.subr.mxu0 0.0
  %994 = vmatpush2.msra.mxu0 0.0
  %995 = vmatprep.subr.mxu0 0.0
  %996 = vmatpush2.msra.mxu0 0.0
  %997 = vmatprep.subr.mxu0 0.0
  %998 = vmatpush2.msra.mxu0 0.0
  %999 = vmatprep.subr.mxu0 0.0
  %1000 = vmatpush2.msra.mxu0 0.0
  %1001 = vmatprep.subr.mxu0 0.0
  %1002 = vmatpush2.msra.mxu0 0.0
  %1003 = vmatprep.subr.mxu0 0.0
  %1004 = vmatpush2.msra.mxu0 0.0
  %1005 = vmatprep.subr.mxu0 0.0
  %1006 = vmatpush2.msra.mxu0 0.0
  %1007 = vmatprep.subr.mxu0 0.0
  %1008 = vmatpush2.msra.mxu0 0.0
  %1009 = vmatprep.mubr.f32.mxu0 0.0
  %1010 = vmatmul.mubr.f32.gmra.mxu0 %v934
  %v1011 = vpop.f32.mrf.mxu0
  %v1012 = vadd.f32 %v931, %v1011
  %v1013 = vpop.f32.mrf.mxu0
  %1014 = vmatprep.mubr.f32.mxu0 0.0
  %1015 = vmatmul.mubr.f32.gmra.mxu0 %v937
  %v1016 = vpop.f32.mrf.mxu0
  %v1017 = vadd.f32 %v931, %v1016
  %v1018 = vpop.f32.mrf.mxu0
  %1019 = vmatprep.mubr.f32.mxu0 0.0
  %1020 = vmatmul.mubr.f32.gmra.mxu0 %v940
  %v1021 = vpop.f32.mrf.mxu0
  %v1022 = vadd.f32 %v931, %v1021
  %v1023 = vpop.f32.mrf.mxu0
  %1024 = vmatprep.mubr.f32.mxu0 0.0
  %1025 = vmatmul.mubr.f32.gmra.mxu0 %v943
  %v1026 = vpop.f32.mrf.mxu0
  %v1027 = vadd.f32 %v931, %v1026
  %v1028 = vpop.f32.mrf.mxu0
  %1029 = vdwg.mxu0
  %v1030 = vadd.f32 %v196, %v1012
  %v1031 = vadd.f32 %v201, %v1017
  %v1032 = vadd.f32 %v206, %v1022
  %v1033 = vadd.f32 %v211, %v1027
  %v1034 = vld [vmem:[%s9] sm:$0x1]
  %v1035 = vld [vmem:[%s10] sm:$0x1]
  %v1036 = vsel %vm116, %v1030, 0.0
  %1037 = vadd.xlane.f32.xlu0 %v1036
  %v1038 = vpop.xlane.xlu0 %1037
  %v1039 = vsel %vm116, %v1031, 0.0
  %1040 = vadd.xlane.f32.xlu0 %v1039
  %v1041 = vpop.xlane.xlu0 %1040
  %v1042 = vsel %vm116, %v1032, 0.0
  %1043 = vadd.xlane.f32.xlu0 %v1042
  %v1044 = vpop.xlane.xlu0 %1043
  %v1045 = vsel %vm116, %v1033, 0.0
  %1046 = vadd.xlane.f32.xlu0 %v1045
  %v1047 = vpop.xlane.xlu0 %1046
  %v1048 = vmul.f32 %v1038, %v228
  %v1049 = vmul.f32 %v1041, %v228
  %v1050 = vmul.f32 %v1044, %v228
  %v1051 = vmul.f32 %v1047, %v228
  %v1052 = vsub.f32 %v1030, %v1048
  %v1053 = vsub.f32 %v1031, %v1049
  %v1054 = vsub.f32 %v1032, %v1050
  %v1055 = vsub.f32 %v1033, %v1051
  %v1056 = vmul.f32 %v1052, %v1052
  %v1057 = vmul.f32 %v1053, %v1053
  %v1058 = vmul.f32 %v1054, %v1054
  %v1059 = vmul.f32 %v1055, %v1055
  %v1060 = vsel %vm116, %v1056, 0.0
  %1061 = vadd.xlane.f32.xlu0 %v1060
  %v1062 = vpop.xlane.xlu0 %1061
  %v1063 = vsel %vm116, %v1057, 0.0
  %1064 = vadd.xlane.f32.xlu0 %v1063
  %v1065 = vpop.xlane.xlu0 %1064
  %v1066 = vsel %vm116, %v1058, 0.0
  %1067 = vadd.xlane.f32.xlu0 %v1066
  %v1068 = vpop.xlane.xlu0 %1067
  %v1069 = vsel %vm116, %v1059, 0.0
  %1070 = vadd.xlane.f32.xlu0 %v1069
  %v1071 = vpop.xlane.xlu0 %1070
  %v1072 = vmul.f32 %v1062, %v228
  %v1073 = vmul.f32 %v1065, %v228
  %v1074 = vmul.f32 %v1068, %v228
  %v1075 = vmul.f32 %v1071, %v228
  %v1076 = vadd.f32 %v1072, 1e-05
  %v1077 = vadd.f32 %v1073, 1e-05
  %v1078 = vadd.f32 %v1074, 1e-05
  %v1079 = vadd.f32 %v1075, 1e-05
  %v1080 = vrsqrt.pop %v1076
  %v1081 = vrsqrt.pop %v1077
  %v1082 = vrsqrt.pop %v1078
  %v1083 = vrsqrt.pop %v1079
  %v1084 = vmul.f32 %v1052, %v1080
  %v1085 = vmul.f32 %v1053, %v1081
  %v1086 = vmul.f32 %v1054, %v1082
  %v1087 = vmul.f32 %v1055, %v1083
  %v1089 = vlaneseq
  %v1090 = vshrl.u32 %v1089, 7
  %v1091 = vsub.s32 0, %v1090
  %v1092 = vrot.slane %v1034, %v1091
  %v1094 = vmul.f32 %v1084, %v1092
  %v1095 = vmul.f32 %v1085, %v1092
  %v1096 = vmul.f32 %v1086, %v1092
  %v1097 = vmul.f32 %v1087, %v1092
  %v1099 = vlaneseq
  %v1100 = vshrl.u32 %v1099, 7
  %v1101 = vsub.s32 0, %v1100
  %v1102 = vrot.slane %v1035, %v1101
  %v1104 = vadd.f32 %v1094, %v1102
  %v1105 = vadd.f32 %v1095, %v1102
  %v1106 = vadd.f32 %v1096, %v1102
  %v1107 = vadd.f32 %v1097, %v1102
  %v1108 = vld [vmem:[%s11] sm:$0xff]
  %v1109 = vld [vmem:[%s11 + $0x8] sm:$0xff]
  %v1110 = vld [vmem:[%s11 + $0x10] sm:$0xff]
  %v1111 = vld [vmem:[%s11 + $0x18] sm:$0xff]
  %v1112 = vld [vmem:[%s11 + $0x20] sm:$0xff]
  %v1113 = vld [vmem:[%s11 + $0x28] sm:$0xff]
  %v1114 = vld [vmem:[%s12] sm:$0x1]
  %v1116 = vlaneseq
  %v1117 = vshrl.u32 %v1116, 7
  %v1118 = vsub.s32 0, %v1117
  %v1119 = vrot.slane %v1114, %v1118
  %v1122 = vsel %vm116, %v1104, 0
  %v1125 = vsel %vm116, %v1105, 0
  %v1128 = vsel %vm116, %v1106, 0
  %v1131 = vsel %vm116, %v1107, 0
  %1133 = vmatprep.subr.mxu0 0.0
  %1134 = vmatpush1.msra.mxu0 0.0
  %1135 = vmatprep.subr.mxu0 0.0
  %1136 = vmatpush1.msra.mxu0 0.0
  %1137 = vmatprep.subr.mxu0 0.0
  %1138 = vmatpush1.msra.mxu0 0.0
  %1139 = vmatprep.subr.mxu0 0.0
  %1140 = vmatpush1.msra.mxu0 0.0
  %1141 = vmatprep.subr.mxu0 0.0
  %1142 = vmatpush1.msra.mxu0 0.0
  %1143 = vmatprep.subr.mxu0 0.0
  %1144 = vmatpush1.msra.mxu0 0.0
  %1145 = vmatprep.subr.mxu0 0.0
  %1146 = vmatpush1.msra.mxu0 0.0
  %1147 = vmatprep.subr.mxu0 0.0
  %1148 = vmatpush1.msra.mxu0 0.0
  %1149 = vmatprep.subr.mxu0 0.0
  %1150 = vmatpush1.msra.mxu0 0.0
  %1151 = vmatprep.subr.mxu0 0.0
  %1152 = vmatpush1.msra.mxu0 0.0
  %1153 = vmatprep.subr.mxu0 0.0
  %1154 = vmatpush1.msra.mxu0 %v1113
  %1155 = vmatprep.subr.mxu0 0.0
  %1156 = vmatpush1.msra.mxu0 %v1112
  %1157 = vmatprep.subr.mxu0 0.0
  %1158 = vmatpush1.msra.mxu0 %v1111
  %1159 = vmatprep.subr.mxu0 0.0
  %1160 = vmatpush1.msra.mxu0 %v1110
  %1161 = vmatprep.subr.mxu0 0.0
  %1162 = vmatpush1.msra.mxu0 %v1109
  %1163 = vmatprep.subr.mxu0 0.0
  %1164 = vmatpush1.msra.mxu0 %v1108
  %1165 = vmatprep.subr.mxu0 0.0
  %1166 = vmatpush2.msra.mxu0 0.0
  %1167 = vmatprep.subr.mxu0 0.0
  %1168 = vmatpush2.msra.mxu0 0.0
  %1169 = vmatprep.subr.mxu0 0.0
  %1170 = vmatpush2.msra.mxu0 0.0
  %1171 = vmatprep.subr.mxu0 0.0
  %1172 = vmatpush2.msra.mxu0 0.0
  %1173 = vmatprep.subr.mxu0 0.0
  %1174 = vmatpush2.msra.mxu0 0.0
  %1175 = vmatprep.subr.mxu0 0.0
  %1176 = vmatpush2.msra.mxu0 0.0
  %1177 = vmatprep.subr.mxu0 0.0
  %1178 = vmatpush2.msra.mxu0 0.0
  %1179 = vmatprep.subr.mxu0 0.0
  %1180 = vmatpush2.msra.mxu0 0.0
  %1181 = vmatprep.subr.mxu0 0.0
  %1182 = vmatpush2.msra.mxu0 0.0
  %1183 = vmatprep.subr.mxu0 0.0
  %1184 = vmatpush2.msra.mxu0 0.0
  %1185 = vmatprep.subr.mxu0 0.0
  %1186 = vmatpush2.msra.mxu0 0.0
  %1187 = vmatprep.subr.mxu0 0.0
  %1188 = vmatpush2.msra.mxu0 0.0
  %1189 = vmatprep.subr.mxu0 0.0
  %1190 = vmatpush2.msra.mxu0 0.0
  %1191 = vmatprep.subr.mxu0 0.0
  %1192 = vmatpush2.msra.mxu0 0.0
  %1193 = vmatprep.subr.mxu0 0.0
  %1194 = vmatpush2.msra.mxu0 0.0
  %1195 = vmatprep.subr.mxu0 0.0
  %1196 = vmatpush2.msra.mxu0 0.0
  %1197 = vmatprep.mubr.f32.mxu0 0.0
  %1198 = vmatmul.mubr.f32.gmra.mxu0 %v1122
  %v1199 = vpop.f32.mrf.mxu0
  %v1200 = vadd.f32 %v1119, %v1199
  %v1201 = vpop.f32.mrf.mxu0
  %1202 = vmatprep.mubr.f32.mxu0 0.0
  %1203 = vmatmul.mubr.f32.gmra.mxu0 %v1125
  %v1204 = vpop.f32.mrf.mxu0
  %v1205 = vadd.f32 %v1119, %v1204
  %v1206 = vpop.f32.mrf.mxu0
  %1207 = vmatprep.mubr.f32.mxu0 0.0
  %1208 = vmatmul.mubr.f32.gmra.mxu0 %v1128
  %v1209 = vpop.f32.mrf.mxu0
  %v1210 = vadd.f32 %v1119, %v1209
  %v1211 = vpop.f32.mrf.mxu0
  %1212 = vmatprep.mubr.f32.mxu0 0.0
  %1213 = vmatmul.mubr.f32.gmra.mxu0 %v1131
  %v1214 = vpop.f32.mrf.mxu0
  %v1215 = vadd.f32 %v1119, %v1214
  %v1216 = vpop.f32.mrf.mxu0
  %1217 = vdwg.mxu0
  %v1218 = vmax.f32 %v1200, 0.0
  %v1219 = vmax.f32 %v1205, 0.0
  %v1220 = vmax.f32 %v1210, 0.0
  %v1221 = vmax.f32 %v1215, 0.0
  %v1222 = vld [vmem:[%s13] sm:$0xff]
  %v1223 = vld [vmem:[%s13 + $0x8] sm:$0xff]
  %v1224 = vld [vmem:[%s13 + $0x10] sm:$0xff]
  %v1225 = vld [vmem:[%s13 + $0x18] sm:$0xff]
  %v1226 = vld [vmem:[%s13 + $0x20] sm:$0xff]
  %v1227 = vld [vmem:[%s13 + $0x28] sm:$0xff]
  %v1228 = vld [vmem:[%s14] sm:$0x1]
  %v1230 = vlaneseq
  %v1231 = vshrl.u32 %v1230, 7
  %v1232 = vsub.s32 0, %v1231
  %v1233 = vrot.slane %v1228, %v1232
  %v1236 = vsel %vm116, %v1218, 0
  %v1239 = vsel %vm116, %v1219, 0
  %v1242 = vsel %vm116, %v1220, 0
  %v1245 = vsel %vm116, %v1221, 0
  %1247 = vmatprep.subr.mxu0 0.0
  %1248 = vmatpush1.msra.mxu0 0.0
  %1249 = vmatprep.subr.mxu0 0.0
  %1250 = vmatpush1.msra.mxu0 0.0
  %1251 = vmatprep.subr.mxu0 0.0
  %1252 = vmatpush1.msra.mxu0 0.0
  %1253 = vmatprep.subr.mxu0 0.0
  %1254 = vmatpush1.msra.mxu0 0.0
  %1255 = vmatprep.subr.mxu0 0.0
  %1256 = vmatpush1.msra.mxu0 0.0
  %1257 = vmatprep.subr.mxu0 0.0
  %1258 = vmatpush1.msra.mxu0 0.0
  %1259 = vmatprep.subr.mxu0 0.0
  %1260 = vmatpush1.msra.mxu0 0.0
  %1261 = vmatprep.subr.mxu0 0.0
  %1262 = vmatpush1.msra.mxu0 0.0
  %1263 = vmatprep.subr.mxu0 0.0
  %1264 = vmatpush1.msra.mxu0 0.0
  %1265 = vmatprep.subr.mxu0 0.0
  %1266 = vmatpush1.msra.mxu0 0.0
  %1267 = vmatprep.subr.mxu0 0.0
  %1268 = vmatpush1.msra.mxu0 %v1227
  %1269 = vmatprep.subr.mxu0 0.0
  %1270 = vmatpush1.msra.mxu0 %v1226
  %1271 = vmatprep.subr.mxu0 0.0
  %1272 = vmatpush1.msra.mxu0 %v1225
  %1273 = vmatprep.subr.mxu0 0.0
  %1274 = vmatpush1.msra.mxu0 %v1224
  %1275 = vmatprep.subr.mxu0 0.0
  %1276 = vmatpush1.msra.mxu0 %v1223
  %1277 = vmatprep.subr.mxu0 0.0
  %1278 = vmatpush1.msra.mxu0 %v1222
  %1279 = vmatprep.subr.mxu0 0.0
  %1280 = vmatpush2.msra.mxu0 0.0
  %1281 = vmatprep.subr.mxu0 0.0
  %1282 = vmatpush2.msra.mxu0 0.0
  %1283 = vmatprep.subr.mxu0 0.0
  %1284 = vmatpush2.msra.mxu0 0.0
  %1285 = vmatprep.subr.mxu0 0.0
  %1286 = vmatpush2.msra.mxu0 0.0
  %1287 = vmatprep.subr.mxu0 0.0
  %1288 = vmatpush2.msra.mxu0 0.0
  %1289 = vmatprep.subr.mxu0 0.0
  %1290 = vmatpush2.msra.mxu0 0.0
  %1291 = vmatprep.subr.mxu0 0.0
  %1292 = vmatpush2.msra.mxu0 0.0
  %1293 = vmatprep.subr.mxu0 0.0
  %1294 = vmatpush2.msra.mxu0 0.0
  %1295 = vmatprep.subr.mxu0 0.0
  %1296 = vmatpush2.msra.mxu0 0.0
  %1297 = vmatprep.subr.mxu0 0.0
  %1298 = vmatpush2.msra.mxu0 0.0
  %1299 = vmatprep.subr.mxu0 0.0
  %1300 = vmatpush2.msra.mxu0 0.0
  %1301 = vmatprep.subr.mxu0 0.0
  %1302 = vmatpush2.msra.mxu0 0.0
  %1303 = vmatprep.subr.mxu0 0.0
  %1304 = vmatpush2.msra.mxu0 0.0
  %1305 = vmatprep.subr.mxu0 0.0
  %1306 = vmatpush2.msra.mxu0 0.0
  %1307 = vmatprep.subr.mxu0 0.0
  %1308 = vmatpush2.msra.mxu0 0.0
  %1309 = vmatprep.subr.mxu0 0.0
  %1310 = vmatpush2.msra.mxu0 0.0
  %1311 = vmatprep.mubr.f32.mxu0 0.0
  %1312 = vmatmul.mubr.f32.gmra.mxu0 %v1236
  %v1313 = vpop.f32.mrf.mxu0
  %v1314 = vadd.f32 %v1233, %v1313
  %v1315 = vpop.f32.mrf.mxu0
  %1316 = vmatprep.mubr.f32.mxu0 0.0
  %1317 = vmatmul.mubr.f32.gmra.mxu0 %v1239
  %v1318 = vpop.f32.mrf.mxu0
  %v1319 = vadd.f32 %v1233, %v1318
  %v1320 = vpop.f32.mrf.mxu0
  %1321 = vmatprep.mubr.f32.mxu0 0.0
  %1322 = vmatmul.mubr.f32.gmra.mxu0 %v1242
  %v1323 = vpop.f32.mrf.mxu0
  %v1324 = vadd.f32 %v1233, %v1323
  %v1325 = vpop.f32.mrf.mxu0
  %1326 = vmatprep.mubr.f32.mxu0 0.0
  %1327 = vmatmul.mubr.f32.gmra.mxu0 %v1245
  %v1328 = vpop.f32.mrf.mxu0
  %v1329 = vadd.f32 %v1233, %v1328
  %v1330 = vpop.f32.mrf.mxu0
  %1331 = vdwg.mxu0
  %v1332 = vadd.f32 %v1030, %v1314
  %v1333 = vadd.f32 %v1031, %v1319
  %v1334 = vadd.f32 %v1032, %v1324
  %v1335 = vadd.f32 %v1033, %v1329
  %s1336 = scalar_lea.vmem %s3, 1
  %v1337 = vld [vmem:[%s1336] sm:$0x1]
  %s1338 = scalar_lea.vmem %s4, 1
  %v1339 = vld [vmem:[%s1338] sm:$0x1]
  %v1340 = vsel %vm116, %v1332, 0.0
  %1341 = vadd.xlane.f32.xlu0 %v1340
  %v1342 = vpop.xlane.xlu0 %1341
  %v1343 = vsel %vm116, %v1333, 0.0
  %1344 = vadd.xlane.f32.xlu0 %v1343
  %v1345 = vpop.xlane.xlu0 %1344
  %v1346 = vsel %vm116, %v1334, 0.0
  %1347 = vadd.xlane.f32.xlu0 %v1346
  %v1348 = vpop.xlane.xlu0 %1347
  %v1349 = vsel %vm116, %v1335, 0.0
  %1350 = vadd.xlane.f32.xlu0 %v1349
  %v1351 = vpop.xlane.xlu0 %1350
  %v1352 = vmul.f32 %v1342, %v228
  %v1353 = vmul.f32 %v1345, %v228
  %v1354 = vmul.f32 %v1348, %v228
  %v1355 = vmul.f32 %v1351, %v228
  %v1356 = vsub.f32 %v1332, %v1352
  %v1357 = vsub.f32 %v1333, %v1353
  %v1358 = vsub.f32 %v1334, %v1354
  %v1359 = vsub.f32 %v1335, %v1355
  %v1360 = vmul.f32 %v1356, %v1356
  %v1361 = vmul.f32 %v1357, %v1357
  %v1362 = vmul.f32 %v1358, %v1358
  %v1363 = vmul.f32 %v1359, %v1359
  %v1364 = vsel %vm116, %v1360, 0.0
  %1365 = vadd.xlane.f32.xlu0 %v1364
  %v1366 = vpop.xlane.xlu0 %1365
  %v1367 = vsel %vm116, %v1361, 0.0
  %1368 = vadd.xlane.f32.xlu0 %v1367
  %v1369 = vpop.xlane.xlu0 %1368
  %v1370 = vsel %vm116, %v1362, 0.0
  %1371 = vadd.xlane.f32.xlu0 %v1370
  %v1372 = vpop.xlane.xlu0 %1371
  %v1373 = vsel %vm116, %v1363, 0.0
  %1374 = vadd.xlane.f32.xlu0 %v1373
  %v1375 = vpop.xlane.xlu0 %1374
  %v1376 = vmul.f32 %v1366, %v228
  %v1377 = vmul.f32 %v1369, %v228
  %v1378 = vmul.f32 %v1372, %v228
  %v1379 = vmul.f32 %v1375, %v228
  %v1380 = vadd.f32 %v1376, 1e-05
  %v1381 = vadd.f32 %v1377, 1e-05
  %v1382 = vadd.f32 %v1378, 1e-05
  %v1383 = vadd.f32 %v1379, 1e-05
  %v1384 = vrsqrt.pop %v1380
  %v1385 = vrsqrt.pop %v1381
  %v1386 = vrsqrt.pop %v1382
  %v1387 = vrsqrt.pop %v1383
  %v1388 = vmul.f32 %v1356, %v1384
  %v1389 = vmul.f32 %v1357, %v1385
  %v1390 = vmul.f32 %v1358, %v1386
  %v1391 = vmul.f32 %v1359, %v1387
  %v1393 = vlaneseq
  %v1394 = vshrl.u32 %v1393, 7
  %v1395 = vsub.s32 0, %v1394
  %v1396 = vrot.slane %v1337, %v1395
  %v1398 = vmul.f32 %v1388, %v1396
  %v1399 = vmul.f32 %v1389, %v1396
  %v1400 = vmul.f32 %v1390, %v1396
  %v1401 = vmul.f32 %v1391, %v1396
  %v1403 = vlaneseq
  %v1404 = vshrl.u32 %v1403, 7
  %v1405 = vsub.s32 0, %v1404
  %v1406 = vrot.slane %v1339, %v1405
  %v1408 = vadd.f32 %v1398, %v1406
  %v1409 = vadd.f32 %v1399, %v1406
  %v1410 = vadd.f32 %v1400, %v1406
  %v1411 = vadd.f32 %v1401, %v1406
  %s1412 = scalar_lea.vmem %s5, 96
  %v1413 = vld [vmem:[%s1412] sm:$0xff]
  %v1414 = vld [vmem:[%s1412 + $0x8] sm:$0xff]
  %v1415 = vld [vmem:[%s1412 + $0x10] sm:$0xff]
  %v1416 = vld [vmem:[%s1412 + $0x18] sm:$0xff]
  %v1417 = vld [vmem:[%s1412 + $0x20] sm:$0xff]
  %v1418 = vld [vmem:[%s1412 + $0x28] sm:$0xff]
  %v1419 = vld [vmem:[%s1412 + $0x30] sm:$0xff]
  %v1420 = vld [vmem:[%s1412 + $0x38] sm:$0xff]
  %v1421 = vld [vmem:[%s1412 + $0x40] sm:$0xff]
  %v1422 = vld [vmem:[%s1412 + $0x48] sm:$0xff]
  %v1423 = vld [vmem:[%s1412 + $0x50] sm:$0xff]
  %v1424 = vld [vmem:[%s1412 + $0x58] sm:$0xff]
  %s1425 = scalar_lea.vmem %s6, 2
  %v1426 = vld [vmem:[%s1425] sm:$0x3]
  %v1428 = vlaneseq
  %v1429 = vshrl.u32 %v1428, 7
  %v1430 = vsub.s32 0, %v1429
  %v1431 = vrot.slane %v1426, %v1430
  %v1432 = vlaneseq
  %v1433 = vshrl.u32 %v1432, 7
  %v1434 = vsub.s32 1, %v1433
  %v1435 = vrot.slane %v1426, %v1434
  %v1439 = vsel %vm116, %v1408, 0
  %v1442 = vsel %vm116, %v1409, 0
  %v1445 = vsel %vm116, %v1410, 0
  %v1448 = vsel %vm116, %v1411, 0
  %1450 = vmatprep.subr.mxu0 0.0
  %1451 = vmatpush1.msra.mxu0 0.0
  %1452 = vmatprep.subr.mxu0 0.0
  %1453 = vmatpush1.msra.mxu0 0.0
  %1454 = vmatprep.subr.mxu0 0.0
  %1455 = vmatpush1.msra.mxu0 0.0
  %1456 = vmatprep.subr.mxu0 0.0
  %1457 = vmatpush1.msra.mxu0 0.0
  %1458 = vmatprep.subr.mxu0 0.0
  %1459 = vmatpush1.msra.mxu0 0.0
  %1460 = vmatprep.subr.mxu0 0.0
  %1461 = vmatpush1.msra.mxu0 0.0
  %1462 = vmatprep.subr.mxu0 0.0
  %1463 = vmatpush1.msra.mxu0 0.0
  %1464 = vmatprep.subr.mxu0 0.0
  %1465 = vmatpush1.msra.mxu0 0.0
  %1466 = vmatprep.subr.mxu0 0.0
  %1467 = vmatpush1.msra.mxu0 0.0
  %1468 = vmatprep.subr.mxu0 0.0
  %1469 = vmatpush1.msra.mxu0 0.0
  %1470 = vmatprep.subr.mxu0 %v1424
  %1471 = vmatpush1.msra.mxu0 %v1423
  %1472 = vmatprep.subr.mxu0 %v1422
  %1473 = vmatpush1.msra.mxu0 %v1421
  %1474 = vmatprep.subr.mxu0 %v1420
  %1475 = vmatpush1.msra.mxu0 %v1419
  %1476 = vmatprep.subr.mxu0 %v1418
  %1477 = vmatpush1.msra.mxu0 %v1417
  %1478 = vmatprep.subr.mxu0 %v1416
  %1479 = vmatpush1.msra.mxu0 %v1415
  %1480 = vmatprep.subr.mxu0 %v1414
  %1481 = vmatpush1.msra.mxu0 %v1413
  %1482 = vmatprep.subr.mxu0 0.0
  %1483 = vmatpush2.msra.mxu0 0.0
  %1484 = vmatprep.subr.mxu0 0.0
  %1485 = vmatpush2.msra.mxu0 0.0
  %1486 = vmatprep.subr.mxu0 0.0
  %1487 = vmatpush2.msra.mxu0 0.0
  %1488 = vmatprep.subr.mxu0 0.0
  %1489 = vmatpush2.msra.mxu0 0.0
  %1490 = vmatprep.subr.mxu0 0.0
  %1491 = vmatpush2.msra.mxu0 0.0
  %1492 = vmatprep.subr.mxu0 0.0
  %1493 = vmatpush2.msra.mxu0 0.0
  %1494 = vmatprep.subr.mxu0 0.0
  %1495 = vmatpush2.msra.mxu0 0.0
  %1496 = vmatprep.subr.mxu0 0.0
  %1497 = vmatpush2.msra.mxu0 0.0
  %1498 = vmatprep.subr.mxu0 0.0
  %1499 = vmatpush2.msra.mxu0 0.0
  %1500 = vmatprep.subr.mxu0 0.0
  %1501 = vmatpush2.msra.mxu0 0.0
  %1502 = vmatprep.subr.mxu0 0.0
  %1503 = vmatpush2.msra.mxu0 0.0
  %1504 = vmatprep.subr.mxu0 0.0
  %1505 = vmatpush2.msra.mxu0 0.0
  %1506 = vmatprep.subr.mxu0 0.0
  %1507 = vmatpush2.msra.mxu0 0.0
  %1508 = vmatprep.subr.mxu0 0.0
  %1509 = vmatpush2.msra.mxu0 0.0
  %1510 = vmatprep.subr.mxu0 0.0
  %1511 = vmatpush2.msra.mxu0 0.0
  %1512 = vmatprep.subr.mxu0 0.0
  %1513 = vmatpush2.msra.mxu0 0.0
  %1514 = vmatprep.mubr.f32.mxu0 0.0
  %1515 = vmatmul.mubr.f32.gmra.mxu0 %v1439
  %v1516 = vpop.f32.mrf.mxu0
  %v1517 = vadd.f32 %v1431, %v1516
  %v1518 = vpop.f32.mrf.mxu0
  %v1519 = vadd.f32 %v1435, %v1518
  %1520 = vmatprep.mubr.f32.mxu0 0.0
  %1521 = vmatmul.mubr.f32.gmra.mxu0 %v1442
  %v1522 = vpop.f32.mrf.mxu0
  %v1523 = vadd.f32 %v1431, %v1522
  %v1524 = vpop.f32.mrf.mxu0
  %v1525 = vadd.f32 %v1435, %v1524
  %1526 = vmatprep.mubr.f32.mxu0 0.0
  %1527 = vmatmul.mubr.f32.gmra.mxu0 %v1445
  %v1528 = vpop.f32.mrf.mxu0
  %v1529 = vadd.f32 %v1431, %v1528
  %v1530 = vpop.f32.mrf.mxu0
  %v1531 = vadd.f32 %v1435, %v1530
  %1532 = vmatprep.mubr.f32.mxu0 0.0
  %1533 = vmatmul.mubr.f32.gmra.mxu0 %v1448
  %v1534 = vpop.f32.mrf.mxu0
  %v1535 = vadd.f32 %v1431, %v1534
  %v1536 = vpop.f32.mrf.mxu0
  %v1537 = vadd.f32 %v1435, %v1536
  %1538 = vdwg.mxu0
  %v1539 = vmul.f32 %v1517, 0.28867513
  %v1540 = vmul.f32 %v1523, 0.28867513
  %v1541 = vmul.f32 %v1529, 0.28867513
  %v1542 = vmul.f32 %v1535, 0.28867513
  %1547 = vrot.lane.b32.xlu0 %v1517, 80
  %v1548 = vpop.permute.xlu0 %1547
  %1549 = vrot.lane.b32.xlu0 %v1523, 80
  %v1550 = vpop.permute.xlu0 %1549
  %1551 = vrot.lane.b32.xlu0 %v1529, 80
  %v1552 = vpop.permute.xlu0 %1551
  %1553 = vrot.lane.b32.xlu0 %v1535, 80
  %v1554 = vpop.permute.xlu0 %1553
  %v1559 = vmul.f32 %v1539, %v1548
  %v1560 = vmul.f32 %v1540, %v1550
  %v1561 = vmul.f32 %v1541, %v1552
  %v1562 = vmul.f32 %v1542, %v1554
  %v1564 = vsel %vm116, %v1559, 0
  %v1567 = vsel %vm116, %v1560, 0
  %v1570 = vsel %vm116, %v1561, 0
  %v1573 = vsel %vm116, %v1562, 0
  %1575 = vmatprep.subr.mxu0 0.0
  %1576 = vmatpush1.msra.mxu0 0.0
  %1577 = vmatprep.subr.mxu0 0.0
  %1578 = vmatpush1.msra.mxu0 0.0
  %1579 = vmatprep.subr.mxu0 0.0
  %1580 = vmatpush1.msra.mxu0 0.0
  %1581 = vmatprep.subr.mxu0 0.0
  %1582 = vmatpush1.msra.mxu0 0.0
  %1583 = vmatprep.subr.mxu0 0.0
  %1584 = vmatpush1.msra.mxu0 0.0
  %1585 = vmatprep.subr.mxu0 0.0
  %1586 = vmatpush1.msra.mxu0 0.0
  %1587 = vmatprep.subr.mxu0 0.0
  %1588 = vmatpush1.msra.mxu0 0.0
  %1589 = vmatprep.subr.mxu0 0.0
  %1590 = vmatpush1.msra.mxu0 0.0
  %1591 = vmatprep.subr.mxu0 0.0
  %1592 = vmatpush1.msra.mxu0 0.0
  %1593 = vmatprep.subr.mxu0 0.0
  %1594 = vmatpush1.msra.mxu0 0.0
  %1595 = vmatprep.subr.mxu0 0.0
  %1596 = vmatpush1.msra.mxu0 %v91
  %1597 = vmatprep.subr.mxu0 0.0
  %1598 = vmatpush1.msra.mxu0 %v90
  %1599 = vmatprep.subr.mxu0 0.0
  %1600 = vmatpush1.msra.mxu0 %v89
  %1601 = vmatprep.subr.mxu0 0.0
  %1602 = vmatpush1.msra.mxu0 %v88
  %1603 = vmatprep.subr.mxu0 0.0
  %1604 = vmatpush1.msra.mxu0 %v87
  %1605 = vmatprep.subr.mxu0 0.0
  %1606 = vmatpush1.msra.mxu0 %v86
  %1607 = vmatprep.subr.mxu0 0.0
  %1608 = vmatpush2.msra.mxu0 0.0
  %1609 = vmatprep.subr.mxu0 0.0
  %1610 = vmatpush2.msra.mxu0 0.0
  %1611 = vmatprep.subr.mxu0 0.0
  %1612 = vmatpush2.msra.mxu0 0.0
  %1613 = vmatprep.subr.mxu0 0.0
  %1614 = vmatpush2.msra.mxu0 0.0
  %1615 = vmatprep.subr.mxu0 0.0
  %1616 = vmatpush2.msra.mxu0 0.0
  %1617 = vmatprep.subr.mxu0 0.0
  %1618 = vmatpush2.msra.mxu0 0.0
  %1619 = vmatprep.subr.mxu0 0.0
  %1620 = vmatpush2.msra.mxu0 0.0
  %1621 = vmatprep.subr.mxu0 0.0
  %1622 = vmatpush2.msra.mxu0 0.0
  %1623 = vmatprep.subr.mxu0 0.0
  %1624 = vmatpush2.msra.mxu0 0.0
  %1625 = vmatprep.subr.mxu0 0.0
  %1626 = vmatpush2.msra.mxu0 0.0
  %1627 = vmatprep.subr.mxu0 0.0
  %1628 = vmatpush2.msra.mxu0 0.0
  %1629 = vmatprep.subr.mxu0 0.0
  %1630 = vmatpush2.msra.mxu0 0.0
  %1631 = vmatprep.subr.mxu0 0.0
  %1632 = vmatpush2.msra.mxu0 0.0
  %1633 = vmatprep.subr.mxu0 0.0
  %1634 = vmatpush2.msra.mxu0 0.0
  %1635 = vmatprep.subr.mxu0 0.0
  %1636 = vmatpush2.msra.mxu0 0.0
  %1637 = vmatprep.subr.mxu0 0.0
  %1638 = vmatpush2.msra.mxu0 0.0
  %1639 = vmatprep.mubr.f32.mxu0 0.0
  %1640 = vmatmul.mubr.f32.gmra.mxu0 %v1564
  %v1641 = vpop.f32.mrf.mxu0
  %v1642 = vadd.f32 0.0, %v1641
  %v1643 = vpop.f32.mrf.mxu0
  %1644 = vmatprep.mubr.f32.mxu0 0.0
  %1645 = vmatmul.mubr.f32.gmra.mxu0 %v1567
  %v1646 = vpop.f32.mrf.mxu0
  %v1647 = vadd.f32 0.0, %v1646
  %v1648 = vpop.f32.mrf.mxu0
  %1649 = vmatprep.mubr.f32.mxu0 0.0
  %1650 = vmatmul.mubr.f32.gmra.mxu0 %v1570
  %v1651 = vpop.f32.mrf.mxu0
  %v1652 = vadd.f32 0.0, %v1651
  %v1653 = vpop.f32.mrf.mxu0
  %1654 = vmatprep.mubr.f32.mxu0 0.0
  %1655 = vmatmul.mubr.f32.gmra.mxu0 %v1573
  %v1656 = vpop.f32.mrf.mxu0
  %v1657 = vadd.f32 0.0, %v1656
  %v1658 = vpop.f32.mrf.mxu0
  %1659 = vdwg.mxu0
  %v1660 = vmul.f32 %v1539, %v1552
  %v1661 = vmul.f32 %v1540, %v1554
  %v1662 = vmul.f32 %v1541, %v1548
  %v1663 = vmul.f32 %v1542, %v1550
  %v1665 = vsel %vm116, %v1660, 0
  %v1668 = vsel %vm116, %v1661, 0
  %v1671 = vsel %vm116, %v1662, 0
  %v1674 = vsel %vm116, %v1663, 0
  %1676 = vmatprep.subr.mxu0 0.0
  %1677 = vmatpush1.msra.mxu0 0.0
  %1678 = vmatprep.subr.mxu0 0.0
  %1679 = vmatpush1.msra.mxu0 0.0
  %1680 = vmatprep.subr.mxu0 0.0
  %1681 = vmatpush1.msra.mxu0 0.0
  %1682 = vmatprep.subr.mxu0 0.0
  %1683 = vmatpush1.msra.mxu0 0.0
  %1684 = vmatprep.subr.mxu0 0.0
  %1685 = vmatpush1.msra.mxu0 0.0
  %1686 = vmatprep.subr.mxu0 0.0
  %1687 = vmatpush1.msra.mxu0 0.0
  %1688 = vmatprep.subr.mxu0 0.0
  %1689 = vmatpush1.msra.mxu0 0.0
  %1690 = vmatprep.subr.mxu0 0.0
  %1691 = vmatpush1.msra.mxu0 0.0
  %1692 = vmatprep.subr.mxu0 0.0
  %1693 = vmatpush1.msra.mxu0 0.0
  %1694 = vmatprep.subr.mxu0 0.0
  %1695 = vmatpush1.msra.mxu0 0.0
  %1696 = vmatprep.subr.mxu0 0.0
  %1697 = vmatpush1.msra.mxu0 %v91
  %1698 = vmatprep.subr.mxu0 0.0
  %1699 = vmatpush1.msra.mxu0 %v90
  %1700 = vmatprep.subr.mxu0 0.0
  %1701 = vmatpush1.msra.mxu0 %v89
  %1702 = vmatprep.subr.mxu0 0.0
  %1703 = vmatpush1.msra.mxu0 %v88
  %1704 = vmatprep.subr.mxu0 0.0
  %1705 = vmatpush1.msra.mxu0 %v87
  %1706 = vmatprep.subr.mxu0 0.0
  %1707 = vmatpush1.msra.mxu0 %v86
  %1708 = vmatprep.subr.mxu0 0.0
  %1709 = vmatpush2.msra.mxu0 0.0
  %1710 = vmatprep.subr.mxu0 0.0
  %1711 = vmatpush2.msra.mxu0 0.0
  %1712 = vmatprep.subr.mxu0 0.0
  %1713 = vmatpush2.msra.mxu0 0.0
  %1714 = vmatprep.subr.mxu0 0.0
  %1715 = vmatpush2.msra.mxu0 0.0
  %1716 = vmatprep.subr.mxu0 0.0
  %1717 = vmatpush2.msra.mxu0 0.0
  %1718 = vmatprep.subr.mxu0 0.0
  %1719 = vmatpush2.msra.mxu0 0.0
  %1720 = vmatprep.subr.mxu0 0.0
  %1721 = vmatpush2.msra.mxu0 0.0
  %1722 = vmatprep.subr.mxu0 0.0
  %1723 = vmatpush2.msra.mxu0 0.0
  %1724 = vmatprep.subr.mxu0 0.0
  %1725 = vmatpush2.msra.mxu0 0.0
  %1726 = vmatprep.subr.mxu0 0.0
  %1727 = vmatpush2.msra.mxu0 0.0
  %1728 = vmatprep.subr.mxu0 0.0
  %1729 = vmatpush2.msra.mxu0 0.0
  %1730 = vmatprep.subr.mxu0 0.0
  %1731 = vmatpush2.msra.mxu0 0.0
  %1732 = vmatprep.subr.mxu0 0.0
  %1733 = vmatpush2.msra.mxu0 0.0
  %1734 = vmatprep.subr.mxu0 0.0
  %1735 = vmatpush2.msra.mxu0 0.0
  %1736 = vmatprep.subr.mxu0 0.0
  %1737 = vmatpush2.msra.mxu0 0.0
  %1738 = vmatprep.subr.mxu0 0.0
  %1739 = vmatpush2.msra.mxu0 0.0
  %1740 = vmatprep.mubr.f32.mxu0 0.0
  %1741 = vmatmul.mubr.f32.gmra.mxu0 %v1665
  %v1742 = vpop.f32.mrf.mxu0
  %v1743 = vadd.f32 0.0, %v1742
  %v1744 = vpop.f32.mrf.mxu0
  %1745 = vmatprep.mubr.f32.mxu0 0.0
  %1746 = vmatmul.mubr.f32.gmra.mxu0 %v1668
  %v1747 = vpop.f32.mrf.mxu0
  %v1748 = vadd.f32 0.0, %v1747
  %v1749 = vpop.f32.mrf.mxu0
  %1750 = vmatprep.mubr.f32.mxu0 0.0
  %1751 = vmatmul.mubr.f32.gmra.mxu0 %v1671
  %v1752 = vpop.f32.mrf.mxu0
  %v1753 = vadd.f32 0.0, %v1752
  %v1754 = vpop.f32.mrf.mxu0
  %1755 = vmatprep.mubr.f32.mxu0 0.0
  %1756 = vmatmul.mubr.f32.gmra.mxu0 %v1674
  %v1757 = vpop.f32.mrf.mxu0
  %v1758 = vadd.f32 0.0, %v1757
  %v1759 = vpop.f32.mrf.mxu0
  %1760 = vdwg.mxu0
  %v1761 = vmax.f32 %v1642, %v1743
  %v1762 = vmax.f32 %v1647, %v1748
  %v1763 = vmax.f32 %v1652, %v1753
  %v1764 = vmax.f32 %v1657, %v1758
  %v1765 = vsub.f32 %v1642, %v1761
  %v1766 = vsub.f32 %v1647, %v1762
  %v1767 = vsub.f32 %v1652, %v1763
  %v1768 = vsub.f32 %v1657, %v1764
  %v1769 = vmul.f32 %v1765, 1.442695
  %v1770 = vpow.pop %v1769
  %v1771 = vmul.f32 %v1766, 1.442695
  %v1772 = vpow.pop %v1771
  %v1773 = vmul.f32 %v1767, 1.442695
  %v1774 = vpow.pop %v1773
  %v1775 = vmul.f32 %v1768, 1.442695
  %v1776 = vpow.pop %v1775
  %v1777 = vsub.f32 %v1743, %v1761
  %v1778 = vsub.f32 %v1748, %v1762
  %v1779 = vsub.f32 %v1753, %v1763
  %v1780 = vsub.f32 %v1758, %v1764
  %v1781 = vmul.f32 %v1777, 1.442695
  %v1782 = vpow.pop %v1781
  %v1783 = vmul.f32 %v1778, 1.442695
  %v1784 = vpow.pop %v1783
  %v1785 = vmul.f32 %v1779, 1.442695
  %v1786 = vpow.pop %v1785
  %v1787 = vmul.f32 %v1780, 1.442695
  %v1788 = vpow.pop %v1787
  %v1789 = vadd.f32 %v1770, %v1782
  %v1790 = vadd.f32 %v1772, %v1784
  %v1791 = vadd.f32 %v1774, %v1786
  %v1792 = vadd.f32 %v1776, %v1788
  %v1793 = vrcp.pop %v1789
  %v1794 = vrcp.pop %v1790
  %v1795 = vrcp.pop %v1791
  %v1796 = vrcp.pop %v1792
  %v1797 = vmul.f32 %v1770, %v1793
  %v1798 = vmul.f32 %v1772, %v1794
  %v1799 = vmul.f32 %v1774, %v1795
  %v1800 = vmul.f32 %v1776, %v1796
  %v1802 = vsel %vm676, %v1797, 0
  %v1805 = vsel %vm676, %v1798, 0
  %v1808 = vsel %vm676, %v1799, 0
  %v1811 = vsel %vm676, %v1800, 0
  %1813 = vmatprep.subr.mxu0 0.0
  %1814 = vmatpush1.msra.mxu0 0.0
  %1815 = vmatprep.subr.mxu0 0.0
  %1816 = vmatpush1.msra.mxu0 0.0
  %1817 = vmatprep.subr.mxu0 0.0
  %1818 = vmatpush1.msra.mxu0 0.0
  %1819 = vmatprep.subr.mxu0 0.0
  %1820 = vmatpush1.msra.mxu0 0.0
  %1821 = vmatprep.subr.mxu0 0.0
  %1822 = vmatpush1.msra.mxu0 0.0
  %1823 = vmatprep.subr.mxu0 0.0
  %1824 = vmatpush1.msra.mxu0 0.0
  %1825 = vmatprep.subr.mxu0 0.0
  %1826 = vmatpush1.msra.mxu0 0.0
  %1827 = vmatprep.subr.mxu0 0.0
  %1828 = vmatpush1.msra.mxu0 0.0
  %1829 = vmatprep.subr.mxu0 0.0
  %1830 = vmatpush1.msra.mxu0 0.0
  %1831 = vmatprep.subr.mxu0 0.0
  %1832 = vmatpush1.msra.mxu0 0.0
  %1833 = vmatprep.subr.mxu0 0.0
  %1834 = vmatpush1.msra.mxu0 0.0
  %1835 = vmatprep.subr.mxu0 0.0
  %1836 = vmatpush1.msra.mxu0 0.0
  %1837 = vmatprep.subr.mxu0 0.0
  %1838 = vmatpush1.msra.mxu0 0.0
  %1839 = vmatprep.subr.mxu0 0.0
  %1840 = vmatpush1.msra.mxu0 0.0
  %1841 = vmatprep.subr.mxu0 0.0
  %1842 = vmatpush1.msra.mxu0 0.0
  %1843 = vmatprep.subr.mxu0 0.0
  %1844 = vmatpush1.msra.mxu0 %v691
  %1845 = vmatprep.subr.mxu0 0.0
  %1846 = vmatpush2.msra.mxu0 0.0
  %1847 = vmatprep.subr.mxu0 0.0
  %1848 = vmatpush2.msra.mxu0 0.0
  %1849 = vmatprep.subr.mxu0 0.0
  %1850 = vmatpush2.msra.mxu0 0.0
  %1851 = vmatprep.subr.mxu0 0.0
  %1852 = vmatpush2.msra.mxu0 0.0
  %1853 = vmatprep.subr.mxu0 0.0
  %1854 = vmatpush2.msra.mxu0 0.0
  %1855 = vmatprep.subr.mxu0 0.0
  %1856 = vmatpush2.msra.mxu0 0.0
  %1857 = vmatprep.subr.mxu0 0.0
  %1858 = vmatpush2.msra.mxu0 0.0
  %1859 = vmatprep.subr.mxu0 0.0
  %1860 = vmatpush2.msra.mxu0 0.0
  %1861 = vmatprep.subr.mxu0 0.0
  %1862 = vmatpush2.msra.mxu0 0.0
  %1863 = vmatprep.subr.mxu0 0.0
  %1864 = vmatpush2.msra.mxu0 0.0
  %1865 = vmatprep.subr.mxu0 0.0
  %1866 = vmatpush2.msra.mxu0 0.0
  %1867 = vmatprep.subr.mxu0 0.0
  %1868 = vmatpush2.msra.mxu0 0.0
  %1869 = vmatprep.subr.mxu0 0.0
  %1870 = vmatpush2.msra.mxu0 0.0
  %1871 = vmatprep.subr.mxu0 0.0
  %1872 = vmatpush2.msra.mxu0 0.0
  %1873 = vmatprep.subr.mxu0 0.0
  %1874 = vmatpush2.msra.mxu0 0.0
  %1875 = vmatprep.subr.mxu0 0.0
  %1876 = vmatpush2.msra.mxu0 0.0
  %1877 = vmatprep.mubr.f32.mxu0 0.0
  %1878 = vmatmul.mubr.f32.gmra.mxu0 %v1802
  %v1879 = vpop.f32.mrf.mxu0
  %v1880 = vadd.f32 0.0, %v1879
  %v1881 = vpop.f32.mrf.mxu0
  %1882 = vmatprep.mubr.f32.mxu0 0.0
  %1883 = vmatmul.mubr.f32.gmra.mxu0 %v1805
  %v1884 = vpop.f32.mrf.mxu0
  %v1885 = vadd.f32 0.0, %v1884
  %v1886 = vpop.f32.mrf.mxu0
  %1887 = vmatprep.mubr.f32.mxu0 0.0
  %1888 = vmatmul.mubr.f32.gmra.mxu0 %v1808
  %v1889 = vpop.f32.mrf.mxu0
  %v1890 = vadd.f32 0.0, %v1889
  %v1891 = vpop.f32.mrf.mxu0
  %1892 = vmatprep.mubr.f32.mxu0 0.0
  %1893 = vmatmul.mubr.f32.gmra.mxu0 %v1811
  %v1894 = vpop.f32.mrf.mxu0
  %v1895 = vadd.f32 0.0, %v1894
  %v1896 = vpop.f32.mrf.mxu0
  %1897 = vdwg.mxu0
  %1902 = vrot.lane.b32.xlu0 %v1517, 32
  %v1903 = vpop.permute.xlu0 %1902
  %1904 = vrot.lane.b32.xlu0 %v1519, 32
  %v1905 = vpop.permute.xlu0 %1904
  %1906 = vrot.lane.b32.xlu0 %v1523, 32
  %v1907 = vpop.permute.xlu0 %1906
  %1908 = vrot.lane.b32.xlu0 %v1525, 32
  %v1909 = vpop.permute.xlu0 %1908
  %1910 = vrot.lane.b32.xlu0 %v1529, 32
  %v1911 = vpop.permute.xlu0 %1910
  %1912 = vrot.lane.b32.xlu0 %v1531, 32
  %v1913 = vpop.permute.xlu0 %1912
  %1914 = vrot.lane.b32.xlu0 %v1535, 32
  %v1915 = vpop.permute.xlu0 %1914
  %1916 = vrot.lane.b32.xlu0 %v1537, 32
  %v1917 = vpop.permute.xlu0 %1916
  %v1918 = vsel %vm798, %v1903, %v1905
  %v1919 = vsel %vm798, %v1907, %v1909
  %v1920 = vsel %vm798, %v1911, %v1913
  %v1921 = vsel %vm798, %v1915, %v1917
  %v1926 = vmul.f32 %v1880, %v1918
  %v1927 = vmul.f32 %v1885, %v1919
  %v1928 = vmul.f32 %v1890, %v1920
  %v1929 = vmul.f32 %v1895, %v1921
  %v1930 = vmul.f32 %v1782, %v1793
  %v1931 = vmul.f32 %v1784, %v1794
  %v1932 = vmul.f32 %v1786, %v1795
  %v1933 = vmul.f32 %v1788, %v1796
  %v1935 = vsel %vm676, %v1930, 0
  %v1938 = vsel %vm676, %v1931, 0
  %v1941 = vsel %vm676, %v1932, 0
  %v1944 = vsel %vm676, %v1933, 0
  %1946 = vmatprep.subr.mxu0 0.0
  %1947 = vmatpush1.msra.mxu0 0.0
  %1948 = vmatprep.subr.mxu0 0.0
  %1949 = vmatpush1.msra.mxu0 0.0
  %1950 = vmatprep.subr.mxu0 0.0
  %1951 = vmatpush1.msra.mxu0 0.0
  %1952 = vmatprep.subr.mxu0 0.0
  %1953 = vmatpush1.msra.mxu0 0.0
  %1954 = vmatprep.subr.mxu0 0.0
  %1955 = vmatpush1.msra.mxu0 0.0
  %1956 = vmatprep.subr.mxu0 0.0
  %1957 = vmatpush1.msra.mxu0 0.0
  %1958 = vmatprep.subr.mxu0 0.0
  %1959 = vmatpush1.msra.mxu0 0.0
  %1960 = vmatprep.subr.mxu0 0.0
  %1961 = vmatpush1.msra.mxu0 0.0
  %1962 = vmatprep.subr.mxu0 0.0
  %1963 = vmatpush1.msra.mxu0 0.0
  %1964 = vmatprep.subr.mxu0 0.0
  %1965 = vmatpush1.msra.mxu0 0.0
  %1966 = vmatprep.subr.mxu0 0.0
  %1967 = vmatpush1.msra.mxu0 0.0
  %1968 = vmatprep.subr.mxu0 0.0
  %1969 = vmatpush1.msra.mxu0 0.0
  %1970 = vmatprep.subr.mxu0 0.0
  %1971 = vmatpush1.msra.mxu0 0.0
  %1972 = vmatprep.subr.mxu0 0.0
  %1973 = vmatpush1.msra.mxu0 0.0
  %1974 = vmatprep.subr.mxu0 0.0
  %1975 = vmatpush1.msra.mxu0 0.0
  %1976 = vmatprep.subr.mxu0 0.0
  %1977 = vmatpush1.msra.mxu0 %v691
  %1978 = vmatprep.subr.mxu0 0.0
  %1979 = vmatpush2.msra.mxu0 0.0
  %1980 = vmatprep.subr.mxu0 0.0
  %1981 = vmatpush2.msra.mxu0 0.0
  %1982 = vmatprep.subr.mxu0 0.0
  %1983 = vmatpush2.msra.mxu0 0.0
  %1984 = vmatprep.subr.mxu0 0.0
  %1985 = vmatpush2.msra.mxu0 0.0
  %1986 = vmatprep.subr.mxu0 0.0
  %1987 = vmatpush2.msra.mxu0 0.0
  %1988 = vmatprep.subr.mxu0 0.0
  %1989 = vmatpush2.msra.mxu0 0.0
  %1990 = vmatprep.subr.mxu0 0.0
  %1991 = vmatpush2.msra.mxu0 0.0
  %1992 = vmatprep.subr.mxu0 0.0
  %1993 = vmatpush2.msra.mxu0 0.0
  %1994 = vmatprep.subr.mxu0 0.0
  %1995 = vmatpush2.msra.mxu0 0.0
  %1996 = vmatprep.subr.mxu0 0.0
  %1997 = vmatpush2.msra.mxu0 0.0
  %1998 = vmatprep.subr.mxu0 0.0
  %1999 = vmatpush2.msra.mxu0 0.0
  %2000 = vmatprep.subr.mxu0 0.0
  %2001 = vmatpush2.msra.mxu0 0.0
  %2002 = vmatprep.subr.mxu0 0.0
  %2003 = vmatpush2.msra.mxu0 0.0
  %2004 = vmatprep.subr.mxu0 0.0
  %2005 = vmatpush2.msra.mxu0 0.0
  %2006 = vmatprep.subr.mxu0 0.0
  %2007 = vmatpush2.msra.mxu0 0.0
  %2008 = vmatprep.subr.mxu0 0.0
  %2009 = vmatpush2.msra.mxu0 0.0
  %2010 = vmatprep.mubr.f32.mxu0 0.0
  %2011 = vmatmul.mubr.f32.gmra.mxu0 %v1935
  %v2012 = vpop.f32.mrf.mxu0
  %v2013 = vadd.f32 0.0, %v2012
  %v2014 = vpop.f32.mrf.mxu0
  %2015 = vmatprep.mubr.f32.mxu0 0.0
  %2016 = vmatmul.mubr.f32.gmra.mxu0 %v1938
  %v2017 = vpop.f32.mrf.mxu0
  %v2018 = vadd.f32 0.0, %v2017
  %v2019 = vpop.f32.mrf.mxu0
  %2020 = vmatprep.mubr.f32.mxu0 0.0
  %2021 = vmatmul.mubr.f32.gmra.mxu0 %v1941
  %v2022 = vpop.f32.mrf.mxu0
  %v2023 = vadd.f32 0.0, %v2022
  %v2024 = vpop.f32.mrf.mxu0
  %2025 = vmatprep.mubr.f32.mxu0 0.0
  %2026 = vmatmul.mubr.f32.gmra.mxu0 %v1944
  %v2027 = vpop.f32.mrf.mxu0
  %v2028 = vadd.f32 0.0, %v2027
  %v2029 = vpop.f32.mrf.mxu0
  %2030 = vdwg.mxu0
  %v2031 = vmul.f32 %v2013, %v1920
  %v2032 = vmul.f32 %v2018, %v1921
  %v2033 = vmul.f32 %v2023, %v1918
  %v2034 = vmul.f32 %v2028, %v1919
  %v2035 = vadd.f32 %v1926, %v2031
  %v2036 = vadd.f32 %v1927, %v2032
  %v2037 = vadd.f32 %v1928, %v2033
  %v2038 = vadd.f32 %v1929, %v2034
  %s2039 = scalar_lea.vmem %s7, 48
  %v2040 = vld [vmem:[%s2039] sm:$0xff]
  %v2041 = vld [vmem:[%s2039 + $0x8] sm:$0xff]
  %v2042 = vld [vmem:[%s2039 + $0x10] sm:$0xff]
  %v2043 = vld [vmem:[%s2039 + $0x18] sm:$0xff]
  %v2044 = vld [vmem:[%s2039 + $0x20] sm:$0xff]
  %v2045 = vld [vmem:[%s2039 + $0x28] sm:$0xff]
  %s2046 = scalar_lea.vmem %s8, 1
  %v2047 = vld [vmem:[%s2046] sm:$0x1]
  %v2049 = vlaneseq
  %v2050 = vshrl.u32 %v2049, 7
  %v2051 = vsub.s32 0, %v2050
  %v2052 = vrot.slane %v2047, %v2051
  %v2055 = vsel %vm116, %v2035, 0
  %v2058 = vsel %vm116, %v2036, 0
  %v2061 = vsel %vm116, %v2037, 0
  %v2064 = vsel %vm116, %v2038, 0
  %2066 = vmatprep.subr.mxu0 0.0
  %2067 = vmatpush1.msra.mxu0 0.0
  %2068 = vmatprep.subr.mxu0 0.0
  %2069 = vmatpush1.msra.mxu0 0.0
  %2070 = vmatprep.subr.mxu0 0.0
  %2071 = vmatpush1.msra.mxu0 0.0
  %2072 = vmatprep.subr.mxu0 0.0
  %2073 = vmatpush1.msra.mxu0 0.0
  %2074 = vmatprep.subr.mxu0 0.0
  %2075 = vmatpush1.msra.mxu0 0.0
  %2076 = vmatprep.subr.mxu0 0.0
  %2077 = vmatpush1.msra.mxu0 0.0
  %2078 = vmatprep.subr.mxu0 0.0
  %2079 = vmatpush1.msra.mxu0 0.0
  %2080 = vmatprep.subr.mxu0 0.0
  %2081 = vmatpush1.msra.mxu0 0.0
  %2082 = vmatprep.subr.mxu0 0.0
  %2083 = vmatpush1.msra.mxu0 0.0
  %2084 = vmatprep.subr.mxu0 0.0
  %2085 = vmatpush1.msra.mxu0 0.0
  %2086 = vmatprep.subr.mxu0 0.0
  %2087 = vmatpush1.msra.mxu0 %v2045
  %2088 = vmatprep.subr.mxu0 0.0
  %2089 = vmatpush1.msra.mxu0 %v2044
  %2090 = vmatprep.subr.mxu0 0.0
  %2091 = vmatpush1.msra.mxu0 %v2043
  %2092 = vmatprep.subr.mxu0 0.0
  %2093 = vmatpush1.msra.mxu0 %v2042
  %2094 = vmatprep.subr.mxu0 0.0
  %2095 = vmatpush1.msra.mxu0 %v2041
  %2096 = vmatprep.subr.mxu0 0.0
  %2097 = vmatpush1.msra.mxu0 %v2040
  %2098 = vmatprep.subr.mxu0 0.0
  %2099 = vmatpush2.msra.mxu0 0.0
  %2100 = vmatprep.subr.mxu0 0.0
  %2101 = vmatpush2.msra.mxu0 0.0
  %2102 = vmatprep.subr.mxu0 0.0
  %2103 = vmatpush2.msra.mxu0 0.0
  %2104 = vmatprep.subr.mxu0 0.0
  %2105 = vmatpush2.msra.mxu0 0.0
  %2106 = vmatprep.subr.mxu0 0.0
  %2107 = vmatpush2.msra.mxu0 0.0
  %2108 = vmatprep.subr.mxu0 0.0
  %2109 = vmatpush2.msra.mxu0 0.0
  %2110 = vmatprep.subr.mxu0 0.0
  %2111 = vmatpush2.msra.mxu0 0.0
  %2112 = vmatprep.subr.mxu0 0.0
  %2113 = vmatpush2.msra.mxu0 0.0
  %2114 = vmatprep.subr.mxu0 0.0
  %2115 = vmatpush2.msra.mxu0 0.0
  %2116 = vmatprep.subr.mxu0 0.0
  %2117 = vmatpush2.msra.mxu0 0.0
  %2118 = vmatprep.subr.mxu0 0.0
  %2119 = vmatpush2.msra.mxu0 0.0
  %2120 = vmatprep.subr.mxu0 0.0
  %2121 = vmatpush2.msra.mxu0 0.0
  %2122 = vmatprep.subr.mxu0 0.0
  %2123 = vmatpush2.msra.mxu0 0.0
  %2124 = vmatprep.subr.mxu0 0.0
  %2125 = vmatpush2.msra.mxu0 0.0
  %2126 = vmatprep.subr.mxu0 0.0
  %2127 = vmatpush2.msra.mxu0 0.0
  %2128 = vmatprep.subr.mxu0 0.0
  %2129 = vmatpush2.msra.mxu0 0.0
  %2130 = vmatprep.mubr.f32.mxu0 0.0
  %2131 = vmatmul.mubr.f32.gmra.mxu0 %v2055
  %v2132 = vpop.f32.mrf.mxu0
  %v2133 = vadd.f32 %v2052, %v2132
  %v2134 = vpop.f32.mrf.mxu0
  %2135 = vmatprep.mubr.f32.mxu0 0.0
  %2136 = vmatmul.mubr.f32.gmra.mxu0 %v2058
  %v2137 = vpop.f32.mrf.mxu0
  %v2138 = vadd.f32 %v2052, %v2137
  %v2139 = vpop.f32.mrf.mxu0
  %2140 = vmatprep.mubr.f32.mxu0 0.0
  %2141 = vmatmul.mubr.f32.gmra.mxu0 %v2061
  %v2142 = vpop.f32.mrf.mxu0
  %v2143 = vadd.f32 %v2052, %v2142
  %v2144 = vpop.f32.mrf.mxu0
  %2145 = vmatprep.mubr.f32.mxu0 0.0
  %2146 = vmatmul.mubr.f32.gmra.mxu0 %v2064
  %v2147 = vpop.f32.mrf.mxu0
  %v2148 = vadd.f32 %v2052, %v2147
  %v2149 = vpop.f32.mrf.mxu0
  %2150 = vdwg.mxu0
  %v2151 = vadd.f32 %v1332, %v2133
  %v2152 = vadd.f32 %v1333, %v2138
  %v2153 = vadd.f32 %v1334, %v2143
  %v2154 = vadd.f32 %v1335, %v2148
  %s2155 = scalar_lea.vmem %s9, 1
  %v2156 = vld [vmem:[%s2155] sm:$0x1]
  %s2157 = scalar_lea.vmem %s10, 1
  %v2158 = vld [vmem:[%s2157] sm:$0x1]
  %v2159 = vsel %vm116, %v2151, 0.0
  %2160 = vadd.xlane.f32.xlu0 %v2159
  %v2161 = vpop.xlane.xlu0 %2160
  %v2162 = vsel %vm116, %v2152, 0.0
  %2163 = vadd.xlane.f32.xlu0 %v2162
  %v2164 = vpop.xlane.xlu0 %2163
  %v2165 = vsel %vm116, %v2153, 0.0
  %2166 = vadd.xlane.f32.xlu0 %v2165
  %v2167 = vpop.xlane.xlu0 %2166
  %v2168 = vsel %vm116, %v2154, 0.0
  %2169 = vadd.xlane.f32.xlu0 %v2168
  %v2170 = vpop.xlane.xlu0 %2169
  %v2171 = vmul.f32 %v2161, %v228
  %v2172 = vmul.f32 %v2164, %v228
  %v2173 = vmul.f32 %v2167, %v228
  %v2174 = vmul.f32 %v2170, %v228
  %v2175 = vsub.f32 %v2151, %v2171
  %v2176 = vsub.f32 %v2152, %v2172
  %v2177 = vsub.f32 %v2153, %v2173
  %v2178 = vsub.f32 %v2154, %v2174
  %v2179 = vmul.f32 %v2175, %v2175
  %v2180 = vmul.f32 %v2176, %v2176
  %v2181 = vmul.f32 %v2177, %v2177
  %v2182 = vmul.f32 %v2178, %v2178
  %v2183 = vsel %vm116, %v2179, 0.0
  %2184 = vadd.xlane.f32.xlu0 %v2183
  %v2185 = vpop.xlane.xlu0 %2184
  %v2186 = vsel %vm116, %v2180, 0.0
  %2187 = vadd.xlane.f32.xlu0 %v2186
  %v2188 = vpop.xlane.xlu0 %2187
  %v2189 = vsel %vm116, %v2181, 0.0
  %2190 = vadd.xlane.f32.xlu0 %v2189
  %v2191 = vpop.xlane.xlu0 %2190
  %v2192 = vsel %vm116, %v2182, 0.0
  %2193 = vadd.xlane.f32.xlu0 %v2192
  %v2194 = vpop.xlane.xlu0 %2193
  %v2195 = vmul.f32 %v2185, %v228
  %v2196 = vmul.f32 %v2188, %v228
  %v2197 = vmul.f32 %v2191, %v228
  %v2198 = vmul.f32 %v2194, %v228
  %v2199 = vadd.f32 %v2195, 1e-05
  %v2200 = vadd.f32 %v2196, 1e-05
  %v2201 = vadd.f32 %v2197, 1e-05
  %v2202 = vadd.f32 %v2198, 1e-05
  %v2203 = vrsqrt.pop %v2199
  %v2204 = vrsqrt.pop %v2200
  %v2205 = vrsqrt.pop %v2201
  %v2206 = vrsqrt.pop %v2202
  %v2207 = vmul.f32 %v2175, %v2203
  %v2208 = vmul.f32 %v2176, %v2204
  %v2209 = vmul.f32 %v2177, %v2205
  %v2210 = vmul.f32 %v2178, %v2206
  %v2212 = vlaneseq
  %v2213 = vshrl.u32 %v2212, 7
  %v2214 = vsub.s32 0, %v2213
  %v2215 = vrot.slane %v2156, %v2214
  %v2217 = vmul.f32 %v2207, %v2215
  %v2218 = vmul.f32 %v2208, %v2215
  %v2219 = vmul.f32 %v2209, %v2215
  %v2220 = vmul.f32 %v2210, %v2215
  %v2222 = vlaneseq
  %v2223 = vshrl.u32 %v2222, 7
  %v2224 = vsub.s32 0, %v2223
  %v2225 = vrot.slane %v2158, %v2224
  %v2227 = vadd.f32 %v2217, %v2225
  %v2228 = vadd.f32 %v2218, %v2225
  %v2229 = vadd.f32 %v2219, %v2225
  %v2230 = vadd.f32 %v2220, %v2225
  %s2231 = scalar_lea.vmem %s11, 48
  %v2232 = vld [vmem:[%s2231] sm:$0xff]
  %v2233 = vld [vmem:[%s2231 + $0x8] sm:$0xff]
  %v2234 = vld [vmem:[%s2231 + $0x10] sm:$0xff]
  %v2235 = vld [vmem:[%s2231 + $0x18] sm:$0xff]
  %v2236 = vld [vmem:[%s2231 + $0x20] sm:$0xff]
  %v2237 = vld [vmem:[%s2231 + $0x28] sm:$0xff]
  %s2238 = scalar_lea.vmem %s12, 1
  %v2239 = vld [vmem:[%s2238] sm:$0x1]
  %v2241 = vlaneseq
  %v2242 = vshrl.u32 %v2241, 7
  %v2243 = vsub.s32 0, %v2242
  %v2244 = vrot.slane %v2239, %v2243
  %v2247 = vsel %vm116, %v2227, 0
  %v2250 = vsel %vm116, %v2228, 0
  %v2253 = vsel %vm116, %v2229, 0
  %v2256 = vsel %vm116, %v2230, 0
  %2258 = vmatprep.subr.mxu0 0.0
  %2259 = vmatpush1.msra.mxu0 0.0
  %2260 = vmatprep.subr.mxu0 0.0
  %2261 = vmatpush1.msra.mxu0 0.0
  %2262 = vmatprep.subr.mxu0 0.0
  %2263 = vmatpush1.msra.mxu0 0.0
  %2264 = vmatprep.subr.mxu0 0.0
  %2265 = vmatpush1.msra.mxu0 0.0
  %2266 = vmatprep.subr.mxu0 0.0
  %2267 = vmatpush1.msra.mxu0 0.0
  %2268 = vmatprep.subr.mxu0 0.0
  %2269 = vmatpush1.msra.mxu0 0.0
  %2270 = vmatprep.subr.mxu0 0.0
  %2271 = vmatpush1.msra.mxu0 0.0
  %2272 = vmatprep.subr.mxu0 0.0
  %2273 = vmatpush1.msra.mxu0 0.0
  %2274 = vmatprep.subr.mxu0 0.0
  %2275 = vmatpush1.msra.mxu0 0.0
  %2276 = vmatprep.subr.mxu0 0.0
  %2277 = vmatpush1.msra.mxu0 0.0
  %2278 = vmatprep.subr.mxu0 0.0
  %2279 = vmatpush1.msra.mxu0 %v2237
  %2280 = vmatprep.subr.mxu0 0.0
  %2281 = vmatpush1.msra.mxu0 %v2236
  %2282 = vmatprep.subr.mxu0 0.0
  %2283 = vmatpush1.msra.mxu0 %v2235
  %2284 = vmatprep.subr.mxu0 0.0
  %2285 = vmatpush1.msra.mxu0 %v2234
  %2286 = vmatprep.subr.mxu0 0.0
  %2287 = vmatpush1.msra.mxu0 %v2233
  %2288 = vmatprep.subr.mxu0 0.0
  %2289 = vmatpush1.msra.mxu0 %v2232
  %2290 = vmatprep.subr.mxu0 0.0
  %2291 = vmatpush2.msra.mxu0 0.0
  %2292 = vmatprep.subr.mxu0 0.0
  %2293 = vmatpush2.msra.mxu0 0.0
  %2294 = vmatprep.subr.mxu0 0.0
  %2295 = vmatpush2.msra.mxu0 0.0
  %2296 = vmatprep.subr.mxu0 0.0
  %2297 = vmatpush2.msra.mxu0 0.0
  %2298 = vmatprep.subr.mxu0 0.0
  %2299 = vmatpush2.msra.mxu0 0.0
  %2300 = vmatprep.subr.mxu0 0.0
  %2301 = vmatpush2.msra.mxu0 0.0
  %2302 = vmatprep.subr.mxu0 0.0
  %2303 = vmatpush2.msra.mxu0 0.0
  %2304 = vmatprep.subr.mxu0 0.0
  %2305 = vmatpush2.msra.mxu0 0.0
  %2306 = vmatprep.subr.mxu0 0.0
  %2307 = vmatpush2.msra.mxu0 0.0
  %2308 = vmatprep.subr.mxu0 0.0
  %2309 = vmatpush2.msra.mxu0 0.0
  %2310 = vmatprep.subr.mxu0 0.0
  %2311 = vmatpush2.msra.mxu0 0.0
  %2312 = vmatprep.subr.mxu0 0.0
  %2313 = vmatpush2.msra.mxu0 0.0
  %2314 = vmatprep.subr.mxu0 0.0
  %2315 = vmatpush2.msra.mxu0 0.0
  %2316 = vmatprep.subr.mxu0 0.0
  %2317 = vmatpush2.msra.mxu0 0.0
  %2318 = vmatprep.subr.mxu0 0.0
  %2319 = vmatpush2.msra.mxu0 0.0
  %2320 = vmatprep.subr.mxu0 0.0
  %2321 = vmatpush2.msra.mxu0 0.0
  %2322 = vmatprep.mubr.f32.mxu0 0.0
  %2323 = vmatmul.mubr.f32.gmra.mxu0 %v2247
  %v2324 = vpop.f32.mrf.mxu0
  %v2325 = vadd.f32 %v2244, %v2324
  %v2326 = vpop.f32.mrf.mxu0
  %2327 = vmatprep.mubr.f32.mxu0 0.0
  %2328 = vmatmul.mubr.f32.gmra.mxu0 %v2250
  %v2329 = vpop.f32.mrf.mxu0
  %v2330 = vadd.f32 %v2244, %v2329
  %v2331 = vpop.f32.mrf.mxu0
  %2332 = vmatprep.mubr.f32.mxu0 0.0
  %2333 = vmatmul.mubr.f32.gmra.mxu0 %v2253
  %v2334 = vpop.f32.mrf.mxu0
  %v2335 = vadd.f32 %v2244, %v2334
  %v2336 = vpop.f32.mrf.mxu0
  %2337 = vmatprep.mubr.f32.mxu0 0.0
  %2338 = vmatmul.mubr.f32.gmra.mxu0 %v2256
  %v2339 = vpop.f32.mrf.mxu0
  %v2340 = vadd.f32 %v2244, %v2339
  %v2341 = vpop.f32.mrf.mxu0
  %2342 = vdwg.mxu0
  %v2343 = vmax.f32 %v2325, 0.0
  %v2344 = vmax.f32 %v2330, 0.0
  %v2345 = vmax.f32 %v2335, 0.0
  %v2346 = vmax.f32 %v2340, 0.0
  %s2347 = scalar_lea.vmem %s13, 48
  %v2348 = vld [vmem:[%s2347] sm:$0xff]
  %v2349 = vld [vmem:[%s2347 + $0x8] sm:$0xff]
  %v2350 = vld [vmem:[%s2347 + $0x10] sm:$0xff]
  %v2351 = vld [vmem:[%s2347 + $0x18] sm:$0xff]
  %v2352 = vld [vmem:[%s2347 + $0x20] sm:$0xff]
  %v2353 = vld [vmem:[%s2347 + $0x28] sm:$0xff]
  %s2354 = scalar_lea.vmem %s14, 1
  %v2355 = vld [vmem:[%s2354] sm:$0x1]
  %v2357 = vlaneseq
  %v2358 = vshrl.u32 %v2357, 7
  %v2359 = vsub.s32 0, %v2358
  %v2360 = vrot.slane %v2355, %v2359
  %v2363 = vsel %vm116, %v2343, 0
  %v2366 = vsel %vm116, %v2344, 0
  %v2369 = vsel %vm116, %v2345, 0
  %v2372 = vsel %vm116, %v2346, 0
  %2374 = vmatprep.subr.mxu0 0.0
  %2375 = vmatpush1.msra.mxu0 0.0
  %2376 = vmatprep.subr.mxu0 0.0
  %2377 = vmatpush1.msra.mxu0 0.0
  %2378 = vmatprep.subr.mxu0 0.0
  %2379 = vmatpush1.msra.mxu0 0.0
  %2380 = vmatprep.subr.mxu0 0.0
  %2381 = vmatpush1.msra.mxu0 0.0
  %2382 = vmatprep.subr.mxu0 0.0
  %2383 = vmatpush1.msra.mxu0 0.0
  %2384 = vmatprep.subr.mxu0 0.0
  %2385 = vmatpush1.msra.mxu0 0.0
  %2386 = vmatprep.subr.mxu0 0.0
  %2387 = vmatpush1.msra.mxu0 0.0
  %2388 = vmatprep.subr.mxu0 0.0
  %2389 = vmatpush1.msra.mxu0 0.0
  %2390 = vmatprep.subr.mxu0 0.0
  %2391 = vmatpush1.msra.mxu0 0.0
  %2392 = vmatprep.subr.mxu0 0.0
  %2393 = vmatpush1.msra.mxu0 0.0
  %2394 = vmatprep.subr.mxu0 0.0
  %2395 = vmatpush1.msra.mxu0 %v2353
  %2396 = vmatprep.subr.mxu0 0.0
  %2397 = vmatpush1.msra.mxu0 %v2352
  %2398 = vmatprep.subr.mxu0 0.0
  %2399 = vmatpush1.msra.mxu0 %v2351
  %2400 = vmatprep.subr.mxu0 0.0
  %2401 = vmatpush1.msra.mxu0 %v2350
  %2402 = vmatprep.subr.mxu0 0.0
  %2403 = vmatpush1.msra.mxu0 %v2349
  %2404 = vmatprep.subr.mxu0 0.0
  %2405 = vmatpush1.msra.mxu0 %v2348
  %2406 = vmatprep.subr.mxu0 0.0
  %2407 = vmatpush2.msra.mxu0 0.0
  %2408 = vmatprep.subr.mxu0 0.0
  %2409 = vmatpush2.msra.mxu0 0.0
  %2410 = vmatprep.subr.mxu0 0.0
  %2411 = vmatpush2.msra.mxu0 0.0
  %2412 = vmatprep.subr.mxu0 0.0
  %2413 = vmatpush2.msra.mxu0 0.0
  %2414 = vmatprep.subr.mxu0 0.0
  %2415 = vmatpush2.msra.mxu0 0.0
  %2416 = vmatprep.subr.mxu0 0.0
  %2417 = vmatpush2.msra.mxu0 0.0
  %2418 = vmatprep.subr.mxu0 0.0
  %2419 = vmatpush2.msra.mxu0 0.0
  %2420 = vmatprep.subr.mxu0 0.0
  %2421 = vmatpush2.msra.mxu0 0.0
  %2422 = vmatprep.subr.mxu0 0.0
  %2423 = vmatpush2.msra.mxu0 0.0
  %2424 = vmatprep.subr.mxu0 0.0
  %2425 = vmatpush2.msra.mxu0 0.0
  %2426 = vmatprep.subr.mxu0 0.0
  %2427 = vmatpush2.msra.mxu0 0.0
  %2428 = vmatprep.subr.mxu0 0.0
  %2429 = vmatpush2.msra.mxu0 0.0
  %2430 = vmatprep.subr.mxu0 0.0
  %2431 = vmatpush2.msra.mxu0 0.0
  %2432 = vmatprep.subr.mxu0 0.0
  %2433 = vmatpush2.msra.mxu0 0.0
  %2434 = vmatprep.subr.mxu0 0.0
  %2435 = vmatpush2.msra.mxu0 0.0
  %2436 = vmatprep.subr.mxu0 0.0
  %2437 = vmatpush2.msra.mxu0 0.0
  %2438 = vmatprep.mubr.f32.mxu0 0.0
  %2439 = vmatmul.mubr.f32.gmra.mxu0 %v2363
  %v2440 = vpop.f32.mrf.mxu0
  %v2441 = vadd.f32 %v2360, %v2440
  %v2442 = vpop.f32.mrf.mxu0
  %2443 = vmatprep.mubr.f32.mxu0 0.0
  %2444 = vmatmul.mubr.f32.gmra.mxu0 %v2366
  %v2445 = vpop.f32.mrf.mxu0
  %v2446 = vadd.f32 %v2360, %v2445
  %v2447 = vpop.f32.mrf.mxu0
  %2448 = vmatprep.mubr.f32.mxu0 0.0
  %2449 = vmatmul.mubr.f32.gmra.mxu0 %v2369
  %v2450 = vpop.f32.mrf.mxu0
  %v2451 = vadd.f32 %v2360, %v2450
  %v2452 = vpop.f32.mrf.mxu0
  %2453 = vmatprep.mubr.f32.mxu0 0.0
  %2454 = vmatmul.mubr.f32.gmra.mxu0 %v2372
  %v2455 = vpop.f32.mrf.mxu0
  %v2456 = vadd.f32 %v2360, %v2455
  %v2457 = vpop.f32.mrf.mxu0
  %2458 = vdwg.mxu0
  %v2459 = vadd.f32 %v2151, %v2441
  %v2460 = vadd.f32 %v2152, %v2446
  %v2461 = vadd.f32 %v2153, %v2451
  %v2462 = vadd.f32 %v2154, %v2456
  %v2463 = vld [vmem:[%s15] sm:$0x1]
  %v2464 = vld [vmem:[%s16] sm:$0x1]
  %v2465 = vsel %vm116, %v2459, 0.0
  %2466 = vadd.xlane.f32.xlu0 %v2465
  %v2467 = vpop.xlane.xlu0 %2466
  %v2468 = vsel %vm116, %v2460, 0.0
  %2469 = vadd.xlane.f32.xlu0 %v2468
  %v2470 = vpop.xlane.xlu0 %2469
  %v2471 = vsel %vm116, %v2461, 0.0
  %2472 = vadd.xlane.f32.xlu0 %v2471
  %v2473 = vpop.xlane.xlu0 %2472
  %v2474 = vsel %vm116, %v2462, 0.0
  %2475 = vadd.xlane.f32.xlu0 %v2474
  %v2476 = vpop.xlane.xlu0 %2475
  %v2477 = vmul.f32 %v2467, %v228
  %v2478 = vmul.f32 %v2470, %v228
  %v2479 = vmul.f32 %v2473, %v228
  %v2480 = vmul.f32 %v2476, %v228
  %v2481 = vsub.f32 %v2459, %v2477
  %v2482 = vsub.f32 %v2460, %v2478
  %v2483 = vsub.f32 %v2461, %v2479
  %v2484 = vsub.f32 %v2462, %v2480
  %v2485 = vmul.f32 %v2481, %v2481
  %v2486 = vmul.f32 %v2482, %v2482
  %v2487 = vmul.f32 %v2483, %v2483
  %v2488 = vmul.f32 %v2484, %v2484
  %v2489 = vsel %vm116, %v2485, 0.0
  %2490 = vadd.xlane.f32.xlu0 %v2489
  %v2491 = vpop.xlane.xlu0 %2490
  %v2492 = vsel %vm116, %v2486, 0.0
  %2493 = vadd.xlane.f32.xlu0 %v2492
  %v2494 = vpop.xlane.xlu0 %2493
  %v2495 = vsel %vm116, %v2487, 0.0
  %2496 = vadd.xlane.f32.xlu0 %v2495
  %v2497 = vpop.xlane.xlu0 %2496
  %v2498 = vsel %vm116, %v2488, 0.0
  %2499 = vadd.xlane.f32.xlu0 %v2498
  %v2500 = vpop.xlane.xlu0 %2499
  %v2501 = vmul.f32 %v2491, %v228
  %v2502 = vmul.f32 %v2494, %v228
  %v2503 = vmul.f32 %v2497, %v228
  %v2504 = vmul.f32 %v2500, %v228
  %v2505 = vadd.f32 %v2501, 1e-05
  %v2506 = vadd.f32 %v2502, 1e-05
  %v2507 = vadd.f32 %v2503, 1e-05
  %v2508 = vadd.f32 %v2504, 1e-05
  %v2509 = vrsqrt.pop %v2505
  %v2510 = vrsqrt.pop %v2506
  %v2511 = vrsqrt.pop %v2507
  %v2512 = vrsqrt.pop %v2508
  %v2513 = vmul.f32 %v2481, %v2509
  %v2514 = vmul.f32 %v2482, %v2510
  %v2515 = vmul.f32 %v2483, %v2511
  %v2516 = vmul.f32 %v2484, %v2512
  %v2518 = vlaneseq
  %v2519 = vshrl.u32 %v2518, 7
  %v2520 = vsub.s32 0, %v2519
  %v2521 = vrot.slane %v2463, %v2520
  %v2523 = vmul.f32 %v2513, %v2521
  %v2524 = vmul.f32 %v2514, %v2521
  %v2525 = vmul.f32 %v2515, %v2521
  %v2526 = vmul.f32 %v2516, %v2521
  %v2528 = vlaneseq
  %v2529 = vshrl.u32 %v2528, 7
  %v2530 = vsub.s32 0, %v2529
  %v2531 = vrot.slane %v2464, %v2530
  %v2533 = vadd.f32 %v2523, %v2531
  %v2534 = vadd.f32 %v2524, %v2531
  %v2535 = vadd.f32 %v2525, %v2531
  %v2536 = vadd.f32 %v2526, %v2531
  %2537 = vst.msk [vmem:[%s17] sm:$0xff] %vm116, %v2533
  %2538 = vst.msk [vmem:[%s17 + $0x8] sm:$0xff] %vm116, %v2534
  %2539 = vst.msk [vmem:[%s17 + $0x10] sm:$0xff] %vm116, %v2535
  %2540 = vst.msk [vmem:[%s17 + $0x18] sm:$0xff] %vm116, %v2536
  // Predicated region
  $region70: #{transformer_encoder_forward.1} parent=0 // pred_check
    _
  $region71: #{transformer_encoder_forward.1} parent=0 // pred_check_branch
    %2542 = sbr.rel (0) target = $region73
  $region72: #{transformer_encoder_forward.1} parent=0 // pred_region
    _
  $region73: #{transformer_encoder_forward.1} parent=0 // pred_fallthru
    _
  // Predicated region
  $region74: #{transformer_encoder_forward.1} parent=0 // pred_check
    _
  $region75: #{transformer_encoder_forward.1} parent=0 // pred_check_branch
    %2544 = sbr.rel (0) target = $region77
  $region76: #{transformer_encoder_forward.1} parent=0 // pred_region
    _
  $region77: #{transformer_encoder_forward.1} parent=0 // pred_fallthru
    _

</llo_original>
